<compile_context>
chip_gen: v6e
topology: v6e:2x2x1
jax: 0.10.0
libtpu: 0.0.40
codegen_flags: <defaults>
</compile_context>

<pallas_src>
import jax
import jax.numpy as jnp
from jax import lax
from jax.experimental import pallas as pl
from jax.experimental.pallas import tpu as pltpu


# ----------------------------- Pallas kernel --------------------------------
def _lstm_cell(gates, c_prev, H):
    """PyTorch gate order (i, f, g, o). gates: (B, 4H) f32."""
    i_g = jax.nn.sigmoid(gates[:, 0 * H:1 * H])
    f_g = jax.nn.sigmoid(gates[:, 1 * H:2 * H])
    g_g = jnp.tanh(gates[:, 2 * H:3 * H])
    o_g = jax.nn.sigmoid(gates[:, 3 * H:4 * H])
    c_new = f_g * c_prev + i_g * g_g
    h_new = o_g * jnp.tanh(c_new)
    return h_new, c_new


def encoder_lstm_kernel(xg1_ref, whh1_ref, w2_ref, b2_ref,
                        y_ref, hn_ref, cn_ref,
                        h1_scr, c1_scr, h2_scr, c2_scr):
    """Fused 2-layer LSTM over a block of T_BLK timesteps. grid = (S // T_BLK,).

    xg1_ref : (T_BLK, B, 4H)  precomputed layer-1 input gates (x@W_ih1 + b1)
    whh1_ref: (H, 4H)         layer-1 recurrent weights (W_hh1^T)
    w2_ref  : (2H, 4H)        layer-2 fused weights [W_ih2^T; W_hh2^T]
    b2_ref  : (1, 4H)         layer-2 bias (b_ih2 + b_hh2)
    y_ref   : (T_BLK, B, H)   layer-2 outputs for this block
    hn_ref  : (2, B, H)       final hidden states (written on last block only)
    cn_ref  : (2, B, H)       final cell states   (written on last block only)
    *_scr   : VMEM scratch carrying the recurrent state across grid steps
    """
    blk = pl.program_id(0)

    @pl.when(blk == 0)
    def _init():
        h1_scr[...] = jnp.zeros_like(h1_scr)
        c1_scr[...] = jnp.zeros_like(c1_scr)
        h2_scr[...] = jnp.zeros_like(h2_scr)
        c2_scr[...] = jnp.zeros_like(c2_scr)

    H = h1_scr.shape[-1]
    whh1 = whh1_ref[...]          # (H, 4H)   resident in VMEM
    w2 = w2_ref[...]              # (2H, 4H)
    b2 = b2_ref[...]              # (1, 4H)

    h1 = h1_scr[...]
    c1 = c1_scr[...]
    h2 = h2_scr[...]
    c2 = c2_scr[...]

    t_blk = y_ref.shape[0]
    # Statically unrolled timestep loop (t_blk is a small compile-time constant):
    # all xg1/y indexing is static, and the LLO scheduler sees the whole block.
    for t in range(t_blk):
        # Layer 1: x-projection is precomputed, only h @ W_hh remains recurrent.
        gates1 = xg1_ref[t] + jnp.dot(h1, whh1,
                                      preferred_element_type=jnp.float32)
        h1, c1 = _lstm_cell(gates1, c1, H)

        # Layer 2: single fused matmul over [h1_t, h2_{t-1}]  (one MXU push).
        inp2 = jnp.concatenate([h1, h2], axis=-1)          # (B, 2H)
        gates2 = jnp.dot(inp2, w2,
                         preferred_element_type=jnp.float32) + b2
        h2, c2 = _lstm_cell(gates2, c2, H)

        y_ref[t] = h2                                       # lane-dense (H=128)

    h1_scr[...] = h1
    c1_scr[...] = c1
    h2_scr[...] = h2
    c2_scr[...] = c2

    # Final states: written exactly once, at the last grid step.
    @pl.when(blk == pl.num_programs(0) - 1)
    def _final():
        hn_ref[0] = h1
        hn_ref[1] = h2
        cn_ref[0] = c1
        cn_ref[1] = c2


# --------------------------- Encoder forward ---------------------------------
def encoder_forward(params, x_idx, *, t_blk=8):
    """x_idx: (S, B) int32 token ids.  Returns (output, hn, cn).

    Fuses Embedding -> Dropout(eval) -> 2-layer LSTM.  The embedding gather and
    layer-1 input projection are hoisted into one (VOCAB, E) @ (E, 4H) matmul +
    row gather; the sequential recurrence runs in a single Pallas kernel.
    """
    S, B = x_idx.shape
    H = params["whh_t_0"].shape[0]

    # Dropout: inference/eval semantics => identity.
    # TODO(synk): training-mode dropout (mask * 1/(1-p)) would need pltpu PRNG.

    # Hoisted layer-1 input projection: project the (tiny) embedding table once,
    # then gather projected rows per token. Exactly equal to gather-then-project.
    e_proj = (jnp.dot(params["embedding"], params["wih_t_0"],
                      preferred_element_type=jnp.float32)
              + params["b_0"])                                 # (VOCAB, 4H)
    xg1 = jnp.take(e_proj, x_idx, axis=0)                      # (S, B, 4H)

    # Layer-2 weights pre-concatenated -> one MXU push per timestep.
    w2 = jnp.concatenate([params["wih_t_1"], params["whh_t_1"]], axis=0)  # (2H,4H)
    b2 = params["b_1"]                                                    # (1, 4H)

    t_blk = min(t_blk, S)
    assert S % t_blk == 0, "sequence length must be a multiple of the time block"
    grid = (S // t_blk,)

    y, hn, cn = pl.pallas_call(
        encoder_lstm_kernel,
        out_shape=(jax.ShapeDtypeStruct((S, B, H), jnp.float32),
                   jax.ShapeDtypeStruct((2, B, H), jnp.float32),
                   jax.ShapeDtypeStruct((2, B, H), jnp.float32)),
        grid_spec=pltpu.PrefetchScalarGridSpec(
            num_scalar_prefetch=0,
            grid=grid,
            in_specs=[
                pl.BlockSpec((t_blk, B, 4 * H), lambda i: (i, 0, 0)),
                pl.BlockSpec((H, 4 * H), lambda i: (0, 0)),       # resident
                pl.BlockSpec((2 * H, 4 * H), lambda i: (0, 0)),   # resident
                pl.BlockSpec((1, 4 * H), lambda i: (0, 0)),       # resident
            ],
            out_specs=[
                pl.BlockSpec((t_blk, B, H), lambda i: (i, 0, 0)),
                pl.BlockSpec((2, B, H), lambda i: (0, 0, 0)),
                pl.BlockSpec((2, B, H), lambda i: (0, 0, 0)),
            ],
            scratch_shapes=[
                pltpu.VMEM((B, H), jnp.float32),   # h1
                pltpu.VMEM((B, H), jnp.float32),   # c1
                pltpu.VMEM((B, H), jnp.float32),   # h2
                pltpu.VMEM((B, H), jnp.float32),   # c2
            ],
        ),
        compiler_params=pltpu.CompilerParams(
            dimension_semantics=("arbitrary",)),   # recurrent axis: sequential
    )(xg1, params["whh_t_0"], w2, b2)
    return y, hn, cn


# ------------------------- pure-JAX reference --------------------------------
def lstm_layer_ref(x, wih_t, whh_t, b):
    S, B, _ = x.shape
    H = whh_t.shape[0]

    def step(carry, x_t):
        h, c = carry
        gates = x_t @ wih_t + h @ whh_t + b
        i = jax.nn.sigmoid(gates[:, 0 * H:1 * H])
        f = jax.nn.sigmoid(gates[:, 1 * H:2 * H])
        g = jnp.tanh(gates[:, 2 * H:3 * H])
        o = jax.nn.sigmoid(gates[:, 3 * H:4 * H])
        c = f * c + i * g
        h = o * jnp.tanh(c)
        return (h, c), h

    (hn, cn), ys = lax.scan(step,
                            (jnp.zeros((B, H), jnp.float32),
                             jnp.zeros((B, H), jnp.float32)),
                            x)
    return ys, hn, cn


def encoder_forward_ref(params, x_idx, num_layers):
    h = jnp.take(params["embedding"], x_idx, axis=0)
    hns, cns = [], []
    for layer in range(num_layers):
        h, hn, cn = lstm_layer_ref(h,
                                   params[f"wih_t_{layer}"],
                                   params[f"whh_t_{layer}"],
                                   params[f"b_{layer}"])
        hns.append(hn)
        cns.append(cn)
    return h, jnp.stack(hns, axis=0), jnp.stack(cns, axis=0)


# ------------------------------- main ----------------------------------------
if __name__ == "__main__":
    # Shapes from the module defaults: vocab 21, embed 10, hidden 128, 2 layers.
    SEQ, BATCH = 8, 2
    VOCAB, EMBED, HIDDEN, NUM_LAYERS = 21, 10, 128, 2

    key = jax.random.PRNGKey(0)
    keys = jax.random.split(key, 2 + 4 * NUM_LAYERS)

    params = {}
    # nn.Embedding(input_size, embedding_size): weight ~ N(0, 1)
    params["embedding"] = jax.random.normal(keys[0], (VOCAB, EMBED),
                                            dtype=jnp.float32)
    # nn.LSTM weights: uniform(-1/sqrt(H), 1/sqrt(H)); gate order (i, f, g, o).
    bound = 1.0 / jnp.sqrt(jnp.float32(HIDDEN))
    kidx = 2
    in_dim = EMBED
    for layer in range(NUM_LAYERS):
        w_ih = jax.random.uniform(keys[kidx + 0], (4 * HIDDEN, in_dim),
                                  minval=-bound, maxval=bound,
                                  dtype=jnp.float32)
        w_hh = jax.random.uniform(keys[kidx + 1], (4 * HIDDEN, HIDDEN),
                                  minval=-bound, maxval=bound,
                                  dtype=jnp.float32)
        b_ih = jax.random.uniform(keys[kidx + 2], (4 * HIDDEN,),
                                  minval=-bound, maxval=bound,
                                  dtype=jnp.float32)
        b_hh = jax.random.uniform(keys[kidx + 3], (4 * HIDDEN,),
                                  minval=-bound, maxval=bound,
                                  dtype=jnp.float32)
        params[f"wih_t_{layer}"] = w_ih.T                      # (Din, 4H)
        params[f"whh_t_{layer}"] = w_hh.T                      # (H, 4H)
        params[f"b_{layer}"] = (b_ih + b_hh)[None, :]          # (1, 4H)
        kidx += 4
        in_dim = HIDDEN

    x = jax.random.randint(keys[1], (SEQ, BATCH), 0, VOCAB, dtype=jnp.int32)

    fwd = jax.jit(encoder_forward)
    output, hn, cn = fwd(params, x)
    jax.block_until_ready((output, hn, cn))

    assert output.shape == (SEQ, BATCH, HIDDEN)
    assert hn.shape == (NUM_LAYERS, BATCH, HIDDEN)
    assert cn.shape == (NUM_LAYERS, BATCH, HIDDEN)

    # Correctness check against a pure-JAX reference.
    ref_out, ref_hn, ref_cn = encoder_forward_ref(params, x, NUM_LAYERS)
    assert jnp.allclose(output, ref_out, atol=2e-5, rtol=1e-4)
    assert jnp.allclose(hn, ref_hn, atol=2e-5, rtol=1e-4)
    assert jnp.allclose(cn, ref_cn, atol=2e-5, rtol=1e-4)

    print("KERNEL_OK")
</pallas_src>

<mosaic_0001>
module attributes {stable_mosaic.version = 11 : i64} {
  func.func @encoder_lstm_kernel(%arg0: i32, %arg1: memref<8x2x512xf32, #tpu.memory_space<vmem>>, %arg2: memref<128x512xf32, #tpu.memory_space<vmem>>, %arg3: memref<256x512xf32, #tpu.memory_space<vmem>>, %arg4: memref<1x512xf32, #tpu.memory_space<vmem>>, %arg5: memref<8x2x128xf32, #tpu.memory_space<vmem>>, %arg6: memref<2x2x128xf32, #tpu.memory_space<vmem>>, %arg7: memref<2x2x128xf32, #tpu.memory_space<vmem>>, %arg8: memref<2x128xf32, #tpu.memory_space<vmem>>, %arg9: memref<2x128xf32, #tpu.memory_space<vmem>>, %arg10: memref<2x128xf32, #tpu.memory_space<vmem>>, %arg11: memref<2x128xf32, #tpu.memory_space<vmem>>) attributes {dimension_semantics = [#tpu.dimension_semantics<arbitrary>], iteration_bounds = array<i64: 1>, scalar_prefetch = 0 : i64, scratch_operands = 4 : i64, tpu.core_type = #tpu.core_type<tc>, window_params = [{transform_indices = @transform_0, window_bounds = array<i64: 8, 2, 512>}, {pipeline_mode = #tpu.pipeline_mode<synchronous>, transform_indices = @transform_1, window_bounds = array<i64: 128, 512>}, {pipeline_mode = #tpu.pipeline_mode<synchronous>, transform_indices = @transform_2, window_bounds = array<i64: 256, 512>}, {pipeline_mode = #tpu.pipeline_mode<synchronous>, transform_indices = @transform_3, window_bounds = array<i64: 1, 512>}, {transform_indices = @transform_4, window_bounds = array<i64: 8, 2, 128>}, {pipeline_mode = #tpu.pipeline_mode<synchronous>, transform_indices = @transform_5, window_bounds = array<i64: 2, 2, 128>}, {pipeline_mode = #tpu.pipeline_mode<synchronous>, transform_indices = @transform_6, window_bounds = array<i64: 2, 2, 128>}]} {
    %c0_i32 = arith.constant 0 : i32
    %0 = arith.cmpi eq, %arg0, %c0_i32 : i32
    %1 = arith.extui %0 : i1 to i32
    %c0_i32_0 = arith.constant 0 : i32
    %2 = arith.cmpi ne, %1, %c0_i32_0 : i32
    scf.if %2 {
      %cst_128 = arith.constant 0.000000e+00 : f32
      %505 = vector.broadcast %cst_128 : f32 to vector<2x128xf32>
      %c0_129 = arith.constant 0 : index
      %c0_130 = arith.constant 0 : index
      %506 = vector.load %arg8[%c0_129, %c0_130] : memref<2x128xf32, #tpu.memory_space<vmem>>, vector<2x128xf32>
      tpu.vector_store %arg8[%c0_129, %c0_130], %505 {strides = array<i32>} : memref<2x128xf32, #tpu.memory_space<vmem>>, vector<2x128xf32>,
      %cst_131 = arith.constant 0.000000e+00 : f32
      %507 = vector.broadcast %cst_131 : f32 to vector<2x128xf32>
      %c0_132 = arith.constant 0 : index
      %c0_133 = arith.constant 0 : index
      %508 = vector.load %arg9[%c0_132, %c0_133] : memref<2x128xf32, #tpu.memory_space<vmem>>, vector<2x128xf32>
      tpu.vector_store %arg9[%c0_132, %c0_133], %507 {strides = array<i32>} : memref<2x128xf32, #tpu.memory_space<vmem>>, vector<2x128xf32>,
      %cst_134 = arith.constant 0.000000e+00 : f32
      %509 = vector.broadcast %cst_134 : f32 to vector<2x128xf32>
      %c0_135 = arith.constant 0 : index
      %c0_136 = arith.constant 0 : index
      %510 = vector.load %arg10[%c0_135, %c0_136] : memref<2x128xf32, #tpu.memory_space<vmem>>, vector<2x128xf32>
      tpu.vector_store %arg10[%c0_135, %c0_136], %509 {strides = array<i32>} : memref<2x128xf32, #tpu.memory_space<vmem>>, vector<2x128xf32>,
      %cst_137 = arith.constant 0.000000e+00 : f32
      %511 = vector.broadcast %cst_137 : f32 to vector<2x128xf32>
      %c0_138 = arith.constant 0 : index
      %c0_139 = arith.constant 0 : index
      %512 = vector.load %arg11[%c0_138, %c0_139] : memref<2x128xf32, #tpu.memory_space<vmem>>, vector<2x128xf32>
      tpu.vector_store %arg11[%c0_138, %c0_139], %511 {strides = array<i32>} : memref<2x128xf32, #tpu.memory_space<vmem>>, vector<2x128xf32>,
    } else {
    }
    %c0 = arith.constant 0 : index
    %c0_1 = arith.constant 0 : index
    %3 = vector.load %arg2[%c0, %c0_1] : memref<128x512xf32, #tpu.memory_space<vmem>>, vector<128x512xf32>
    %c0_2 = arith.constant 0 : index
    %c0_3 = arith.constant 0 : index
    %4 = vector.load %arg3[%c0_2, %c0_3] : memref<256x512xf32, #tpu.memory_space<vmem>>, vector<256x512xf32>
    %c0_4 = arith.constant 0 : index
    %c0_5 = arith.constant 0 : index
    %5 = vector.load %arg4[%c0_4, %c0_5] : memref<1x512xf32, #tpu.memory_space<vmem>>, vector<1x512xf32>
    %c0_6 = arith.constant 0 : index
    %c0_7 = arith.constant 0 : index
    %6 = vector.load %arg8[%c0_6, %c0_7] : memref<2x128xf32, #tpu.memory_space<vmem>>, vector<2x128xf32>
    %c0_8 = arith.constant 0 : index
    %c0_9 = arith.constant 0 : index
    %7 = vector.load %arg9[%c0_8, %c0_9] : memref<2x128xf32, #tpu.memory_space<vmem>>, vector<2x128xf32>
    %c0_10 = arith.constant 0 : index
    %c0_11 = arith.constant 0 : index
    %8 = vector.load %arg10[%c0_10, %c0_11] : memref<2x128xf32, #tpu.memory_space<vmem>>, vector<2x128xf32>
    %c0_12 = arith.constant 0 : index
    %c0_13 = arith.constant 0 : index
    %9 = vector.load %arg11[%c0_12, %c0_13] : memref<2x128xf32, #tpu.memory_space<vmem>>, vector<2x128xf32>
    %c0_14 = arith.constant 0 : index
    %c0_15 = arith.constant 0 : index
    %c0_16 = arith.constant 0 : index
    %10 = vector.load %arg1[%c0_14, %c0_15, %c0_16] : memref<8x2x512xf32, #tpu.memory_space<vmem>>, vector<1x2x512xf32>
    %11 = vector.shape_cast %10 : vector<1x2x512xf32> to vector<2x512xf32>
    %cst = arith.constant dense<0.000000e+00> : vector<2x512xf32>
    %12 = tpu.matmul %6, %3, %cst {dimension_numbers = #tpu.dot_dimension_numbers<[1], [0], [0], [1], [0, 0, 1, 1], [], []>} : vector<2x128xf32>, vector<128x512xf32>, vector<2x512xf32> -> vector<2x512xf32>
    %13 = arith.addf %11, %12 : vector<2x512xf32>
    %14 = vector.extract_strided_slice %13 {offsets = [0, 0], sizes = [2, 128], strides = [1, 1]} : vector<2x512xf32> to vector<2x128xf32>
    %15 = arith.negf %14 : vector<2x128xf32>
    %16 = math.exp %15 : vector<2x128xf32>
    %cst_17 = arith.constant 1.000000e+00 : f32
    %17 = vector.broadcast %cst_17 : f32 to vector<2x128xf32>
    %18 = arith.addf %17, %16 : vector<2x128xf32>
    %19 = arith.divf %17, %18 : vector<2x128xf32>
    %20 = vector.extract_strided_slice %13 {offsets = [0, 128], sizes = [2, 128], strides = [1, 1]} : vector<2x512xf32> to vector<2x128xf32>
    %21 = arith.negf %20 : vector<2x128xf32>
    %22 = math.exp %21 : vector<2x128xf32>
    %cst_18 = arith.constant 1.000000e+00 : f32
    %23 = vector.broadcast %cst_18 : f32 to vector<2x128xf32>
    %24 = arith.addf %23, %22 : vector<2x128xf32>
    %25 = arith.divf %23, %24 : vector<2x128xf32>
    %26 = vector.extract_strided_slice %13 {offsets = [0, 256], sizes = [2, 128], strides = [1, 1]} : vector<2x512xf32> to vector<2x128xf32>
    %27 = math.tanh %26 : vector<2x128xf32>
    %28 = vector.extract_strided_slice %13 {offsets = [0, 384], sizes = [2, 128], strides = [1, 1]} : vector<2x512xf32> to vector<2x128xf32>
    %29 = arith.negf %28 : vector<2x128xf32>
    %30 = math.exp %29 : vector<2x128xf32>
    %cst_19 = arith.constant 1.000000e+00 : f32
    %31 = vector.broadcast %cst_19 : f32 to vector<2x128xf32>
    %32 = arith.addf %31, %30 : vector<2x128xf32>
    %33 = arith.divf %31, %32 : vector<2x128xf32>
    %34 = arith.mulf %25, %7 : vector<2x128xf32>
    %35 = arith.mulf %19, %27 : vector<2x128xf32>
    %36 = arith.addf %34, %35 : vector<2x128xf32>
    %37 = math.tanh %36 : vector<2x128xf32>
    %38 = arith.mulf %33, %37 : vector<2x128xf32>
    %39 = tpu.concatenate %38, %8 in 1 : vector<2x128xf32>, vector<2x128xf32> -> vector<2x256xf32>
    %cst_20 = arith.constant dense<0.000000e+00> : vector<2x512xf32>
    %40 = tpu.matmul %39, %4, %cst_20 {dimension_numbers = #tpu.dot_dimension_numbers<[1], [0], [0], [1], [0, 0, 1, 1], [], []>} : vector<2x256xf32>, vector<256x512xf32>, vector<2x512xf32> -> vector<2x512xf32>
    %41 = vector.broadcast %5 : vector<1x512xf32> to vector<2x512xf32>
    %42 = arith.addf %40, %41 : vector<2x512xf32>
    %43 = vector.extract_strided_slice %42 {offsets = [0, 0], sizes = [2, 128], strides = [1, 1]} : vector<2x512xf32> to vector<2x128xf32>
    %44 = arith.negf %43 : vector<2x128xf32>
    %45 = math.exp %44 : vector<2x128xf32>
    %cst_21 = arith.constant 1.000000e+00 : f32
    %46 = vector.broadcast %cst_21 : f32 to vector<2x128xf32>
    %47 = arith.addf %46, %45 : vector<2x128xf32>
    %48 = arith.divf %46, %47 : vector<2x128xf32>
    %49 = vector.extract_strided_slice %42 {offsets = [0, 128], sizes = [2, 128], strides = [1, 1]} : vector<2x512xf32> to vector<2x128xf32>
    %50 = arith.negf %49 : vector<2x128xf32>
    %51 = math.exp %50 : vector<2x128xf32>
    %cst_22 = arith.constant 1.000000e+00 : f32
    %52 = vector.broadcast %cst_22 : f32 to vector<2x128xf32>
    %53 = arith.addf %52, %51 : vector<2x128xf32>
    %54 = arith.divf %52, %53 : vector<2x128xf32>
    %55 = vector.extract_strided_slice %42 {offsets = [0, 256], sizes = [2, 128], strides = [1, 1]} : vector<2x512xf32> to vector<2x128xf32>
    %56 = math.tanh %55 : vector<2x128xf32>
    %57 = vector.extract_strided_slice %42 {offsets = [0, 384], sizes = [2, 128], strides = [1, 1]} : vector<2x512xf32> to vector<2x128xf32>
    %58 = arith.negf %57 : vector<2x128xf32>
    %59 = math.exp %58 : vector<2x128xf32>
    %cst_23 = arith.constant 1.000000e+00 : f32
    %60 = vector.broadcast %cst_23 : f32 to vector<2x128xf32>
    %61 = arith.addf %60, %59 : vector<2x128xf32>
    %62 = arith.divf %60, %61 : vector<2x128xf32>
    %63 = arith.mulf %54, %9 : vector<2x128xf32>
    %64 = arith.mulf %48, %56 : vector<2x128xf32>
    %65 = arith.addf %63, %64 : vector<2x128xf32>
    %66 = math.tanh %65 : vector<2x128xf32>
    %67 = arith.mulf %62, %66 : vector<2x128xf32>
    %c0_24 = arith.constant 0 : index
    %c0_25 = arith.constant 0 : index
    %c0_26 = arith.constant 0 : index
    %68 = vector.load %arg5[%c0_24, %c0_25, %c0_26] : memref<8x2x128xf32, #tpu.memory_space<vmem>>, vector<1x2x128xf32>
    %69 = vector.shape_cast %68 : vector<1x2x128xf32> to vector<2x128xf32>
    %70 = vector.shape_cast %67 : vector<2x128xf32> to vector<1x2x128xf32>
    tpu.vector_store %arg5[%c0_24, %c0_25, %c0_26], %70 {strides = array<i32>} : memref<8x2x128xf32, #tpu.memory_space<vmem>>, vector<1x2x128xf32>,
    %c1 = arith.constant 1 : index
    %c0_27 = arith.constant 0 : index
    %c0_28 = arith.constant 0 : index
    %71 = vector.load %arg1[%c1, %c0_27, %c0_28] : memref<8x2x512xf32, #tpu.memory_space<vmem>>, vector<1x2x512xf32>
    %72 = vector.shape_cast %71 : vector<1x2x512xf32> to vector<2x512xf32>
    %cst_29 = arith.constant dense<0.000000e+00> : vector<2x512xf32>
    %73 = tpu.matmul %38, %3, %cst_29 {dimension_numbers = #tpu.dot_dimension_numbers<[1], [0], [0], [1], [0, 0, 1, 1], [], []>} : vector<2x128xf32>, vector<128x512xf32>, vector<2x512xf32> -> vector<2x512xf32>
    %74 = arith.addf %72, %73 : vector<2x512xf32>
    %75 = vector.extract_strided_slice %74 {offsets = [0, 0], sizes = [2, 128], strides = [1, 1]} : vector<2x512xf32> to vector<2x128xf32>
    %76 = arith.negf %75 : vector<2x128xf32>
    %77 = math.exp %76 : vector<2x128xf32>
    %cst_30 = arith.constant 1.000000e+00 : f32
    %78 = vector.broadcast %cst_30 : f32 to vector<2x128xf32>
    %79 = arith.addf %78, %77 : vector<2x128xf32>
    %80 = arith.divf %78, %79 : vector<2x128xf32>
    %81 = vector.extract_strided_slice %74 {offsets = [0, 128], sizes = [2, 128], strides = [1, 1]} : vector<2x512xf32> to vector<2x128xf32>
    %82 = arith.negf %81 : vector<2x128xf32>
    %83 = math.exp %82 : vector<2x128xf32>
    %cst_31 = arith.constant 1.000000e+00 : f32
    %84 = vector.broadcast %cst_31 : f32 to vector<2x128xf32>
    %85 = arith.addf %84, %83 : vector<2x128xf32>
    %86 = arith.divf %84, %85 : vector<2x128xf32>
    %87 = vector.extract_strided_slice %74 {offsets = [0, 256], sizes = [2, 128], strides = [1, 1]} : vector<2x512xf32> to vector<2x128xf32>
    %88 = math.tanh %87 : vector<2x128xf32>
    %89 = vector.extract_strided_slice %74 {offsets = [0, 384], sizes = [2, 128], strides = [1, 1]} : vector<2x512xf32> to vector<2x128xf32>
    %90 = arith.negf %89 : vector<2x128xf32>
    %91 = math.exp %90 : vector<2x128xf32>
    %cst_32 = arith.constant 1.000000e+00 : f32
    %92 = vector.broadcast %cst_32 : f32 to vector<2x128xf32>
    %93 = arith.addf %92, %91 : vector<2x128xf32>
    %94 = arith.divf %92, %93 : vector<2x128xf32>
    %95 = arith.mulf %86, %36 : vector<2x128xf32>
    %96 = arith.mulf %80, %88 : vector<2x128xf32>
    %97 = arith.addf %95, %96 : vector<2x128xf32>
    %98 = math.tanh %97 : vector<2x128xf32>
    %99 = arith.mulf %94, %98 : vector<2x128xf32>
    %100 = tpu.concatenate %99, %67 in 1 : vector<2x128xf32>, vector<2x128xf32> -> vector<2x256xf32>
    %cst_33 = arith.constant dense<0.000000e+00> : vector<2x512xf32>
    %101 = tpu.matmul %100, %4, %cst_33 {dimension_numbers = #tpu.dot_dimension_numbers<[1], [0], [0], [1], [0, 0, 1, 1], [], []>} : vector<2x256xf32>, vector<256x512xf32>, vector<2x512xf32> -> vector<2x512xf32>
    %102 = vector.broadcast %5 : vector<1x512xf32> to vector<2x512xf32>
    %103 = arith.addf %101, %102 : vector<2x512xf32>
    %104 = vector.extract_strided_slice %103 {offsets = [0, 0], sizes = [2, 128], strides = [1, 1]} : vector<2x512xf32> to vector<2x128xf32>
    %105 = arith.negf %104 : vector<2x128xf32>
    %106 = math.exp %105 : vector<2x128xf32>
    %cst_34 = arith.constant 1.000000e+00 : f32
    %107 = vector.broadcast %cst_34 : f32 to vector<2x128xf32>
    %108 = arith.addf %107, %106 : vector<2x128xf32>
    %109 = arith.divf %107, %108 : vector<2x128xf32>
    %110 = vector.extract_strided_slice %103 {offsets = [0, 128], sizes = [2, 128], strides = [1, 1]} : vector<2x512xf32> to vector<2x128xf32>
    %111 = arith.negf %110 : vector<2x128xf32>
    %112 = math.exp %111 : vector<2x128xf32>
    %cst_35 = arith.constant 1.000000e+00 : f32
    %113 = vector.broadcast %cst_35 : f32 to vector<2x128xf32>
    %114 = arith.addf %113, %112 : vector<2x128xf32>
    %115 = arith.divf %113, %114 : vector<2x128xf32>
    %116 = vector.extract_strided_slice %103 {offsets = [0, 256], sizes = [2, 128], strides = [1, 1]} : vector<2x512xf32> to vector<2x128xf32>
    %117 = math.tanh %116 : vector<2x128xf32>
    %118 = vector.extract_strided_slice %103 {offsets = [0, 384], sizes = [2, 128], strides = [1, 1]} : vector<2x512xf32> to vector<2x128xf32>
    %119 = arith.negf %118 : vector<2x128xf32>
    %120 = math.exp %119 : vector<2x128xf32>
    %cst_36 = arith.constant 1.000000e+00 : f32
    %121 = vector.broadcast %cst_36 : f32 to vector<2x128xf32>
    %122 = arith.addf %121, %120 : vector<2x128xf32>
    %123 = arith.divf %121, %122 : vector<2x128xf32>
    %124 = arith.mulf %115, %65 : vector<2x128xf32>
    %125 = arith.mulf %109, %117 : vector<2x128xf32>
    %126 = arith.addf %124, %125 : vector<2x128xf32>
    %127 = math.tanh %126 : vector<2x128xf32>
    %128 = arith.mulf %123, %127 : vector<2x128xf32>
    %c1_37 = arith.constant 1 : index
    %c0_38 = arith.constant 0 : index
    %c0_39 = arith.constant 0 : index
    %129 = vector.load %arg5[%c1_37, %c0_38, %c0_39] : memref<8x2x128xf32, #tpu.memory_space<vmem>>, vector<1x2x128xf32>
    %130 = vector.shape_cast %129 : vector<1x2x128xf32> to vector<2x128xf32>
    %131 = vector.shape_cast %128 : vector<2x128xf32> to vector<1x2x128xf32>
    tpu.vector_store %arg5[%c1_37, %c0_38, %c0_39], %131 {strides = array<i32>} : memref<8x2x128xf32, #tpu.memory_space<vmem>>, vector<1x2x128xf32>,
    %c2 = arith.constant 2 : index
    %c0_40 = arith.constant 0 : index
    %c0_41 = arith.constant 0 : index
    %132 = vector.load %arg1[%c2, %c0_40, %c0_41] : memref<8x2x512xf32, #tpu.memory_space<vmem>>, vector<1x2x512xf32>
    %133 = vector.shape_cast %132 : vector<1x2x512xf32> to vector<2x512xf32>
    %cst_42 = arith.constant dense<0.000000e+00> : vector<2x512xf32>
    %134 = tpu.matmul %99, %3, %cst_42 {dimension_numbers = #tpu.dot_dimension_numbers<[1], [0], [0], [1], [0, 0, 1, 1], [], []>} : vector<2x128xf32>, vector<128x512xf32>, vector<2x512xf32> -> vector<2x512xf32>
    %135 = arith.addf %133, %134 : vector<2x512xf32>
    %136 = vector.extract_strided_slice %135 {offsets = [0, 0], sizes = [2, 128], strides = [1, 1]} : vector<2x512xf32> to vector<2x128xf32>
    %137 = arith.negf %136 : vector<2x128xf32>
    %138 = math.exp %137 : vector<2x128xf32>
    %cst_43 = arith.constant 1.000000e+00 : f32
    %139 = vector.broadcast %cst_43 : f32 to vector<2x128xf32>
    %140 = arith.addf %139, %138 : vector<2x128xf32>
    %141 = arith.divf %139, %140 : vector<2x128xf32>
    %142 = vector.extract_strided_slice %135 {offsets = [0, 128], sizes = [2, 128], strides = [1, 1]} : vector<2x512xf32> to vector<2x128xf32>
    %143 = arith.negf %142 : vector<2x128xf32>
    %144 = math.exp %143 : vector<2x128xf32>
    %cst_44 = arith.constant 1.000000e+00 : f32
    %145 = vector.broadcast %cst_44 : f32 to vector<2x128xf32>
    %146 = arith.addf %145, %144 : vector<2x128xf32>
    %147 = arith.divf %145, %146 : vector<2x128xf32>
    %148 = vector.extract_strided_slice %135 {offsets = [0, 256], sizes = [2, 128], strides = [1, 1]} : vector<2x512xf32> to vector<2x128xf32>
    %149 = math.tanh %148 : vector<2x128xf32>
    %150 = vector.extract_strided_slice %135 {offsets = [0, 384], sizes = [2, 128], strides = [1, 1]} : vector<2x512xf32> to vector<2x128xf32>
    %151 = arith.negf %150 : vector<2x128xf32>
    %152 = math.exp %151 : vector<2x128xf32>
    %cst_45 = arith.constant 1.000000e+00 : f32
    %153 = vector.broadcast %cst_45 : f32 to vector<2x128xf32>
    %154 = arith.addf %153, %152 : vector<2x128xf32>
    %155 = arith.divf %153, %154 : vector<2x128xf32>
    %156 = arith.mulf %147, %97 : vector<2x128xf32>
    %157 = arith.mulf %141, %149 : vector<2x128xf32>
    %158 = arith.addf %156, %157 : vector<2x128xf32>
    %159 = math.tanh %158 : vector<2x128xf32>
    %160 = arith.mulf %155, %159 : vector<2x128xf32>
    %161 = tpu.concatenate %160, %128 in 1 : vector<2x128xf32>, vector<2x128xf32> -> vector<2x256xf32>
    %cst_46 = arith.constant dense<0.000000e+00> : vector<2x512xf32>
    %162 = tpu.matmul %161, %4, %cst_46 {dimension_numbers = #tpu.dot_dimension_numbers<[1], [0], [0], [1], [0, 0, 1, 1], [], []>} : vector<2x256xf32>, vector<256x512xf32>, vector<2x512xf32> -> vector<2x512xf32>
    %163 = vector.broadcast %5 : vector<1x512xf32> to vector<2x512xf32>
    %164 = arith.addf %162, %163 : vector<2x512xf32>
    %165 = vector.extract_strided_slice %164 {offsets = [0, 0], sizes = [2, 128], strides = [1, 1]} : vector<2x512xf32> to vector<2x128xf32>
    %166 = arith.negf %165 : vector<2x128xf32>
    %167 = math.exp %166 : vector<2x128xf32>
    %cst_47 = arith.constant 1.000000e+00 : f32
    %168 = vector.broadcast %cst_47 : f32 to vector<2x128xf32>
    %169 = arith.addf %168, %167 : vector<2x128xf32>
    %170 = arith.divf %168, %169 : vector<2x128xf32>
    %171 = vector.extract_strided_slice %164 {offsets = [0, 128], sizes = [2, 128], strides = [1, 1]} : vector<2x512xf32> to vector<2x128xf32>
    %172 = arith.negf %171 : vector<2x128xf32>
    %173 = math.exp %172 : vector<2x128xf32>
    %cst_48 = arith.constant 1.000000e+00 : f32
    %174 = vector.broadcast %cst_48 : f32 to vector<2x128xf32>
    %175 = arith.addf %174, %173 : vector<2x128xf32>
    %176 = arith.divf %174, %175 : vector<2x128xf32>
    %177 = vector.extract_strided_slice %164 {offsets = [0, 256], sizes = [2, 128], strides = [1, 1]} : vector<2x512xf32> to vector<2x128xf32>
    %178 = math.tanh %177 : vector<2x128xf32>
    %179 = vector.extract_strided_slice %164 {offsets = [0, 384], sizes = [2, 128], strides = [1, 1]} : vector<2x512xf32> to vector<2x128xf32>
    %180 = arith.negf %179 : vector<2x128xf32>
    %181 = math.exp %180 : vector<2x128xf32>
    %cst_49 = arith.constant 1.000000e+00 : f32
    %182 = vector.broadcast %cst_49 : f32 to vector<2x128xf32>
    %183 = arith.addf %182, %181 : vector<2x128xf32>
    %184 = arith.divf %182, %183 : vector<2x128xf32>
    %185 = arith.mulf %176, %126 : vector<2x128xf32>
    %186 = arith.mulf %170, %178 : vector<2x128xf32>
    %187 = arith.addf %185, %186 : vector<2x128xf32>
    %188 = math.tanh %187 : vector<2x128xf32>
    %189 = arith.mulf %184, %188 : vector<2x128xf32>
    %c2_50 = arith.constant 2 : index
    %c0_51 = arith.constant 0 : index
    %c0_52 = arith.constant 0 : index
    %190 = vector.load %arg5[%c2_50, %c0_51, %c0_52] : memref<8x2x128xf32, #tpu.memory_space<vmem>>, vector<1x2x128xf32>
    %191 = vector.shape_cast %190 : vector<1x2x128xf32> to vector<2x128xf32>
    %192 = vector.shape_cast %189 : vector<2x128xf32> to vector<1x2x128xf32>
    tpu.vector_store %arg5[%c2_50, %c0_51, %c0_52], %192 {strides = array<i32>} : memref<8x2x128xf32, #tpu.memory_space<vmem>>, vector<1x2x128xf32>,
    %c3 = arith.constant 3 : index
    %c0_53 = arith.constant 0 : index
    %c0_54 = arith.constant 0 : index
    %193 = vector.load %arg1[%c3, %c0_53, %c0_54] : memref<8x2x512xf32, #tpu.memory_space<vmem>>, vector<1x2x512xf32>
    %194 = vector.shape_cast %193 : vector<1x2x512xf32> to vector<2x512xf32>
    %cst_55 = arith.constant dense<0.000000e+00> : vector<2x512xf32>
    %195 = tpu.matmul %160, %3, %cst_55 {dimension_numbers = #tpu.dot_dimension_numbers<[1], [0], [0], [1], [0, 0, 1, 1], [], []>} : vector<2x128xf32>, vector<128x512xf32>, vector<2x512xf32> -> vector<2x512xf32>
    %196 = arith.addf %194, %195 : vector<2x512xf32>
    %197 = vector.extract_strided_slice %196 {offsets = [0, 0], sizes = [2, 128], strides = [1, 1]} : vector<2x512xf32> to vector<2x128xf32>
    %198 = arith.negf %197 : vector<2x128xf32>
    %199 = math.exp %198 : vector<2x128xf32>
    %cst_56 = arith.constant 1.000000e+00 : f32
    %200 = vector.broadcast %cst_56 : f32 to vector<2x128xf32>
    %201 = arith.addf %200, %199 : vector<2x128xf32>
    %202 = arith.divf %200, %201 : vector<2x128xf32>
    %203 = vector.extract_strided_slice %196 {offsets = [0, 128], sizes = [2, 128], strides = [1, 1]} : vector<2x512xf32> to vector<2x128xf32>
    %204 = arith.negf %203 : vector<2x128xf32>
    %205 = math.exp %204 : vector<2x128xf32>
    %cst_57 = arith.constant 1.000000e+00 : f32
    %206 = vector.broadcast %cst_57 : f32 to vector<2x128xf32>
    %207 = arith.addf %206, %205 : vector<2x128xf32>
    %208 = arith.divf %206, %207 : vector<2x128xf32>
    %209 = vector.extract_strided_slice %196 {offsets = [0, 256], sizes = [2, 128], strides = [1, 1]} : vector<2x512xf32> to vector<2x128xf32>
    %210 = math.tanh %209 : vector<2x128xf32>
    %211 = vector.extract_strided_slice %196 {offsets = [0, 384], sizes = [2, 128], strides = [1, 1]} : vector<2x512xf32> to vector<2x128xf32>
    %212 = arith.negf %211 : vector<2x128xf32>
    %213 = math.exp %212 : vector<2x128xf32>
    %cst_58 = arith.constant 1.000000e+00 : f32
    %214 = vector.broadcast %cst_58 : f32 to vector<2x128xf32>
    %215 = arith.addf %214, %213 : vector<2x128xf32>
    %216 = arith.divf %214, %215 : vector<2x128xf32>
    %217 = arith.mulf %208, %158 : vector<2x128xf32>
    %218 = arith.mulf %202, %210 : vector<2x128xf32>
    %219 = arith.addf %217, %218 : vector<2x128xf32>
    %220 = math.tanh %219 : vector<2x128xf32>
    %221 = arith.mulf %216, %220 : vector<2x128xf32>
    %222 = tpu.concatenate %221, %189 in 1 : vector<2x128xf32>, vector<2x128xf32> -> vector<2x256xf32>
    %cst_59 = arith.constant dense<0.000000e+00> : vector<2x512xf32>
    %223 = tpu.matmul %222, %4, %cst_59 {dimension_numbers = #tpu.dot_dimension_numbers<[1], [0], [0], [1], [0, 0, 1, 1], [], []>} : vector<2x256xf32>, vector<256x512xf32>, vector<2x512xf32> -> vector<2x512xf32>
    %224 = vector.broadcast %5 : vector<1x512xf32> to vector<2x512xf32>
    %225 = arith.addf %223, %224 : vector<2x512xf32>
    %226 = vector.extract_strided_slice %225 {offsets = [0, 0], sizes = [2, 128], strides = [1, 1]} : vector<2x512xf32> to vector<2x128xf32>
    %227 = arith.negf %226 : vector<2x128xf32>
    %228 = math.exp %227 : vector<2x128xf32>
    %cst_60 = arith.constant 1.000000e+00 : f32
    %229 = vector.broadcast %cst_60 : f32 to vector<2x128xf32>
    %230 = arith.addf %229, %228 : vector<2x128xf32>
    %231 = arith.divf %229, %230 : vector<2x128xf32>
    %232 = vector.extract_strided_slice %225 {offsets = [0, 128], sizes = [2, 128], strides = [1, 1]} : vector<2x512xf32> to vector<2x128xf32>
    %233 = arith.negf %232 : vector<2x128xf32>
    %234 = math.exp %233 : vector<2x128xf32>
    %cst_61 = arith.constant 1.000000e+00 : f32
    %235 = vector.broadcast %cst_61 : f32 to vector<2x128xf32>
    %236 = arith.addf %235, %234 : vector<2x128xf32>
    %237 = arith.divf %235, %236 : vector<2x128xf32>
    %238 = vector.extract_strided_slice %225 {offsets = [0, 256], sizes = [2, 128], strides = [1, 1]} : vector<2x512xf32> to vector<2x128xf32>
    %239 = math.tanh %238 : vector<2x128xf32>
    %240 = vector.extract_strided_slice %225 {offsets = [0, 384], sizes = [2, 128], strides = [1, 1]} : vector<2x512xf32> to vector<2x128xf32>
    %241 = arith.negf %240 : vector<2x128xf32>
    %242 = math.exp %241 : vector<2x128xf32>
    %cst_62 = arith.constant 1.000000e+00 : f32
    %243 = vector.broadcast %cst_62 : f32 to vector<2x128xf32>
    %244 = arith.addf %243, %242 : vector<2x128xf32>
    %245 = arith.divf %243, %244 : vector<2x128xf32>
    %246 = arith.mulf %237, %187 : vector<2x128xf32>
    %247 = arith.mulf %231, %239 : vector<2x128xf32>
    %248 = arith.addf %246, %247 : vector<2x128xf32>
    %249 = math.tanh %248 : vector<2x128xf32>
    %250 = arith.mulf %245, %249 : vector<2x128xf32>
    %c3_63 = arith.constant 3 : index
    %c0_64 = arith.constant 0 : index
    %c0_65 = arith.constant 0 : index
    %251 = vector.load %arg5[%c3_63, %c0_64, %c0_65] : memref<8x2x128xf32, #tpu.memory_space<vmem>>, vector<1x2x128xf32>
    %252 = vector.shape_cast %251 : vector<1x2x128xf32> to vector<2x128xf32>
    %253 = vector.shape_cast %250 : vector<2x128xf32> to vector<1x2x128xf32>
    tpu.vector_store %arg5[%c3_63, %c0_64, %c0_65], %253 {strides = array<i32>} : memref<8x2x128xf32, #tpu.memory_space<vmem>>, vector<1x2x128xf32>,
    %c4 = arith.constant 4 : index
    %c0_66 = arith.constant 0 : index
    %c0_67 = arith.constant 0 : index
    %254 = vector.load %arg1[%c4, %c0_66, %c0_67] : memref<8x2x512xf32, #tpu.memory_space<vmem>>, vector<1x2x512xf32>
    %255 = vector.shape_cast %254 : vector<1x2x512xf32> to vector<2x512xf32>
    %cst_68 = arith.constant dense<0.000000e+00> : vector<2x512xf32>
    %256 = tpu.matmul %221, %3, %cst_68 {dimension_numbers = #tpu.dot_dimension_numbers<[1], [0], [0], [1], [0, 0, 1, 1], [], []>} : vector<2x128xf32>, vector<128x512xf32>, vector<2x512xf32> -> vector<2x512xf32>
    %257 = arith.addf %255, %256 : vector<2x512xf32>
    %258 = vector.extract_strided_slice %257 {offsets = [0, 0], sizes = [2, 128], strides = [1, 1]} : vector<2x512xf32> to vector<2x128xf32>
    %259 = arith.negf %258 : vector<2x128xf32>
    %260 = math.exp %259 : vector<2x128xf32>
    %cst_69 = arith.constant 1.000000e+00 : f32
    %261 = vector.broadcast %cst_69 : f32 to vector<2x128xf32>
    %262 = arith.addf %261, %260 : vector<2x128xf32>
    %263 = arith.divf %261, %262 : vector<2x128xf32>
    %264 = vector.extract_strided_slice %257 {offsets = [0, 128], sizes = [2, 128], strides = [1, 1]} : vector<2x512xf32> to vector<2x128xf32>
    %265 = arith.negf %264 : vector<2x128xf32>
    %266 = math.exp %265 : vector<2x128xf32>
    %cst_70 = arith.constant 1.000000e+00 : f32
    %267 = vector.broadcast %cst_70 : f32 to vector<2x128xf32>
    %268 = arith.addf %267, %266 : vector<2x128xf32>
    %269 = arith.divf %267, %268 : vector<2x128xf32>
    %270 = vector.extract_strided_slice %257 {offsets = [0, 256], sizes = [2, 128], strides = [1, 1]} : vector<2x512xf32> to vector<2x128xf32>
    %271 = math.tanh %270 : vector<2x128xf32>
    %272 = vector.extract_strided_slice %257 {offsets = [0, 384], sizes = [2, 128], strides = [1, 1]} : vector<2x512xf32> to vector<2x128xf32>
    %273 = arith.negf %272 : vector<2x128xf32>
    %274 = math.exp %273 : vector<2x128xf32>
    %cst_71 = arith.constant 1.000000e+00 : f32
    %275 = vector.broadcast %cst_71 : f32 to vector<2x128xf32>
    %276 = arith.addf %275, %274 : vector<2x128xf32>
    %277 = arith.divf %275, %276 : vector<2x128xf32>
    %278 = arith.mulf %269, %219 : vector<2x128xf32>
    %279 = arith.mulf %263, %271 : vector<2x128xf32>
    %280 = arith.addf %278, %279 : vector<2x128xf32>
    %281 = math.tanh %280 : vector<2x128xf32>
    %282 = arith.mulf %277, %281 : vector<2x128xf32>
    %283 = tpu.concatenate %282, %250 in 1 : vector<2x128xf32>, vector<2x128xf32> -> vector<2x256xf32>
    %cst_72 = arith.constant dense<0.000000e+00> : vector<2x512xf32>
    %284 = tpu.matmul %283, %4, %cst_72 {dimension_numbers = #tpu.dot_dimension_numbers<[1], [0], [0], [1], [0, 0, 1, 1], [], []>} : vector<2x256xf32>, vector<256x512xf32>, vector<2x512xf32> -> vector<2x512xf32>
    %285 = vector.broadcast %5 : vector<1x512xf32> to vector<2x512xf32>
    %286 = arith.addf %284, %285 : vector<2x512xf32>
    %287 = vector.extract_strided_slice %286 {offsets = [0, 0], sizes = [2, 128], strides = [1, 1]} : vector<2x512xf32> to vector<2x128xf32>
    %288 = arith.negf %287 : vector<2x128xf32>
    %289 = math.exp %288 : vector<2x128xf32>
    %cst_73 = arith.constant 1.000000e+00 : f32
    %290 = vector.broadcast %cst_73 : f32 to vector<2x128xf32>
    %291 = arith.addf %290, %289 : vector<2x128xf32>
    %292 = arith.divf %290, %291 : vector<2x128xf32>
    %293 = vector.extract_strided_slice %286 {offsets = [0, 128], sizes = [2, 128], strides = [1, 1]} : vector<2x512xf32> to vector<2x128xf32>
    %294 = arith.negf %293 : vector<2x128xf32>
    %295 = math.exp %294 : vector<2x128xf32>
    %cst_74 = arith.constant 1.000000e+00 : f32
    %296 = vector.broadcast %cst_74 : f32 to vector<2x128xf32>
    %297 = arith.addf %296, %295 : vector<2x128xf32>
    %298 = arith.divf %296, %297 : vector<2x128xf32>
    %299 = vector.extract_strided_slice %286 {offsets = [0, 256], sizes = [2, 128], strides = [1, 1]} : vector<2x512xf32> to vector<2x128xf32>
    %300 = math.tanh %299 : vector<2x128xf32>
    %301 = vector.extract_strided_slice %286 {offsets = [0, 384], sizes = [2, 128], strides = [1, 1]} : vector<2x512xf32> to vector<2x128xf32>
    %302 = arith.negf %301 : vector<2x128xf32>
    %303 = math.exp %302 : vector<2x128xf32>
    %cst_75 = arith.constant 1.000000e+00 : f32
    %304 = vector.broadcast %cst_75 : f32 to vector<2x128xf32>
    %305 = arith.addf %304, %303 : vector<2x128xf32>
    %306 = arith.divf %304, %305 : vector<2x128xf32>
    %307 = arith.mulf %298, %248 : vector<2x128xf32>
    %308 = arith.mulf %292, %300 : vector<2x128xf32>
    %309 = arith.addf %307, %308 : vector<2x128xf32>
    %310 = math.tanh %309 : vector<2x128xf32>
    %311 = arith.mulf %306, %310 : vector<2x128xf32>
    %c4_76 = arith.constant 4 : index
    %c0_77 = arith.constant 0 : index
    %c0_78 = arith.constant 0 : index
    %312 = vector.load %arg5[%c4_76, %c0_77, %c0_78] : memref<8x2x128xf32, #tpu.memory_space<vmem>>, vector<1x2x128xf32>
    %313 = vector.shape_cast %312 : vector<1x2x128xf32> to vector<2x128xf32>
    %314 = vector.shape_cast %311 : vector<2x128xf32> to vector<1x2x128xf32>
    tpu.vector_store %arg5[%c4_76, %c0_77, %c0_78], %314 {strides = array<i32>} : memref<8x2x128xf32, #tpu.memory_space<vmem>>, vector<1x2x128xf32>,
    %c5 = arith.constant 5 : index
    %c0_79 = arith.constant 0 : index
    %c0_80 = arith.constant 0 : index
    %315 = vector.load %arg1[%c5, %c0_79, %c0_80] : memref<8x2x512xf32, #tpu.memory_space<vmem>>, vector<1x2x512xf32>
    %316 = vector.shape_cast %315 : vector<1x2x512xf32> to vector<2x512xf32>
    %cst_81 = arith.constant dense<0.000000e+00> : vector<2x512xf32>
    %317 = tpu.matmul %282, %3, %cst_81 {dimension_numbers = #tpu.dot_dimension_numbers<[1], [0], [0], [1], [0, 0, 1, 1], [], []>} : vector<2x128xf32>, vector<128x512xf32>, vector<2x512xf32> -> vector<2x512xf32>
    %318 = arith.addf %316, %317 : vector<2x512xf32>
    %319 = vector.extract_strided_slice %318 {offsets = [0, 0], sizes = [2, 128], strides = [1, 1]} : vector<2x512xf32> to vector<2x128xf32>
    %320 = arith.negf %319 : vector<2x128xf32>
    %321 = math.exp %320 : vector<2x128xf32>
    %cst_82 = arith.constant 1.000000e+00 : f32
    %322 = vector.broadcast %cst_82 : f32 to vector<2x128xf32>
    %323 = arith.addf %322, %321 : vector<2x128xf32>
    %324 = arith.divf %322, %323 : vector<2x128xf32>
    %325 = vector.extract_strided_slice %318 {offsets = [0, 128], sizes = [2, 128], strides = [1, 1]} : vector<2x512xf32> to vector<2x128xf32>
    %326 = arith.negf %325 : vector<2x128xf32>
    %327 = math.exp %326 : vector<2x128xf32>
    %cst_83 = arith.constant 1.000000e+00 : f32
    %328 = vector.broadcast %cst_83 : f32 to vector<2x128xf32>
    %329 = arith.addf %328, %327 : vector<2x128xf32>
    %330 = arith.divf %328, %329 : vector<2x128xf32>
    %331 = vector.extract_strided_slice %318 {offsets = [0, 256], sizes = [2, 128], strides = [1, 1]} : vector<2x512xf32> to vector<2x128xf32>
    %332 = math.tanh %331 : vector<2x128xf32>
    %333 = vector.extract_strided_slice %318 {offsets = [0, 384], sizes = [2, 128], strides = [1, 1]} : vector<2x512xf32> to vector<2x128xf32>
    %334 = arith.negf %333 : vector<2x128xf32>
    %335 = math.exp %334 : vector<2x128xf32>
    %cst_84 = arith.constant 1.000000e+00 : f32
    %336 = vector.broadcast %cst_84 : f32 to vector<2x128xf32>
    %337 = arith.addf %336, %335 : vector<2x128xf32>
    %338 = arith.divf %336, %337 : vector<2x128xf32>
    %339 = arith.mulf %330, %280 : vector<2x128xf32>
    %340 = arith.mulf %324, %332 : vector<2x128xf32>
    %341 = arith.addf %339, %340 : vector<2x128xf32>
    %342 = math.tanh %341 : vector<2x128xf32>
    %343 = arith.mulf %338, %342 : vector<2x128xf32>
    %344 = tpu.concatenate %343, %311 in 1 : vector<2x128xf32>, vector<2x128xf32> -> vector<2x256xf32>
    %cst_85 = arith.constant dense<0.000000e+00> : vector<2x512xf32>
    %345 = tpu.matmul %344, %4, %cst_85 {dimension_numbers = #tpu.dot_dimension_numbers<[1], [0], [0], [1], [0, 0, 1, 1], [], []>} : vector<2x256xf32>, vector<256x512xf32>, vector<2x512xf32> -> vector<2x512xf32>
    %346 = vector.broadcast %5 : vector<1x512xf32> to vector<2x512xf32>
    %347 = arith.addf %345, %346 : vector<2x512xf32>
    %348 = vector.extract_strided_slice %347 {offsets = [0, 0], sizes = [2, 128], strides = [1, 1]} : vector<2x512xf32> to vector<2x128xf32>
    %349 = arith.negf %348 : vector<2x128xf32>
    %350 = math.exp %349 : vector<2x128xf32>
    %cst_86 = arith.constant 1.000000e+00 : f32
    %351 = vector.broadcast %cst_86 : f32 to vector<2x128xf32>
    %352 = arith.addf %351, %350 : vector<2x128xf32>
    %353 = arith.divf %351, %352 : vector<2x128xf32>
    %354 = vector.extract_strided_slice %347 {offsets = [0, 128], sizes = [2, 128], strides = [1, 1]} : vector<2x512xf32> to vector<2x128xf32>
    %355 = arith.negf %354 : vector<2x128xf32>
    %356 = math.exp %355 : vector<2x128xf32>
    %cst_87 = arith.constant 1.000000e+00 : f32
    %357 = vector.broadcast %cst_87 : f32 to vector<2x128xf32>
    %358 = arith.addf %357, %356 : vector<2x128xf32>
    %359 = arith.divf %357, %358 : vector<2x128xf32>
    %360 = vector.extract_strided_slice %347 {offsets = [0, 256], sizes = [2, 128], strides = [1, 1]} : vector<2x512xf32> to vector<2x128xf32>
    %361 = math.tanh %360 : vector<2x128xf32>
    %362 = vector.extract_strided_slice %347 {offsets = [0, 384], sizes = [2, 128], strides = [1, 1]} : vector<2x512xf32> to vector<2x128xf32>
    %363 = arith.negf %362 : vector<2x128xf32>
    %364 = math.exp %363 : vector<2x128xf32>
    %cst_88 = arith.constant 1.000000e+00 : f32
    %365 = vector.broadcast %cst_88 : f32 to vector<2x128xf32>
    %366 = arith.addf %365, %364 : vector<2x128xf32>
    %367 = arith.divf %365, %366 : vector<2x128xf32>
    %368 = arith.mulf %359, %309 : vector<2x128xf32>
    %369 = arith.mulf %353, %361 : vector<2x128xf32>
    %370 = arith.addf %368, %369 : vector<2x128xf32>
    %371 = math.tanh %370 : vector<2x128xf32>
    %372 = arith.mulf %367, %371 : vector<2x128xf32>
    %c5_89 = arith.constant 5 : index
    %c0_90 = arith.constant 0 : index
    %c0_91 = arith.constant 0 : index
    %373 = vector.load %arg5[%c5_89, %c0_90, %c0_91] : memref<8x2x128xf32, #tpu.memory_space<vmem>>, vector<1x2x128xf32>
    %374 = vector.shape_cast %373 : vector<1x2x128xf32> to vector<2x128xf32>
    %375 = vector.shape_cast %372 : vector<2x128xf32> to vector<1x2x128xf32>
    tpu.vector_store %arg5[%c5_89, %c0_90, %c0_91], %375 {strides = array<i32>} : memref<8x2x128xf32, #tpu.memory_space<vmem>>, vector<1x2x128xf32>,
    %c6 = arith.constant 6 : index
    %c0_92 = arith.constant 0 : index
    %c0_93 = arith.constant 0 : index
    %376 = vector.load %arg1[%c6, %c0_92, %c0_93] : memref<8x2x512xf32, #tpu.memory_space<vmem>>, vector<1x2x512xf32>
    %377 = vector.shape_cast %376 : vector<1x2x512xf32> to vector<2x512xf32>
    %cst_94 = arith.constant dense<0.000000e+00> : vector<2x512xf32>
    %378 = tpu.matmul %343, %3, %cst_94 {dimension_numbers = #tpu.dot_dimension_numbers<[1], [0], [0], [1], [0, 0, 1, 1], [], []>} : vector<2x128xf32>, vector<128x512xf32>, vector<2x512xf32> -> vector<2x512xf32>
    %379 = arith.addf %377, %378 : vector<2x512xf32>
    %380 = vector.extract_strided_slice %379 {offsets = [0, 0], sizes = [2, 128], strides = [1, 1]} : vector<2x512xf32> to vector<2x128xf32>
    %381 = arith.negf %380 : vector<2x128xf32>
    %382 = math.exp %381 : vector<2x128xf32>
    %cst_95 = arith.constant 1.000000e+00 : f32
    %383 = vector.broadcast %cst_95 : f32 to vector<2x128xf32>
    %384 = arith.addf %383, %382 : vector<2x128xf32>
    %385 = arith.divf %383, %384 : vector<2x128xf32>
    %386 = vector.extract_strided_slice %379 {offsets = [0, 128], sizes = [2, 128], strides = [1, 1]} : vector<2x512xf32> to vector<2x128xf32>
    %387 = arith.negf %386 : vector<2x128xf32>
    %388 = math.exp %387 : vector<2x128xf32>
    %cst_96 = arith.constant 1.000000e+00 : f32
    %389 = vector.broadcast %cst_96 : f32 to vector<2x128xf32>
    %390 = arith.addf %389, %388 : vector<2x128xf32>
    %391 = arith.divf %389, %390 : vector<2x128xf32>
    %392 = vector.extract_strided_slice %379 {offsets = [0, 256], sizes = [2, 128], strides = [1, 1]} : vector<2x512xf32> to vector<2x128xf32>
    %393 = math.tanh %392 : vector<2x128xf32>
    %394 = vector.extract_strided_slice %379 {offsets = [0, 384], sizes = [2, 128], strides = [1, 1]} : vector<2x512xf32> to vector<2x128xf32>
    %395 = arith.negf %394 : vector<2x128xf32>
    %396 = math.exp %395 : vector<2x128xf32>
    %cst_97 = arith.constant 1.000000e+00 : f32
    %397 = vector.broadcast %cst_97 : f32 to vector<2x128xf32>
    %398 = arith.addf %397, %396 : vector<2x128xf32>
    %399 = arith.divf %397, %398 : vector<2x128xf32>
    %400 = arith.mulf %391, %341 : vector<2x128xf32>
    %401 = arith.mulf %385, %393 : vector<2x128xf32>
    %402 = arith.addf %400, %401 : vector<2x128xf32>
    %403 = math.tanh %402 : vector<2x128xf32>
    %404 = arith.mulf %399, %403 : vector<2x128xf32>
    %405 = tpu.concatenate %404, %372 in 1 : vector<2x128xf32>, vector<2x128xf32> -> vector<2x256xf32>
    %cst_98 = arith.constant dense<0.000000e+00> : vector<2x512xf32>
    %406 = tpu.matmul %405, %4, %cst_98 {dimension_numbers = #tpu.dot_dimension_numbers<[1], [0], [0], [1], [0, 0, 1, 1], [], []>} : vector<2x256xf32>, vector<256x512xf32>, vector<2x512xf32> -> vector<2x512xf32>
    %407 = vector.broadcast %5 : vector<1x512xf32> to vector<2x512xf32>
    %408 = arith.addf %406, %407 : vector<2x512xf32>
    %409 = vector.extract_strided_slice %408 {offsets = [0, 0], sizes = [2, 128], strides = [1, 1]} : vector<2x512xf32> to vector<2x128xf32>
    %410 = arith.negf %409 : vector<2x128xf32>
    %411 = math.exp %410 : vector<2x128xf32>
    %cst_99 = arith.constant 1.000000e+00 : f32
    %412 = vector.broadcast %cst_99 : f32 to vector<2x128xf32>
    %413 = arith.addf %412, %411 : vector<2x128xf32>
    %414 = arith.divf %412, %413 : vector<2x128xf32>
    %415 = vector.extract_strided_slice %408 {offsets = [0, 128], sizes = [2, 128], strides = [1, 1]} : vector<2x512xf32> to vector<2x128xf32>
    %416 = arith.negf %415 : vector<2x128xf32>
    %417 = math.exp %416 : vector<2x128xf32>
    %cst_100 = arith.constant 1.000000e+00 : f32
    %418 = vector.broadcast %cst_100 : f32 to vector<2x128xf32>
    %419 = arith.addf %418, %417 : vector<2x128xf32>
    %420 = arith.divf %418, %419 : vector<2x128xf32>
    %421 = vector.extract_strided_slice %408 {offsets = [0, 256], sizes = [2, 128], strides = [1, 1]} : vector<2x512xf32> to vector<2x128xf32>
    %422 = math.tanh %421 : vector<2x128xf32>
    %423 = vector.extract_strided_slice %408 {offsets = [0, 384], sizes = [2, 128], strides = [1, 1]} : vector<2x512xf32> to vector<2x128xf32>
    %424 = arith.negf %423 : vector<2x128xf32>
    %425 = math.exp %424 : vector<2x128xf32>
    %cst_101 = arith.constant 1.000000e+00 : f32
    %426 = vector.broadcast %cst_101 : f32 to vector<2x128xf32>
    %427 = arith.addf %426, %425 : vector<2x128xf32>
    %428 = arith.divf %426, %427 : vector<2x128xf32>
    %429 = arith.mulf %420, %370 : vector<2x128xf32>
    %430 = arith.mulf %414, %422 : vector<2x128xf32>
    %431 = arith.addf %429, %430 : vector<2x128xf32>
    %432 = math.tanh %431 : vector<2x128xf32>
    %433 = arith.mulf %428, %432 : vector<2x128xf32>
    %c6_102 = arith.constant 6 : index
    %c0_103 = arith.constant 0 : index
    %c0_104 = arith.constant 0 : index
    %434 = vector.load %arg5[%c6_102, %c0_103, %c0_104] : memref<8x2x128xf32, #tpu.memory_space<vmem>>, vector<1x2x128xf32>
    %435 = vector.shape_cast %434 : vector<1x2x128xf32> to vector<2x128xf32>
    %436 = vector.shape_cast %433 : vector<2x128xf32> to vector<1x2x128xf32>
    tpu.vector_store %arg5[%c6_102, %c0_103, %c0_104], %436 {strides = array<i32>} : memref<8x2x128xf32, #tpu.memory_space<vmem>>, vector<1x2x128xf32>,
    %c7 = arith.constant 7 : index
    %c0_105 = arith.constant 0 : index
    %c0_106 = arith.constant 0 : index
    %437 = vector.load %arg1[%c7, %c0_105, %c0_106] : memref<8x2x512xf32, #tpu.memory_space<vmem>>, vector<1x2x512xf32>
    %438 = vector.shape_cast %437 : vector<1x2x512xf32> to vector<2x512xf32>
    %cst_107 = arith.constant dense<0.000000e+00> : vector<2x512xf32>
    %439 = tpu.matmul %404, %3, %cst_107 {dimension_numbers = #tpu.dot_dimension_numbers<[1], [0], [0], [1], [0, 0, 1, 1], [], []>} : vector<2x128xf32>, vector<128x512xf32>, vector<2x512xf32> -> vector<2x512xf32>
    %440 = arith.addf %438, %439 : vector<2x512xf32>
    %441 = vector.extract_strided_slice %440 {offsets = [0, 0], sizes = [2, 128], strides = [1, 1]} : vector<2x512xf32> to vector<2x128xf32>
    %442 = arith.negf %441 : vector<2x128xf32>
    %443 = math.exp %442 : vector<2x128xf32>
    %cst_108 = arith.constant 1.000000e+00 : f32
    %444 = vector.broadcast %cst_108 : f32 to vector<2x128xf32>
    %445 = arith.addf %444, %443 : vector<2x128xf32>
    %446 = arith.divf %444, %445 : vector<2x128xf32>
    %447 = vector.extract_strided_slice %440 {offsets = [0, 128], sizes = [2, 128], strides = [1, 1]} : vector<2x512xf32> to vector<2x128xf32>
    %448 = arith.negf %447 : vector<2x128xf32>
    %449 = math.exp %448 : vector<2x128xf32>
    %cst_109 = arith.constant 1.000000e+00 : f32
    %450 = vector.broadcast %cst_109 : f32 to vector<2x128xf32>
    %451 = arith.addf %450, %449 : vector<2x128xf32>
    %452 = arith.divf %450, %451 : vector<2x128xf32>
    %453 = vector.extract_strided_slice %440 {offsets = [0, 256], sizes = [2, 128], strides = [1, 1]} : vector<2x512xf32> to vector<2x128xf32>
    %454 = math.tanh %453 : vector<2x128xf32>
    %455 = vector.extract_strided_slice %440 {offsets = [0, 384], sizes = [2, 128], strides = [1, 1]} : vector<2x512xf32> to vector<2x128xf32>
    %456 = arith.negf %455 : vector<2x128xf32>
    %457 = math.exp %456 : vector<2x128xf32>
    %cst_110 = arith.constant 1.000000e+00 : f32
    %458 = vector.broadcast %cst_110 : f32 to vector<2x128xf32>
    %459 = arith.addf %458, %457 : vector<2x128xf32>
    %460 = arith.divf %458, %459 : vector<2x128xf32>
    %461 = arith.mulf %452, %402 : vector<2x128xf32>
    %462 = arith.mulf %446, %454 : vector<2x128xf32>
    %463 = arith.addf %461, %462 : vector<2x128xf32>
    %464 = math.tanh %463 : vector<2x128xf32>
    %465 = arith.mulf %460, %464 : vector<2x128xf32>
    %466 = tpu.concatenate %465, %433 in 1 : vector<2x128xf32>, vector<2x128xf32> -> vector<2x256xf32>
    %cst_111 = arith.constant dense<0.000000e+00> : vector<2x512xf32>
    %467 = tpu.matmul %466, %4, %cst_111 {dimension_numbers = #tpu.dot_dimension_numbers<[1], [0], [0], [1], [0, 0, 1, 1], [], []>} : vector<2x256xf32>, vector<256x512xf32>, vector<2x512xf32> -> vector<2x512xf32>
    %468 = vector.broadcast %5 : vector<1x512xf32> to vector<2x512xf32>
    %469 = arith.addf %467, %468 : vector<2x512xf32>
    %470 = vector.extract_strided_slice %469 {offsets = [0, 0], sizes = [2, 128], strides = [1, 1]} : vector<2x512xf32> to vector<2x128xf32>
    %471 = arith.negf %470 : vector<2x128xf32>
    %472 = math.exp %471 : vector<2x128xf32>
    %cst_112 = arith.constant 1.000000e+00 : f32
    %473 = vector.broadcast %cst_112 : f32 to vector<2x128xf32>
    %474 = arith.addf %473, %472 : vector<2x128xf32>
    %475 = arith.divf %473, %474 : vector<2x128xf32>
    %476 = vector.extract_strided_slice %469 {offsets = [0, 128], sizes = [2, 128], strides = [1, 1]} : vector<2x512xf32> to vector<2x128xf32>
    %477 = arith.negf %476 : vector<2x128xf32>
    %478 = math.exp %477 : vector<2x128xf32>
    %cst_113 = arith.constant 1.000000e+00 : f32
    %479 = vector.broadcast %cst_113 : f32 to vector<2x128xf32>
    %480 = arith.addf %479, %478 : vector<2x128xf32>
    %481 = arith.divf %479, %480 : vector<2x128xf32>
    %482 = vector.extract_strided_slice %469 {offsets = [0, 256], sizes = [2, 128], strides = [1, 1]} : vector<2x512xf32> to vector<2x128xf32>
    %483 = math.tanh %482 : vector<2x128xf32>
    %484 = vector.extract_strided_slice %469 {offsets = [0, 384], sizes = [2, 128], strides = [1, 1]} : vector<2x512xf32> to vector<2x128xf32>
    %485 = arith.negf %484 : vector<2x128xf32>
    %486 = math.exp %485 : vector<2x128xf32>
    %cst_114 = arith.constant 1.000000e+00 : f32
    %487 = vector.broadcast %cst_114 : f32 to vector<2x128xf32>
    %488 = arith.addf %487, %486 : vector<2x128xf32>
    %489 = arith.divf %487, %488 : vector<2x128xf32>
    %490 = arith.mulf %481, %431 : vector<2x128xf32>
    %491 = arith.mulf %475, %483 : vector<2x128xf32>
    %492 = arith.addf %490, %491 : vector<2x128xf32>
    %493 = math.tanh %492 : vector<2x128xf32>
    %494 = arith.mulf %489, %493 : vector<2x128xf32>
    %c7_115 = arith.constant 7 : index
    %c0_116 = arith.constant 0 : index
    %c0_117 = arith.constant 0 : index
    %495 = vector.load %arg5[%c7_115, %c0_116, %c0_117] : memref<8x2x128xf32, #tpu.memory_space<vmem>>, vector<1x2x128xf32>
    %496 = vector.shape_cast %495 : vector<1x2x128xf32> to vector<2x128xf32>
    %497 = vector.shape_cast %494 : vector<2x128xf32> to vector<1x2x128xf32>
    tpu.vector_store %arg5[%c7_115, %c0_116, %c0_117], %497 {strides = array<i32>} : memref<8x2x128xf32, #tpu.memory_space<vmem>>, vector<1x2x128xf32>,
    %c0_118 = arith.constant 0 : index
    %c0_119 = arith.constant 0 : index
    %498 = vector.load %arg8[%c0_118, %c0_119] : memref<2x128xf32, #tpu.memory_space<vmem>>, vector<2x128xf32>
    tpu.vector_store %arg8[%c0_118, %c0_119], %465 {strides = array<i32>} : memref<2x128xf32, #tpu.memory_space<vmem>>, vector<2x128xf32>,
    %c0_120 = arith.constant 0 : index
    %c0_121 = arith.constant 0 : index
    %499 = vector.load %arg9[%c0_120, %c0_121] : memref<2x128xf32, #tpu.memory_space<vmem>>, vector<2x128xf32>
    tpu.vector_store %arg9[%c0_120, %c0_121], %463 {strides = array<i32>} : memref<2x128xf32, #tpu.memory_space<vmem>>, vector<2x128xf32>,
    %c0_122 = arith.constant 0 : index
    %c0_123 = arith.constant 0 : index
    %500 = vector.load %arg10[%c0_122, %c0_123] : memref<2x128xf32, #tpu.memory_space<vmem>>, vector<2x128xf32>
    tpu.vector_store %arg10[%c0_122, %c0_123], %494 {strides = array<i32>} : memref<2x128xf32, #tpu.memory_space<vmem>>, vector<2x128xf32>,
    %c0_124 = arith.constant 0 : index
    %c0_125 = arith.constant 0 : index
    %501 = vector.load %arg11[%c0_124, %c0_125] : memref<2x128xf32, #tpu.memory_space<vmem>>, vector<2x128xf32>
    tpu.vector_store %arg11[%c0_124, %c0_125], %492 {strides = array<i32>} : memref<2x128xf32, #tpu.memory_space<vmem>>, vector<2x128xf32>,
    %c0_i32_126 = arith.constant 0 : i32
    %502 = arith.cmpi eq, %arg0, %c0_i32_126 : i32
    %503 = arith.extui %502 : i1 to i32
    %c0_i32_127 = arith.constant 0 : i32
    %504 = arith.cmpi ne, %503, %c0_i32_127 : i32
    scf.if %504 {
      %c0_128 = arith.constant 0 : index
      %c0_129 = arith.constant 0 : index
      %c0_130 = arith.constant 0 : index
      %505 = vector.load %arg6[%c0_128, %c0_129, %c0_130] : memref<2x2x128xf32, #tpu.memory_space<vmem>>, vector<1x2x128xf32>
      %506 = vector.shape_cast %505 : vector<1x2x128xf32> to vector<2x128xf32>
      %507 = vector.shape_cast %465 : vector<2x128xf32> to vector<1x2x128xf32>
      tpu.vector_store %arg6[%c0_128, %c0_129, %c0_130], %507 {strides = array<i32>} : memref<2x2x128xf32, #tpu.memory_space<vmem>>, vector<1x2x128xf32>,
      %c1_131 = arith.constant 1 : index
      %c0_132 = arith.constant 0 : index
      %c0_133 = arith.constant 0 : index
      %508 = vector.load %arg6[%c1_131, %c0_132, %c0_133] : memref<2x2x128xf32, #tpu.memory_space<vmem>>, vector<1x2x128xf32>
      %509 = vector.shape_cast %508 : vector<1x2x128xf32> to vector<2x128xf32>
      %510 = vector.shape_cast %494 : vector<2x128xf32> to vector<1x2x128xf32>
      tpu.vector_store %arg6[%c1_131, %c0_132, %c0_133], %510 {strides = array<i32>} : memref<2x2x128xf32, #tpu.memory_space<vmem>>, vector<1x2x128xf32>,
      %c0_134 = arith.constant 0 : index
      %c0_135 = arith.constant 0 : index
      %c0_136 = arith.constant 0 : index
      %511 = vector.load %arg7[%c0_134, %c0_135, %c0_136] : memref<2x2x128xf32, #tpu.memory_space<vmem>>, vector<1x2x128xf32>
      %512 = vector.shape_cast %511 : vector<1x2x128xf32> to vector<2x128xf32>
      %513 = vector.shape_cast %463 : vector<2x128xf32> to vector<1x2x128xf32>
      tpu.vector_store %arg7[%c0_134, %c0_135, %c0_136], %513 {strides = array<i32>} : memref<2x2x128xf32, #tpu.memory_space<vmem>>, vector<1x2x128xf32>,
      %c1_137 = arith.constant 1 : index
      %c0_138 = arith.constant 0 : index
      %c0_139 = arith.constant 0 : index
      %514 = vector.load %arg7[%c1_137, %c0_138, %c0_139] : memref<2x2x128xf32, #tpu.memory_space<vmem>>, vector<1x2x128xf32>
      %515 = vector.shape_cast %514 : vector<1x2x128xf32> to vector<2x128xf32>
      %516 = vector.shape_cast %492 : vector<2x128xf32> to vector<1x2x128xf32>
      tpu.vector_store %arg7[%c1_137, %c0_138, %c0_139], %516 {strides = array<i32>} : memref<2x2x128xf32, #tpu.memory_space<vmem>>, vector<1x2x128xf32>,
    } else {
    }
    return
  }
  func.func @transform_0(%arg0: i32) -> (i32, i32, i32) {
    %c0_i32 = arith.constant 0 : i32
    %c0_i32_0 = arith.constant 0 : i32
    %c0_i32_1 = arith.constant 0 : i32
    return %arg0, %c0_i32, %c0_i32_0 : i32, i32, i32
  }
  func.func @transform_1(%arg0: i32) -> (i32, i32) {
    %c0_i32 = arith.constant 0 : i32
    %c0_i32_0 = arith.constant 0 : i32
    %c0_i32_1 = arith.constant 0 : i32
    return %c0_i32, %c0_i32_0 : i32, i32
  }
  func.func @transform_2(%arg0: i32) -> (i32, i32) {
    %c0_i32 = arith.constant 0 : i32
    %c0_i32_0 = arith.constant 0 : i32
    %c0_i32_1 = arith.constant 0 : i32
    return %c0_i32, %c0_i32_0 : i32, i32
  }
  func.func @transform_3(%arg0: i32) -> (i32, i32) {
    %c0_i32 = arith.constant 0 : i32
    %c0_i32_0 = arith.constant 0 : i32
    %c0_i32_1 = arith.constant 0 : i32
    return %c0_i32, %c0_i32_0 : i32, i32
  }
  func.func @transform_4(%arg0: i32) -> (i32, i32, i32) {
    %c0_i32 = arith.constant 0 : i32
    %c0_i32_0 = arith.constant 0 : i32
    %c0_i32_1 = arith.constant 0 : i32
    return %arg0, %c0_i32, %c0_i32_0 : i32, i32, i32
  }
  func.func @transform_5(%arg0: i32) -> (i32, i32, i32) {
    %c0_i32 = arith.constant 0 : i32
    %c0_i32_0 = arith.constant 0 : i32
    %c0_i32_1 = arith.constant 0 : i32
    %c0_i32_2 = arith.constant 0 : i32
    return %c0_i32, %c0_i32_0, %c0_i32_1 : i32, i32, i32
  }
  func.func @transform_6(%arg0: i32) -> (i32, i32, i32) {
    %c0_i32 = arith.constant 0 : i32
    %c0_i32_0 = arith.constant 0 : i32
    %c0_i32_1 = arith.constant 0 : i32
    %c0_i32_2 = arith.constant 0 : i32
    return %c0_i32, %c0_i32_0, %c0_i32_1 : i32, i32, i32
  }
}

</mosaic_0001>

<llo_original>
// kernel: encoder_forward.1
$region0: #{encoder_forward.1}
  #allocation0 [shape = 'u32[]', space=smem, size = 0x4, offset = 0x4, fixed_abs, tag = 'smem constant byte address 0x4 - core index']
  #allocation1 [shape = 'u32[144,128]{1,0:T(1,128)}', space=vmem, size = 0x12000, scoped, tag = 'internal scratch']
  #allocation2 [shape = 'f32[2,128]{1,0:T(2,128)}', space=vmem, size = 0x400, scoped, tag = 'scratch operand']
  #allocation3 [shape = 'f32[2,128]{1,0:T(2,128)}', space=vmem, size = 0x400, scoped, tag = 'scratch operand']
  #allocation4 [shape = 'f32[2,128]{1,0:T(2,128)}', space=vmem, size = 0x400, scoped, tag = 'scratch operand']
  #allocation5 [shape = 'f32[2,128]{1,0:T(2,128)}', space=vmem, size = 0x400, scoped, tag = 'scratch operand']
  %s0 = inlined_call_operand.vmem [shape: f32[8,2,512], index: 0, kind: input, shape index: {}]
  %s1 = inlined_call_operand.vmem [shape: f32[128,512], index: 1, kind: input, shape index: {}]
  %s2 = inlined_call_operand.vmem [shape: f32[256,512], index: 2, kind: input, shape index: {}]
  %s3 = inlined_call_operand.vmem [shape: f32[1,512], index: 3, kind: input, shape index: {}]
  %s4 = inlined_call_operand.hbm [shape: f32[8,2,128], index: 4, kind: output, shape index: {0}]
  %s5 = inlined_call_operand.hbm [shape: f32[2,2,128], index: 5, kind: output, shape index: {1}]
  %s6 = inlined_call_operand.hbm [shape: f32[2,2,128], index: 6, kind: output, shape index: {2}]
  %7 = xla_tuple %s4, %s5, %s6
  %s8 = sld [smem:[#allocation0]]
  $region50: #{encoder_forward.1} parent=0
    _
  %s10 = ssub.s32 1, %s8
  %s11 = scalar_select 0, %s10, %s8
  $region1: #{encoder_forward.1} parent=0
    #allocation6 [shape = 'u8[8192]{0}', space=vmem, size = 0x2000, scoped, tag = 'output window, operand 0, single buffered']
    #allocation7 [shape = 's32[1]{0}', space=sflag, size = 0x4, scoped, tag = 'scoped memory for encoder_forward.1']
    #allocation8 [shape = 'u8[2048]{0}', space=vmem, size = 0x800, scoped, tag = 'output window, operand 1, single buffered']
    #allocation9 [shape = 's32[1]{0}', space=sflag, size = 0x4, scoped, tag = 'scoped memory for encoder_forward.1']
    #allocation10 [shape = 'u8[2048]{0}', space=vmem, size = 0x800, scoped, tag = 'output window, operand 2, single buffered']
    %12 = vsyncpa [#allocation7], 0
    %13 = vsyncpa [#allocation9], 0
    // Predicated region
    $region2: #{encoder_forward.1} parent=1 // pred_check
      _
    $region3: #{encoder_forward.1} parent=1 // pred_check_branch
      %15 = sbr.rel (0) target = $region5
    $region4: #{encoder_forward.1} parent=1 // pred_region
      _
    $region5: #{encoder_forward.1} parent=1 // pred_fallthru
      _
    // Predicated region
    $region6: #{encoder_forward.1} parent=1 // pred_check
      _
    $region7: #{encoder_forward.1} parent=1 // pred_check_branch
      %17 = sbr.rel (0) target = $region9
    $region8: #{encoder_forward.1} parent=1 // pred_region
      _
    $region9: #{encoder_forward.1} parent=1 // pred_fallthru
      _
    // Predicated region
    $region10: #{encoder_forward.1} parent=1 // pred_check
      _
    $region11: #{encoder_forward.1} parent=1 // pred_check_branch
      %19 = sbr.rel (0) target = $region13
    $region12: #{encoder_forward.1} parent=1 // pred_region
      _
    $region13: #{encoder_forward.1} parent=1 // pred_fallthru
      _
    // Predicated region
    $region14: #{encoder_forward.1} parent=1 // pred_check
      _
    $region15: #{encoder_forward.1} parent=1 // pred_check_branch
      %21 = sbr.rel (0) target = $region17
    $region16: #{encoder_forward.1} parent=1 // pred_region
      _
    $region17: #{encoder_forward.1} parent=1 // pred_fallthru
      _
    %p22 = scmp.eq.s32.totalorder 0, 0
    // Predicated region
    $region18: #{encoder_forward.1} parent=1 // pred_check
      %p23 = pneg %p22
    $region19: #{encoder_forward.1} parent=1 // pred_check_branch
      %25 = sbr.rel (%p23) target = $region21
    $region20: #{encoder_forward.1} parent=1 // pred_region
      %26 = vst [vmem:[#allocation2] sm:$0x3] 0.0
      %27 = vst [vmem:[#allocation3] sm:$0x3] 0.0
      %28 = vst [vmem:[#allocation4] sm:$0x3] 0.0
      %29 = vst [vmem:[#allocation5] sm:$0x3] 0.0
    $region21: #{encoder_forward.1} parent=1 // pred_fallthru
      _
    %v30 = vld [vmem:[%s1] sm:$0xff]
    %v31 = vld [vmem:[%s1 + $0x8] sm:$0xff]
    %v32 = vld [vmem:[%s1 + $0x10] sm:$0xff]
    %v33 = vld [vmem:[%s1 + $0x18] sm:$0xff]
    %v34 = vld [vmem:[%s1 + $0x20] sm:$0xff]
    %v35 = vld [vmem:[%s1 + $0x28] sm:$0xff]
    %v36 = vld [vmem:[%s1 + $0x30] sm:$0xff]
    %v37 = vld [vmem:[%s1 + $0x38] sm:$0xff]
    %v38 = vld [vmem:[%s1 + $0x40] sm:$0xff]
    %v39 = vld [vmem:[%s1 + $0x48] sm:$0xff]
    %v40 = vld [vmem:[%s1 + $0x50] sm:$0xff]
    %v41 = vld [vmem:[%s1 + $0x58] sm:$0xff]
    %v42 = vld [vmem:[%s1 + $0x60] sm:$0xff]
    %v43 = vld [vmem:[%s1 + $0x68] sm:$0xff]
    %v44 = vld [vmem:[%s1 + $0x70] sm:$0xff]
    %v45 = vld [vmem:[%s1 + $0x78] sm:$0xff]
    %v46 = vld [vmem:[%s1 + $0x80] sm:$0xff]
    %v47 = vld [vmem:[%s1 + $0x88] sm:$0xff]
    %v48 = vld [vmem:[%s1 + $0x90] sm:$0xff]
    %v49 = vld [vmem:[%s1 + $0x98] sm:$0xff]
    %v50 = vld [vmem:[%s1 + $0xa0] sm:$0xff]
    %v51 = vld [vmem:[%s1 + $0xa8] sm:$0xff]
    %v52 = vld [vmem:[%s1 + $0xb0] sm:$0xff]
    %v53 = vld [vmem:[%s1 + $0xb8] sm:$0xff]
    %v54 = vld [vmem:[%s1 + $0xc0] sm:$0xff]
    %v55 = vld [vmem:[%s1 + $0xc8] sm:$0xff]
    %v56 = vld [vmem:[%s1 + $0xd0] sm:$0xff]
    %v57 = vld [vmem:[%s1 + $0xd8] sm:$0xff]
    %v58 = vld [vmem:[%s1 + $0xe0] sm:$0xff]
    %v59 = vld [vmem:[%s1 + $0xe8] sm:$0xff]
    %v60 = vld [vmem:[%s1 + $0xf0] sm:$0xff]
    %v61 = vld [vmem:[%s1 + $0xf8] sm:$0xff]
    %v62 = vld [vmem:[%s1 + $0x100] sm:$0xff]
    %v63 = vld [vmem:[%s1 + $0x108] sm:$0xff]
    %v64 = vld [vmem:[%s1 + $0x110] sm:$0xff]
    %v65 = vld [vmem:[%s1 + $0x118] sm:$0xff]
    %v66 = vld [vmem:[%s1 + $0x120] sm:$0xff]
    %v67 = vld [vmem:[%s1 + $0x128] sm:$0xff]
    %v68 = vld [vmem:[%s1 + $0x130] sm:$0xff]
    %v69 = vld [vmem:[%s1 + $0x138] sm:$0xff]
    %v70 = vld [vmem:[%s1 + $0x140] sm:$0xff]
    %v71 = vld [vmem:[%s1 + $0x148] sm:$0xff]
    %v72 = vld [vmem:[%s1 + $0x150] sm:$0xff]
    %v73 = vld [vmem:[%s1 + $0x158] sm:$0xff]
    %v74 = vld [vmem:[%s1 + $0x160] sm:$0xff]
    %v75 = vld [vmem:[%s1 + $0x168] sm:$0xff]
    %v76 = vld [vmem:[%s1 + $0x170] sm:$0xff]
    %v77 = vld [vmem:[%s1 + $0x178] sm:$0xff]
    %v78 = vld [vmem:[%s1 + $0x180] sm:$0xff]
    %v79 = vld [vmem:[%s1 + $0x188] sm:$0xff]
    %v80 = vld [vmem:[%s1 + $0x190] sm:$0xff]
    %v81 = vld [vmem:[%s1 + $0x198] sm:$0xff]
    %v82 = vld [vmem:[%s1 + $0x1a0] sm:$0xff]
    %v83 = vld [vmem:[%s1 + $0x1a8] sm:$0xff]
    %v84 = vld [vmem:[%s1 + $0x1b0] sm:$0xff]
    %v85 = vld [vmem:[%s1 + $0x1b8] sm:$0xff]
    %v86 = vld [vmem:[%s1 + $0x1c0] sm:$0xff]
    %v87 = vld [vmem:[%s1 + $0x1c8] sm:$0xff]
    %v88 = vld [vmem:[%s1 + $0x1d0] sm:$0xff]
    %v89 = vld [vmem:[%s1 + $0x1d8] sm:$0xff]
    %v90 = vld [vmem:[%s1 + $0x1e0] sm:$0xff]
    %v91 = vld [vmem:[%s1 + $0x1e8] sm:$0xff]
    %v92 = vld [vmem:[%s1 + $0x1f0] sm:$0xff]
    %v93 = vld [vmem:[%s1 + $0x1f8] sm:$0xff]
    %v94 = vld [vmem:[%s2] sm:$0xff]
    %v95 = vld [vmem:[%s2 + $0x8] sm:$0xff]
    %v96 = vld [vmem:[%s2 + $0x10] sm:$0xff]
    %v97 = vld [vmem:[%s2 + $0x18] sm:$0xff]
    %v98 = vld [vmem:[%s2 + $0x20] sm:$0xff]
    %v99 = vld [vmem:[%s2 + $0x28] sm:$0xff]
    %v100 = vld [vmem:[%s2 + $0x30] sm:$0xff]
    %v101 = vld [vmem:[%s2 + $0x38] sm:$0xff]
    %v102 = vld [vmem:[%s2 + $0x40] sm:$0xff]
    %v103 = vld [vmem:[%s2 + $0x48] sm:$0xff]
    %v104 = vld [vmem:[%s2 + $0x50] sm:$0xff]
    %v105 = vld [vmem:[%s2 + $0x58] sm:$0xff]
    %v106 = vld [vmem:[%s2 + $0x60] sm:$0xff]
    %v107 = vld [vmem:[%s2 + $0x68] sm:$0xff]
    %v108 = vld [vmem:[%s2 + $0x70] sm:$0xff]
    %v109 = vld [vmem:[%s2 + $0x78] sm:$0xff]
    %v110 = vld [vmem:[%s2 + $0x80] sm:$0xff]
    %v111 = vld [vmem:[%s2 + $0x88] sm:$0xff]
    %v112 = vld [vmem:[%s2 + $0x90] sm:$0xff]
    %v113 = vld [vmem:[%s2 + $0x98] sm:$0xff]
    %v114 = vld [vmem:[%s2 + $0xa0] sm:$0xff]
    %v115 = vld [vmem:[%s2 + $0xa8] sm:$0xff]
    %v116 = vld [vmem:[%s2 + $0xb0] sm:$0xff]
    %v117 = vld [vmem:[%s2 + $0xb8] sm:$0xff]
    %v118 = vld [vmem:[%s2 + $0xc0] sm:$0xff]
    %v119 = vld [vmem:[%s2 + $0xc8] sm:$0xff]
    %v120 = vld [vmem:[%s2 + $0xd0] sm:$0xff]
    %v121 = vld [vmem:[%s2 + $0xd8] sm:$0xff]
    %v122 = vld [vmem:[%s2 + $0xe0] sm:$0xff]
    %v123 = vld [vmem:[%s2 + $0xe8] sm:$0xff]
    %v124 = vld [vmem:[%s2 + $0xf0] sm:$0xff]
    %v125 = vld [vmem:[%s2 + $0xf8] sm:$0xff]
    %v126 = vld [vmem:[%s2 + $0x100] sm:$0xff]
    %v127 = vld [vmem:[%s2 + $0x108] sm:$0xff]
    %v128 = vld [vmem:[%s2 + $0x110] sm:$0xff]
    %v129 = vld [vmem:[%s2 + $0x118] sm:$0xff]
    %v130 = vld [vmem:[%s2 + $0x120] sm:$0xff]
    %v131 = vld [vmem:[%s2 + $0x128] sm:$0xff]
    %v132 = vld [vmem:[%s2 + $0x130] sm:$0xff]
    %v133 = vld [vmem:[%s2 + $0x138] sm:$0xff]
    %v134 = vld [vmem:[%s2 + $0x140] sm:$0xff]
    %v135 = vld [vmem:[%s2 + $0x148] sm:$0xff]
    %v136 = vld [vmem:[%s2 + $0x150] sm:$0xff]
    %v137 = vld [vmem:[%s2 + $0x158] sm:$0xff]
    %v138 = vld [vmem:[%s2 + $0x160] sm:$0xff]
    %v139 = vld [vmem:[%s2 + $0x168] sm:$0xff]
    %v140 = vld [vmem:[%s2 + $0x170] sm:$0xff]
    %v141 = vld [vmem:[%s2 + $0x178] sm:$0xff]
    %v142 = vld [vmem:[%s2 + $0x180] sm:$0xff]
    %v143 = vld [vmem:[%s2 + $0x188] sm:$0xff]
    %v144 = vld [vmem:[%s2 + $0x190] sm:$0xff]
    %v145 = vld [vmem:[%s2 + $0x198] sm:$0xff]
    %v146 = vld [vmem:[%s2 + $0x1a0] sm:$0xff]
    %v147 = vld [vmem:[%s2 + $0x1a8] sm:$0xff]
    %v148 = vld [vmem:[%s2 + $0x1b0] sm:$0xff]
    %v149 = vld [vmem:[%s2 + $0x1b8] sm:$0xff]
    %v150 = vld [vmem:[%s2 + $0x1c0] sm:$0xff]
    %v151 = vld [vmem:[%s2 + $0x1c8] sm:$0xff]
    %v152 = vld [vmem:[%s2 + $0x1d0] sm:$0xff]
    %v153 = vld [vmem:[%s2 + $0x1d8] sm:$0xff]
    %v154 = vld [vmem:[%s2 + $0x1e0] sm:$0xff]
    %v155 = vld [vmem:[%s2 + $0x1e8] sm:$0xff]
    %v156 = vld [vmem:[%s2 + $0x1f0] sm:$0xff]
    %v157 = vld [vmem:[%s2 + $0x1f8] sm:$0xff]
    %v158 = vld [vmem:[%s2 + $0x200] sm:$0xff]
    %v159 = vld [vmem:[%s2 + $0x208] sm:$0xff]
    %v160 = vld [vmem:[%s2 + $0x210] sm:$0xff]
    %v161 = vld [vmem:[%s2 + $0x218] sm:$0xff]
    %v162 = vld [vmem:[%s2 + $0x220] sm:$0xff]
    %v163 = vld [vmem:[%s2 + $0x228] sm:$0xff]
    %v164 = vld [vmem:[%s2 + $0x230] sm:$0xff]
    %v165 = vld [vmem:[%s2 + $0x238] sm:$0xff]
    %v166 = vld [vmem:[%s2 + $0x240] sm:$0xff]
    %v167 = vld [vmem:[%s2 + $0x248] sm:$0xff]
    %v168 = vld [vmem:[%s2 + $0x250] sm:$0xff]
    %v169 = vld [vmem:[%s2 + $0x258] sm:$0xff]
    %v170 = vld [vmem:[%s2 + $0x260] sm:$0xff]
    %v171 = vld [vmem:[%s2 + $0x268] sm:$0xff]
    %v172 = vld [vmem:[%s2 + $0x270] sm:$0xff]
    %v173 = vld [vmem:[%s2 + $0x278] sm:$0xff]
    %v174 = vld [vmem:[%s2 + $0x280] sm:$0xff]
    %v175 = vld [vmem:[%s2 + $0x288] sm:$0xff]
    %v176 = vld [vmem:[%s2 + $0x290] sm:$0xff]
    %v177 = vld [vmem:[%s2 + $0x298] sm:$0xff]
    %v178 = vld [vmem:[%s2 + $0x2a0] sm:$0xff]
    %v179 = vld [vmem:[%s2 + $0x2a8] sm:$0xff]
    %v180 = vld [vmem:[%s2 + $0x2b0] sm:$0xff]
    %v181 = vld [vmem:[%s2 + $0x2b8] sm:$0xff]
    %v182 = vld [vmem:[%s2 + $0x2c0] sm:$0xff]
    %v183 = vld [vmem:[%s2 + $0x2c8] sm:$0xff]
    %v184 = vld [vmem:[%s2 + $0x2d0] sm:$0xff]
    %v185 = vld [vmem:[%s2 + $0x2d8] sm:$0xff]
    %v186 = vld [vmem:[%s2 + $0x2e0] sm:$0xff]
    %v187 = vld [vmem:[%s2 + $0x2e8] sm:$0xff]
    %v188 = vld [vmem:[%s2 + $0x2f0] sm:$0xff]
    %v189 = vld [vmem:[%s2 + $0x2f8] sm:$0xff]
    %v190 = vld [vmem:[%s2 + $0x300] sm:$0xff]
    %v191 = vld [vmem:[%s2 + $0x308] sm:$0xff]
    %v192 = vld [vmem:[%s2 + $0x310] sm:$0xff]
    %v193 = vld [vmem:[%s2 + $0x318] sm:$0xff]
    %v194 = vld [vmem:[%s2 + $0x320] sm:$0xff]
    %v195 = vld [vmem:[%s2 + $0x328] sm:$0xff]
    %v196 = vld [vmem:[%s2 + $0x330] sm:$0xff]
    %v197 = vld [vmem:[%s2 + $0x338] sm:$0xff]
    %v198 = vld [vmem:[%s2 + $0x340] sm:$0xff]
    %v199 = vld [vmem:[%s2 + $0x348] sm:$0xff]
    %v200 = vld [vmem:[%s2 + $0x350] sm:$0xff]
    %v201 = vld [vmem:[%s2 + $0x358] sm:$0xff]
    %v202 = vld [vmem:[%s2 + $0x360] sm:$0xff]
    %v203 = vld [vmem:[%s2 + $0x368] sm:$0xff]
    %v204 = vld [vmem:[%s2 + $0x370] sm:$0xff]
    %v205 = vld [vmem:[%s2 + $0x378] sm:$0xff]
    %v206 = vld [vmem:[%s2 + $0x380] sm:$0xff]
    %v207 = vld [vmem:[%s2 + $0x388] sm:$0xff]
    %v208 = vld [vmem:[%s2 + $0x390] sm:$0xff]
    %v209 = vld [vmem:[%s2 + $0x398] sm:$0xff]
    %v210 = vld [vmem:[%s2 + $0x3a0] sm:$0xff]
    %v211 = vld [vmem:[%s2 + $0x3a8] sm:$0xff]
    %v212 = vld [vmem:[%s2 + $0x3b0] sm:$0xff]
    %v213 = vld [vmem:[%s2 + $0x3b8] sm:$0xff]
    %v214 = vld [vmem:[%s2 + $0x3c0] sm:$0xff]
    %v215 = vld [vmem:[%s2 + $0x3c8] sm:$0xff]
    %v216 = vld [vmem:[%s2 + $0x3d0] sm:$0xff]
    %v217 = vld [vmem:[%s2 + $0x3d8] sm:$0xff]
    %v218 = vld [vmem:[%s2 + $0x3e0] sm:$0xff]
    %v219 = vld [vmem:[%s2 + $0x3e8] sm:$0xff]
    %v220 = vld [vmem:[%s2 + $0x3f0] sm:$0xff]
    %v221 = vld [vmem:[%s2 + $0x3f8] sm:$0xff]
    %v222 = vld [vmem:[%s3] sm:$0xf]
    %v223 = vld [vmem:[#allocation2] sm:$0x3]
    %v224 = vld [vmem:[#allocation3] sm:$0x3]
    %v225 = vld [vmem:[#allocation4] sm:$0x3]
    %v226 = vld [vmem:[#allocation5] sm:$0x3]
    %v227 = vld [vmem:[%s0] sm:$0xff]
    %228 = vmatprep.subr.mxu0 %v91
    %229 = vmatpush1.msra.mxu0 %v90
    %230 = vmatprep.subr.mxu0 %v87
    %231 = vmatpush1.msra.mxu0 %v86
    %232 = vmatprep.subr.mxu0 %v83
    %233 = vmatpush1.msra.mxu0 %v82
    %234 = vmatprep.subr.mxu0 %v79
    %235 = vmatpush1.msra.mxu0 %v78
    %236 = vmatprep.subr.mxu0 %v75
    %237 = vmatpush1.msra.mxu0 %v74
    %238 = vmatprep.subr.mxu0 %v71
    %239 = vmatpush1.msra.mxu0 %v70
    %240 = vmatprep.subr.mxu0 %v67
    %241 = vmatpush1.msra.mxu0 %v66
    %242 = vmatprep.subr.mxu0 %v63
    %243 = vmatpush1.msra.mxu0 %v62
    %244 = vmatprep.subr.mxu0 %v59
    %245 = vmatpush1.msra.mxu0 %v58
    %246 = vmatprep.subr.mxu0 %v55
    %247 = vmatpush1.msra.mxu0 %v54
    %248 = vmatprep.subr.mxu0 %v51
    %249 = vmatpush1.msra.mxu0 %v50
    %250 = vmatprep.subr.mxu0 %v47
    %251 = vmatpush1.msra.mxu0 %v46
    %252 = vmatprep.subr.mxu0 %v43
    %253 = vmatpush1.msra.mxu0 %v42
    %254 = vmatprep.subr.mxu0 %v39
    %255 = vmatpush1.msra.mxu0 %v38
    %256 = vmatprep.subr.mxu0 %v35
    %257 = vmatpush1.msra.mxu0 %v34
    %258 = vmatprep.subr.mxu0 %v31
    %259 = vmatpush1.msra.mxu0 %v30
    %260 = vmatprep.subr.mxu0 0.0
    %261 = vmatpush2.msra.mxu0 0.0
    %262 = vmatprep.subr.mxu0 0.0
    %263 = vmatpush2.msra.mxu0 0.0
    %264 = vmatprep.subr.mxu0 0.0
    %265 = vmatpush2.msra.mxu0 0.0
    %266 = vmatprep.subr.mxu0 0.0
    %267 = vmatpush2.msra.mxu0 0.0
    %268 = vmatprep.subr.mxu0 0.0
    %269 = vmatpush2.msra.mxu0 0.0
    %270 = vmatprep.subr.mxu0 0.0
    %271 = vmatpush2.msra.mxu0 0.0
    %272 = vmatprep.subr.mxu0 0.0
    %273 = vmatpush2.msra.mxu0 0.0
    %274 = vmatprep.subr.mxu0 0.0
    %275 = vmatpush2.msra.mxu0 0.0
    %276 = vmatprep.subr.mxu0 0.0
    %277 = vmatpush2.msra.mxu0 0.0
    %278 = vmatprep.subr.mxu0 0.0
    %279 = vmatpush2.msra.mxu0 0.0
    %280 = vmatprep.subr.mxu0 0.0
    %281 = vmatpush2.msra.mxu0 0.0
    %282 = vmatprep.subr.mxu0 0.0
    %283 = vmatpush2.msra.mxu0 0.0
    %284 = vmatprep.subr.mxu0 0.0
    %285 = vmatpush2.msra.mxu0 0.0
    %286 = vmatprep.subr.mxu0 0.0
    %287 = vmatpush2.msra.mxu0 0.0
    %288 = vmatprep.subr.mxu0 0.0
    %289 = vmatpush2.msra.mxu0 0.0
    %290 = vmatprep.subr.mxu0 0.0
    %291 = vmatpush2.msra.mxu0 0.0
    %292 = vmatprep.mubr.f32.mxu0 0.0
    %293 = vmatmul.mubr.f32.gmra.mxu0 %v223
    %v294 = vpop.f32.mrf.mxu0
    %v295 = vadd.f32 0.0, %v294
    %v296 = vpop.f32.mrf.mxu0
    %v297 = vadd.f32 0.0, %v296
    %298 = vdwg.mxu0
    %299 = vmatprep.subr.mxu0 %v93
    %300 = vmatpush1.msra.mxu0 %v92
    %301 = vmatprep.subr.mxu0 %v89
    %302 = vmatpush1.msra.mxu0 %v88
    %303 = vmatprep.subr.mxu0 %v85
    %304 = vmatpush1.msra.mxu0 %v84
    %305 = vmatprep.subr.mxu0 %v81
    %306 = vmatpush1.msra.mxu0 %v80
    %307 = vmatprep.subr.mxu0 %v77
    %308 = vmatpush1.msra.mxu0 %v76
    %309 = vmatprep.subr.mxu0 %v73
    %310 = vmatpush1.msra.mxu0 %v72
    %311 = vmatprep.subr.mxu0 %v69
    %312 = vmatpush1.msra.mxu0 %v68
    %313 = vmatprep.subr.mxu0 %v65
    %314 = vmatpush1.msra.mxu0 %v64
    %315 = vmatprep.subr.mxu0 %v61
    %316 = vmatpush1.msra.mxu0 %v60
    %317 = vmatprep.subr.mxu0 %v57
    %318 = vmatpush1.msra.mxu0 %v56
    %319 = vmatprep.subr.mxu0 %v53
    %320 = vmatpush1.msra.mxu0 %v52
    %321 = vmatprep.subr.mxu0 %v49
    %322 = vmatpush1.msra.mxu0 %v48
    %323 = vmatprep.subr.mxu0 %v45
    %324 = vmatpush1.msra.mxu0 %v44
    %325 = vmatprep.subr.mxu0 %v41
    %326 = vmatpush1.msra.mxu0 %v40
    %327 = vmatprep.subr.mxu0 %v37
    %328 = vmatpush1.msra.mxu0 %v36
    %329 = vmatprep.subr.mxu0 %v33
    %330 = vmatpush1.msra.mxu0 %v32
    %331 = vmatprep.subr.mxu0 0.0
    %332 = vmatpush2.msra.mxu0 0.0
    %333 = vmatprep.subr.mxu0 0.0
    %334 = vmatpush2.msra.mxu0 0.0
    %335 = vmatprep.subr.mxu0 0.0
    %336 = vmatpush2.msra.mxu0 0.0
    %337 = vmatprep.subr.mxu0 0.0
    %338 = vmatpush2.msra.mxu0 0.0
    %339 = vmatprep.subr.mxu0 0.0
    %340 = vmatpush2.msra.mxu0 0.0
    %341 = vmatprep.subr.mxu0 0.0
    %342 = vmatpush2.msra.mxu0 0.0
    %343 = vmatprep.subr.mxu0 0.0
    %344 = vmatpush2.msra.mxu0 0.0
    %345 = vmatprep.subr.mxu0 0.0
    %346 = vmatpush2.msra.mxu0 0.0
    %347 = vmatprep.subr.mxu0 0.0
    %348 = vmatpush2.msra.mxu0 0.0
    %349 = vmatprep.subr.mxu0 0.0
    %350 = vmatpush2.msra.mxu0 0.0
    %351 = vmatprep.subr.mxu0 0.0
    %352 = vmatpush2.msra.mxu0 0.0
    %353 = vmatprep.subr.mxu0 0.0
    %354 = vmatpush2.msra.mxu0 0.0
    %355 = vmatprep.subr.mxu0 0.0
    %356 = vmatpush2.msra.mxu0 0.0
    %357 = vmatprep.subr.mxu0 0.0
    %358 = vmatpush2.msra.mxu0 0.0
    %359 = vmatprep.subr.mxu0 0.0
    %360 = vmatpush2.msra.mxu0 0.0
    %361 = vmatprep.subr.mxu0 0.0
    %362 = vmatpush2.msra.mxu0 0.0
    %363 = vmatprep.mubr.f32.mxu0 0.0
    %364 = vmatmul.mubr.f32.gmra.mxu0 %v223
    %v365 = vpop.f32.mrf.mxu0
    %v366 = vadd.f32 0.0, %v365
    %v367 = vpop.f32.mrf.mxu0
    %v368 = vadd.f32 0.0, %v367
    %369 = vdwg.mxu0
    %v374 = vcombine.low %v295, %v297
    %v375 = vcombine.low %v366, %v368
    %v377 = vunpack.c.l.s4 1983009808
    %v378 = vunpack.c.0.s8 %v377
    %v379 = vlaneseq
    %v380 = vshrl.u32 %v379, 7
    %v381 = vsub.s32 %v378, %v380
    %v382 = vrot.slane %v374, %v381
    %v384 = vunpack.c.l.s4 1983009808
    %v385 = vunpack.c.0.s8 %v384
    %v386 = vlaneseq
    %v387 = vshrl.u32 %v386, 7
    %v388 = vsub.s32 %v385, %v387
    %v389 = vrot.slane %v375, %v388
    %v390 = vcombine.low %v382, %v389
    %v392 = vadd.f32 %v227, %v390
    %v393 = vxor.u32 %v392, 2147483648
    %v394 = vmul.f32 %v393, 1.442695
    %v395 = vpow.pop %v394
    %v396 = vadd.f32 %v395, 1.0
    %v397 = vrcp.pop %v396
    %v398 = vmul.f32 1.0, %v397
    %v400 = vrot.slane %v392, 2
    %v402 = vxor.u32 %v400, 2147483648
    %v403 = vmul.f32 %v402, 1.442695
    %v404 = vpow.pop %v403
    %v405 = vadd.f32 %v404, 1.0
    %v406 = vrcp.pop %v405
    %v407 = vmul.f32 1.0, %v406
    %v408 = vrot.slane %v392, 4
    %v410 = vtanh.pop %v408
    %v411 = vrot.slane %v392, 6
    %v413 = vxor.u32 %v411, 2147483648
    %v414 = vmul.f32 %v413, 1.442695
    %v415 = vpow.pop %v414
    %v416 = vadd.f32 %v415, 1.0
    %v417 = vrcp.pop %v416
    %v418 = vmul.f32 1.0, %v417
    %v419 = vmul.f32 %v407, %v224
    %v420 = vmul.f32 %v398, %v410
    %v421 = vadd.f32 %v419, %v420
    %v422 = vtanh.pop %v421
    %v423 = vmul.f32 %v418, %v422
    %v425 = vlaneseq
    %v426 = vshrl.u32 %v425, 7
    %v427 = vsub.s32 0, %v426
    %v428 = vrot.slane %v222, %v427
    %v429 = vlaneseq
    %v430 = vshrl.u32 %v429, 7
    %v431 = vsub.s32 1, %v430
    %v432 = vrot.slane %v222, %v431
    %v433 = vlaneseq
    %v434 = vshrl.u32 %v433, 7
    %v435 = vsub.s32 2, %v434
    %v436 = vrot.slane %v222, %v435
    %v437 = vlaneseq
    %v438 = vshrl.u32 %v437, 7
    %v439 = vsub.s32 3, %v438
    %v440 = vrot.slane %v222, %v439
    %445 = vmatprep.subr.mxu0 %v155
    %446 = vmatpush1.msra.mxu0 %v154
    %447 = vmatprep.subr.mxu0 %v151
    %448 = vmatpush1.msra.mxu0 %v150
    %449 = vmatprep.subr.mxu0 %v147
    %450 = vmatpush1.msra.mxu0 %v146
    %451 = vmatprep.subr.mxu0 %v143
    %452 = vmatpush1.msra.mxu0 %v142
    %453 = vmatprep.subr.mxu0 %v139
    %454 = vmatpush1.msra.mxu0 %v138
    %455 = vmatprep.subr.mxu0 %v135
    %456 = vmatpush1.msra.mxu0 %v134
    %457 = vmatprep.subr.mxu0 %v131
    %458 = vmatpush1.msra.mxu0 %v130
    %459 = vmatprep.subr.mxu0 %v127
    %460 = vmatpush1.msra.mxu0 %v126
    %461 = vmatprep.subr.mxu0 %v123
    %462 = vmatpush1.msra.mxu0 %v122
    %463 = vmatprep.subr.mxu0 %v119
    %464 = vmatpush1.msra.mxu0 %v118
    %465 = vmatprep.subr.mxu0 %v115
    %466 = vmatpush1.msra.mxu0 %v114
    %467 = vmatprep.subr.mxu0 %v111
    %468 = vmatpush1.msra.mxu0 %v110
    %469 = vmatprep.subr.mxu0 %v107
    %470 = vmatpush1.msra.mxu0 %v106
    %471 = vmatprep.subr.mxu0 %v103
    %472 = vmatpush1.msra.mxu0 %v102
    %473 = vmatprep.subr.mxu0 %v99
    %474 = vmatpush1.msra.mxu0 %v98
    %475 = vmatprep.subr.mxu0 %v95
    %476 = vmatpush1.msra.mxu0 %v94
    %477 = vmatprep.subr.mxu0 %v219
    %478 = vmatpush2.msra.mxu0 %v218
    %479 = vmatprep.subr.mxu0 %v215
    %480 = vmatpush2.msra.mxu0 %v214
    %481 = vmatprep.subr.mxu0 %v211
    %482 = vmatpush2.msra.mxu0 %v210
    %483 = vmatprep.subr.mxu0 %v207
    %484 = vmatpush2.msra.mxu0 %v206
    %485 = vmatprep.subr.mxu0 %v203
    %486 = vmatpush2.msra.mxu0 %v202
    %487 = vmatprep.subr.mxu0 %v199
    %488 = vmatpush2.msra.mxu0 %v198
    %489 = vmatprep.subr.mxu0 %v195
    %490 = vmatpush2.msra.mxu0 %v194
    %491 = vmatprep.subr.mxu0 %v191
    %492 = vmatpush2.msra.mxu0 %v190
    %493 = vmatprep.subr.mxu0 %v187
    %494 = vmatpush2.msra.mxu0 %v186
    %495 = vmatprep.subr.mxu0 %v183
    %496 = vmatpush2.msra.mxu0 %v182
    %497 = vmatprep.subr.mxu0 %v179
    %498 = vmatpush2.msra.mxu0 %v178
    %499 = vmatprep.subr.mxu0 %v175
    %500 = vmatpush2.msra.mxu0 %v174
    %501 = vmatprep.subr.mxu0 %v171
    %502 = vmatpush2.msra.mxu0 %v170
    %503 = vmatprep.subr.mxu0 %v167
    %504 = vmatpush2.msra.mxu0 %v166
    %505 = vmatprep.subr.mxu0 %v163
    %506 = vmatpush2.msra.mxu0 %v162
    %507 = vmatprep.subr.mxu0 %v159
    %508 = vmatpush2.msra.mxu0 %v158
    %509 = vmatprep.mubr.f32.mxu0 %v225
    %510 = vmatmul.mubr.f32.gmra.mxu0 %v423
    %v511 = vpop.f32.mrf.mxu0
    %v512 = vadd.f32 %v428, %v511
    %v513 = vpop.f32.mrf.mxu0
    %v514 = vadd.f32 %v432, %v513
    %515 = vdwg.mxu0
    %516 = vmatprep.subr.mxu0 %v157
    %517 = vmatpush1.msra.mxu0 %v156
    %518 = vmatprep.subr.mxu0 %v153
    %519 = vmatpush1.msra.mxu0 %v152
    %520 = vmatprep.subr.mxu0 %v149
    %521 = vmatpush1.msra.mxu0 %v148
    %522 = vmatprep.subr.mxu0 %v145
    %523 = vmatpush1.msra.mxu0 %v144
    %524 = vmatprep.subr.mxu0 %v141
    %525 = vmatpush1.msra.mxu0 %v140
    %526 = vmatprep.subr.mxu0 %v137
    %527 = vmatpush1.msra.mxu0 %v136
    %528 = vmatprep.subr.mxu0 %v133
    %529 = vmatpush1.msra.mxu0 %v132
    %530 = vmatprep.subr.mxu0 %v129
    %531 = vmatpush1.msra.mxu0 %v128
    %532 = vmatprep.subr.mxu0 %v125
    %533 = vmatpush1.msra.mxu0 %v124
    %534 = vmatprep.subr.mxu0 %v121
    %535 = vmatpush1.msra.mxu0 %v120
    %536 = vmatprep.subr.mxu0 %v117
    %537 = vmatpush1.msra.mxu0 %v116
    %538 = vmatprep.subr.mxu0 %v113
    %539 = vmatpush1.msra.mxu0 %v112
    %540 = vmatprep.subr.mxu0 %v109
    %541 = vmatpush1.msra.mxu0 %v108
    %542 = vmatprep.subr.mxu0 %v105
    %543 = vmatpush1.msra.mxu0 %v104
    %544 = vmatprep.subr.mxu0 %v101
    %545 = vmatpush1.msra.mxu0 %v100
    %546 = vmatprep.subr.mxu0 %v97
    %547 = vmatpush1.msra.mxu0 %v96
    %548 = vmatprep.subr.mxu0 %v221
    %549 = vmatpush2.msra.mxu0 %v220
    %550 = vmatprep.subr.mxu0 %v217
    %551 = vmatpush2.msra.mxu0 %v216
    %552 = vmatprep.subr.mxu0 %v213
    %553 = vmatpush2.msra.mxu0 %v212
    %554 = vmatprep.subr.mxu0 %v209
    %555 = vmatpush2.msra.mxu0 %v208
    %556 = vmatprep.subr.mxu0 %v205
    %557 = vmatpush2.msra.mxu0 %v204
    %558 = vmatprep.subr.mxu0 %v201
    %559 = vmatpush2.msra.mxu0 %v200
    %560 = vmatprep.subr.mxu0 %v197
    %561 = vmatpush2.msra.mxu0 %v196
    %562 = vmatprep.subr.mxu0 %v193
    %563 = vmatpush2.msra.mxu0 %v192
    %564 = vmatprep.subr.mxu0 %v189
    %565 = vmatpush2.msra.mxu0 %v188
    %566 = vmatprep.subr.mxu0 %v185
    %567 = vmatpush2.msra.mxu0 %v184
    %568 = vmatprep.subr.mxu0 %v181
    %569 = vmatpush2.msra.mxu0 %v180
    %570 = vmatprep.subr.mxu0 %v177
    %571 = vmatpush2.msra.mxu0 %v176
    %572 = vmatprep.subr.mxu0 %v173
    %573 = vmatpush2.msra.mxu0 %v172
    %574 = vmatprep.subr.mxu0 %v169
    %575 = vmatpush2.msra.mxu0 %v168
    %576 = vmatprep.subr.mxu0 %v165
    %577 = vmatpush2.msra.mxu0 %v164
    %578 = vmatprep.subr.mxu0 %v161
    %579 = vmatpush2.msra.mxu0 %v160
    %580 = vmatprep.mubr.f32.mxu0 %v225
    %581 = vmatmul.mubr.f32.gmra.mxu0 %v423
    %v582 = vpop.f32.mrf.mxu0
    %v583 = vadd.f32 %v436, %v582
    %v584 = vpop.f32.mrf.mxu0
    %v585 = vadd.f32 %v440, %v584
    %586 = vdwg.mxu0
    %v587 = vxor.u32 %v512, 2147483648
    %v588 = vmul.f32 %v587, 1.442695
    %v589 = vpow.pop %v588
    %v590 = vadd.f32 %v589, 1.0
    %v591 = vrcp.pop %v590
    %v592 = vmul.f32 1.0, %v591
    %v593 = vxor.u32 %v514, 2147483648
    %v594 = vmul.f32 %v593, 1.442695
    %v595 = vpow.pop %v594
    %v596 = vadd.f32 %v595, 1.0
    %v597 = vrcp.pop %v596
    %v598 = vmul.f32 1.0, %v597
    %v599 = vtanh.pop %v583
    %v600 = vxor.u32 %v585, 2147483648
    %v601 = vmul.f32 %v600, 1.442695
    %v602 = vpow.pop %v601
    %v603 = vadd.f32 %v602, 1.0
    %v604 = vrcp.pop %v603
    %v605 = vmul.f32 1.0, %v604
    %v606 = vmul.f32 %v598, %v226
    %v607 = vmul.f32 %v592, %v599
    %v608 = vadd.f32 %v606, %v607
    %v609 = vtanh.pop %v608
    %v610 = vmul.f32 %v605, %v609
    %611 = vst [vmem:[#allocation6] sm:$0x3] %v610
    %s612 = scalar_lea.vmem %s0, 8
    %v613 = vld [vmem:[%s612] sm:$0xff]
    %614 = vmatprep.subr.mxu0 %v91
    %615 = vmatpush1.msra.mxu0 %v90
    %616 = vmatprep.subr.mxu0 %v87
    %617 = vmatpush1.msra.mxu0 %v86
    %618 = vmatprep.subr.mxu0 %v83
    %619 = vmatpush1.msra.mxu0 %v82
    %620 = vmatprep.subr.mxu0 %v79
    %621 = vmatpush1.msra.mxu0 %v78
    %622 = vmatprep.subr.mxu0 %v75
    %623 = vmatpush1.msra.mxu0 %v74
    %624 = vmatprep.subr.mxu0 %v71
    %625 = vmatpush1.msra.mxu0 %v70
    %626 = vmatprep.subr.mxu0 %v67
    %627 = vmatpush1.msra.mxu0 %v66
    %628 = vmatprep.subr.mxu0 %v63
    %629 = vmatpush1.msra.mxu0 %v62
    %630 = vmatprep.subr.mxu0 %v59
    %631 = vmatpush1.msra.mxu0 %v58
    %632 = vmatprep.subr.mxu0 %v55
    %633 = vmatpush1.msra.mxu0 %v54
    %634 = vmatprep.subr.mxu0 %v51
    %635 = vmatpush1.msra.mxu0 %v50
    %636 = vmatprep.subr.mxu0 %v47
    %637 = vmatpush1.msra.mxu0 %v46
    %638 = vmatprep.subr.mxu0 %v43
    %639 = vmatpush1.msra.mxu0 %v42
    %640 = vmatprep.subr.mxu0 %v39
    %641 = vmatpush1.msra.mxu0 %v38
    %642 = vmatprep.subr.mxu0 %v35
    %643 = vmatpush1.msra.mxu0 %v34
    %644 = vmatprep.subr.mxu0 %v31
    %645 = vmatpush1.msra.mxu0 %v30
    %646 = vmatprep.subr.mxu0 0.0
    %647 = vmatpush2.msra.mxu0 0.0
    %648 = vmatprep.subr.mxu0 0.0
    %649 = vmatpush2.msra.mxu0 0.0
    %650 = vmatprep.subr.mxu0 0.0
    %651 = vmatpush2.msra.mxu0 0.0
    %652 = vmatprep.subr.mxu0 0.0
    %653 = vmatpush2.msra.mxu0 0.0
    %654 = vmatprep.subr.mxu0 0.0
    %655 = vmatpush2.msra.mxu0 0.0
    %656 = vmatprep.subr.mxu0 0.0
    %657 = vmatpush2.msra.mxu0 0.0
    %658 = vmatprep.subr.mxu0 0.0
    %659 = vmatpush2.msra.mxu0 0.0
    %660 = vmatprep.subr.mxu0 0.0
    %661 = vmatpush2.msra.mxu0 0.0
    %662 = vmatprep.subr.mxu0 0.0
    %663 = vmatpush2.msra.mxu0 0.0
    %664 = vmatprep.subr.mxu0 0.0
    %665 = vmatpush2.msra.mxu0 0.0
    %666 = vmatprep.subr.mxu0 0.0
    %667 = vmatpush2.msra.mxu0 0.0
    %668 = vmatprep.subr.mxu0 0.0
    %669 = vmatpush2.msra.mxu0 0.0
    %670 = vmatprep.subr.mxu0 0.0
    %671 = vmatpush2.msra.mxu0 0.0
    %672 = vmatprep.subr.mxu0 0.0
    %673 = vmatpush2.msra.mxu0 0.0
    %674 = vmatprep.subr.mxu0 0.0
    %675 = vmatpush2.msra.mxu0 0.0
    %676 = vmatprep.subr.mxu0 0.0
    %677 = vmatpush2.msra.mxu0 0.0
    %678 = vmatprep.mubr.f32.mxu0 0.0
    %679 = vmatmul.mubr.f32.gmra.mxu0 %v423
    %v680 = vpop.f32.mrf.mxu0
    %v681 = vadd.f32 0.0, %v680
    %v682 = vpop.f32.mrf.mxu0
    %v683 = vadd.f32 0.0, %v682
    %684 = vdwg.mxu0
    %685 = vmatprep.subr.mxu0 %v93
    %686 = vmatpush1.msra.mxu0 %v92
    %687 = vmatprep.subr.mxu0 %v89
    %688 = vmatpush1.msra.mxu0 %v88
    %689 = vmatprep.subr.mxu0 %v85
    %690 = vmatpush1.msra.mxu0 %v84
    %691 = vmatprep.subr.mxu0 %v81
    %692 = vmatpush1.msra.mxu0 %v80
    %693 = vmatprep.subr.mxu0 %v77
    %694 = vmatpush1.msra.mxu0 %v76
    %695 = vmatprep.subr.mxu0 %v73
    %696 = vmatpush1.msra.mxu0 %v72
    %697 = vmatprep.subr.mxu0 %v69
    %698 = vmatpush1.msra.mxu0 %v68
    %699 = vmatprep.subr.mxu0 %v65
    %700 = vmatpush1.msra.mxu0 %v64
    %701 = vmatprep.subr.mxu0 %v61
    %702 = vmatpush1.msra.mxu0 %v60
    %703 = vmatprep.subr.mxu0 %v57
    %704 = vmatpush1.msra.mxu0 %v56
    %705 = vmatprep.subr.mxu0 %v53
    %706 = vmatpush1.msra.mxu0 %v52
    %707 = vmatprep.subr.mxu0 %v49
    %708 = vmatpush1.msra.mxu0 %v48
    %709 = vmatprep.subr.mxu0 %v45
    %710 = vmatpush1.msra.mxu0 %v44
    %711 = vmatprep.subr.mxu0 %v41
    %712 = vmatpush1.msra.mxu0 %v40
    %713 = vmatprep.subr.mxu0 %v37
    %714 = vmatpush1.msra.mxu0 %v36
    %715 = vmatprep.subr.mxu0 %v33
    %716 = vmatpush1.msra.mxu0 %v32
    %717 = vmatprep.subr.mxu0 0.0
    %718 = vmatpush2.msra.mxu0 0.0
    %719 = vmatprep.subr.mxu0 0.0
    %720 = vmatpush2.msra.mxu0 0.0
    %721 = vmatprep.subr.mxu0 0.0
    %722 = vmatpush2.msra.mxu0 0.0
    %723 = vmatprep.subr.mxu0 0.0
    %724 = vmatpush2.msra.mxu0 0.0
    %725 = vmatprep.subr.mxu0 0.0
    %726 = vmatpush2.msra.mxu0 0.0
    %727 = vmatprep.subr.mxu0 0.0
    %728 = vmatpush2.msra.mxu0 0.0
    %729 = vmatprep.subr.mxu0 0.0
    %730 = vmatpush2.msra.mxu0 0.0
    %731 = vmatprep.subr.mxu0 0.0
    %732 = vmatpush2.msra.mxu0 0.0
    %733 = vmatprep.subr.mxu0 0.0
    %734 = vmatpush2.msra.mxu0 0.0
    %735 = vmatprep.subr.mxu0 0.0
    %736 = vmatpush2.msra.mxu0 0.0
    %737 = vmatprep.subr.mxu0 0.0
    %738 = vmatpush2.msra.mxu0 0.0
    %739 = vmatprep.subr.mxu0 0.0
    %740 = vmatpush2.msra.mxu0 0.0
    %741 = vmatprep.subr.mxu0 0.0
    %742 = vmatpush2.msra.mxu0 0.0
    %743 = vmatprep.subr.mxu0 0.0
    %744 = vmatpush2.msra.mxu0 0.0
    %745 = vmatprep.subr.mxu0 0.0
    %746 = vmatpush2.msra.mxu0 0.0
    %747 = vmatprep.subr.mxu0 0.0
    %748 = vmatpush2.msra.mxu0 0.0
    %749 = vmatprep.mubr.f32.mxu0 0.0
    %750 = vmatmul.mubr.f32.gmra.mxu0 %v423
    %v751 = vpop.f32.mrf.mxu0
    %v752 = vadd.f32 0.0, %v751
    %v753 = vpop.f32.mrf.mxu0
    %v754 = vadd.f32 0.0, %v753
    %755 = vdwg.mxu0
    %v760 = vcombine.low %v681, %v683
    %v761 = vcombine.low %v752, %v754
    %v763 = vunpack.c.l.s4 1983009808
    %v764 = vunpack.c.0.s8 %v763
    %v765 = vlaneseq
    %v766 = vshrl.u32 %v765, 7
    %v767 = vsub.s32 %v764, %v766
    %v768 = vrot.slane %v760, %v767
    %v770 = vunpack.c.l.s4 1983009808
    %v771 = vunpack.c.0.s8 %v770
    %v772 = vlaneseq
    %v773 = vshrl.u32 %v772, 7
    %v774 = vsub.s32 %v771, %v773
    %v775 = vrot.slane %v761, %v774
    %v776 = vcombine.low %v768, %v775
    %v778 = vadd.f32 %v613, %v776
    %v779 = vxor.u32 %v778, 2147483648
    %v780 = vmul.f32 %v779, 1.442695
    %v781 = vpow.pop %v780
    %v782 = vadd.f32 %v781, 1.0
    %v783 = vrcp.pop %v782
    %v784 = vmul.f32 1.0, %v783
    %v786 = vrot.slane %v778, 2
    %v788 = vxor.u32 %v786, 2147483648
    %v789 = vmul.f32 %v788, 1.442695
    %v790 = vpow.pop %v789
    %v791 = vadd.f32 %v790, 1.0
    %v792 = vrcp.pop %v791
    %v793 = vmul.f32 1.0, %v792
    %v794 = vrot.slane %v778, 4
    %v796 = vtanh.pop %v794
    %v797 = vrot.slane %v778, 6
    %v799 = vxor.u32 %v797, 2147483648
    %v800 = vmul.f32 %v799, 1.442695
    %v801 = vpow.pop %v800
    %v802 = vadd.f32 %v801, 1.0
    %v803 = vrcp.pop %v802
    %v804 = vmul.f32 1.0, %v803
    %v805 = vmul.f32 %v793, %v421
    %v806 = vmul.f32 %v784, %v796
    %v807 = vadd.f32 %v805, %v806
    %v808 = vtanh.pop %v807
    %v809 = vmul.f32 %v804, %v808
    %810 = vmatprep.subr.mxu0 %v155
    %811 = vmatpush1.msra.mxu0 %v154
    %812 = vmatprep.subr.mxu0 %v151
    %813 = vmatpush1.msra.mxu0 %v150
    %814 = vmatprep.subr.mxu0 %v147
    %815 = vmatpush1.msra.mxu0 %v146
    %816 = vmatprep.subr.mxu0 %v143
    %817 = vmatpush1.msra.mxu0 %v142
    %818 = vmatprep.subr.mxu0 %v139
    %819 = vmatpush1.msra.mxu0 %v138
    %820 = vmatprep.subr.mxu0 %v135
    %821 = vmatpush1.msra.mxu0 %v134
    %822 = vmatprep.subr.mxu0 %v131
    %823 = vmatpush1.msra.mxu0 %v130
    %824 = vmatprep.subr.mxu0 %v127
    %825 = vmatpush1.msra.mxu0 %v126
    %826 = vmatprep.subr.mxu0 %v123
    %827 = vmatpush1.msra.mxu0 %v122
    %828 = vmatprep.subr.mxu0 %v119
    %829 = vmatpush1.msra.mxu0 %v118
    %830 = vmatprep.subr.mxu0 %v115
    %831 = vmatpush1.msra.mxu0 %v114
    %832 = vmatprep.subr.mxu0 %v111
    %833 = vmatpush1.msra.mxu0 %v110
    %834 = vmatprep.subr.mxu0 %v107
    %835 = vmatpush1.msra.mxu0 %v106
    %836 = vmatprep.subr.mxu0 %v103
    %837 = vmatpush1.msra.mxu0 %v102
    %838 = vmatprep.subr.mxu0 %v99
    %839 = vmatpush1.msra.mxu0 %v98
    %840 = vmatprep.subr.mxu0 %v95
    %841 = vmatpush1.msra.mxu0 %v94
    %842 = vmatprep.subr.mxu0 %v219
    %843 = vmatpush2.msra.mxu0 %v218
    %844 = vmatprep.subr.mxu0 %v215
    %845 = vmatpush2.msra.mxu0 %v214
    %846 = vmatprep.subr.mxu0 %v211
    %847 = vmatpush2.msra.mxu0 %v210
    %848 = vmatprep.subr.mxu0 %v207
    %849 = vmatpush2.msra.mxu0 %v206
    %850 = vmatprep.subr.mxu0 %v203
    %851 = vmatpush2.msra.mxu0 %v202
    %852 = vmatprep.subr.mxu0 %v199
    %853 = vmatpush2.msra.mxu0 %v198
    %854 = vmatprep.subr.mxu0 %v195
    %855 = vmatpush2.msra.mxu0 %v194
    %856 = vmatprep.subr.mxu0 %v191
    %857 = vmatpush2.msra.mxu0 %v190
    %858 = vmatprep.subr.mxu0 %v187
    %859 = vmatpush2.msra.mxu0 %v186
    %860 = vmatprep.subr.mxu0 %v183
    %861 = vmatpush2.msra.mxu0 %v182
    %862 = vmatprep.subr.mxu0 %v179
    %863 = vmatpush2.msra.mxu0 %v178
    %864 = vmatprep.subr.mxu0 %v175
    %865 = vmatpush2.msra.mxu0 %v174
    %866 = vmatprep.subr.mxu0 %v171
    %867 = vmatpush2.msra.mxu0 %v170
    %868 = vmatprep.subr.mxu0 %v167
    %869 = vmatpush2.msra.mxu0 %v166
    %870 = vmatprep.subr.mxu0 %v163
    %871 = vmatpush2.msra.mxu0 %v162
    %872 = vmatprep.subr.mxu0 %v159
    %873 = vmatpush2.msra.mxu0 %v158
    %874 = vmatprep.mubr.f32.mxu0 %v610
    %875 = vmatmul.mubr.f32.gmra.mxu0 %v809
    %v876 = vpop.f32.mrf.mxu0
    %v877 = vadd.f32 %v428, %v876
    %v878 = vpop.f32.mrf.mxu0
    %v879 = vadd.f32 %v432, %v878
    %880 = vdwg.mxu0
    %881 = vmatprep.subr.mxu0 %v157
    %882 = vmatpush1.msra.mxu0 %v156
    %883 = vmatprep.subr.mxu0 %v153
    %884 = vmatpush1.msra.mxu0 %v152
    %885 = vmatprep.subr.mxu0 %v149
    %886 = vmatpush1.msra.mxu0 %v148
    %887 = vmatprep.subr.mxu0 %v145
    %888 = vmatpush1.msra.mxu0 %v144
    %889 = vmatprep.subr.mxu0 %v141
    %890 = vmatpush1.msra.mxu0 %v140
    %891 = vmatprep.subr.mxu0 %v137
    %892 = vmatpush1.msra.mxu0 %v136
    %893 = vmatprep.subr.mxu0 %v133
    %894 = vmatpush1.msra.mxu0 %v132
    %895 = vmatprep.subr.mxu0 %v129
    %896 = vmatpush1.msra.mxu0 %v128
    %897 = vmatprep.subr.mxu0 %v125
    %898 = vmatpush1.msra.mxu0 %v124
    %899 = vmatprep.subr.mxu0 %v121
    %900 = vmatpush1.msra.mxu0 %v120
    %901 = vmatprep.subr.mxu0 %v117
    %902 = vmatpush1.msra.mxu0 %v116
    %903 = vmatprep.subr.mxu0 %v113
    %904 = vmatpush1.msra.mxu0 %v112
    %905 = vmatprep.subr.mxu0 %v109
    %906 = vmatpush1.msra.mxu0 %v108
    %907 = vmatprep.subr.mxu0 %v105
    %908 = vmatpush1.msra.mxu0 %v104
    %909 = vmatprep.subr.mxu0 %v101
    %910 = vmatpush1.msra.mxu0 %v100
    %911 = vmatprep.subr.mxu0 %v97
    %912 = vmatpush1.msra.mxu0 %v96
    %913 = vmatprep.subr.mxu0 %v221
    %914 = vmatpush2.msra.mxu0 %v220
    %915 = vmatprep.subr.mxu0 %v217
    %916 = vmatpush2.msra.mxu0 %v216
    %917 = vmatprep.subr.mxu0 %v213
    %918 = vmatpush2.msra.mxu0 %v212
    %919 = vmatprep.subr.mxu0 %v209
    %920 = vmatpush2.msra.mxu0 %v208
    %921 = vmatprep.subr.mxu0 %v205
    %922 = vmatpush2.msra.mxu0 %v204
    %923 = vmatprep.subr.mxu0 %v201
    %924 = vmatpush2.msra.mxu0 %v200
    %925 = vmatprep.subr.mxu0 %v197
    %926 = vmatpush2.msra.mxu0 %v196
    %927 = vmatprep.subr.mxu0 %v193
    %928 = vmatpush2.msra.mxu0 %v192
    %929 = vmatprep.subr.mxu0 %v189
    %930 = vmatpush2.msra.mxu0 %v188
    %931 = vmatprep.subr.mxu0 %v185
    %932 = vmatpush2.msra.mxu0 %v184
    %933 = vmatprep.subr.mxu0 %v181
    %934 = vmatpush2.msra.mxu0 %v180
    %935 = vmatprep.subr.mxu0 %v177
    %936 = vmatpush2.msra.mxu0 %v176
    %937 = vmatprep.subr.mxu0 %v173
    %938 = vmatpush2.msra.mxu0 %v172
    %939 = vmatprep.subr.mxu0 %v169
    %940 = vmatpush2.msra.mxu0 %v168
    %941 = vmatprep.subr.mxu0 %v165
    %942 = vmatpush2.msra.mxu0 %v164
    %943 = vmatprep.subr.mxu0 %v161
    %944 = vmatpush2.msra.mxu0 %v160
    %945 = vmatprep.mubr.f32.mxu0 %v610
    %946 = vmatmul.mubr.f32.gmra.mxu0 %v809
    %v947 = vpop.f32.mrf.mxu0
    %v948 = vadd.f32 %v436, %v947
    %v949 = vpop.f32.mrf.mxu0
    %v950 = vadd.f32 %v440, %v949
    %951 = vdwg.mxu0
    %v952 = vxor.u32 %v877, 2147483648
    %v953 = vmul.f32 %v952, 1.442695
    %v954 = vpow.pop %v953
    %v955 = vadd.f32 %v954, 1.0
    %v956 = vrcp.pop %v955
    %v957 = vmul.f32 1.0, %v956
    %v958 = vxor.u32 %v879, 2147483648
    %v959 = vmul.f32 %v958, 1.442695
    %v960 = vpow.pop %v959
    %v961 = vadd.f32 %v960, 1.0
    %v962 = vrcp.pop %v961
    %v963 = vmul.f32 1.0, %v962
    %v964 = vtanh.pop %v948
    %v965 = vxor.u32 %v950, 2147483648
    %v966 = vmul.f32 %v965, 1.442695
    %v967 = vpow.pop %v966
    %v968 = vadd.f32 %v967, 1.0
    %v969 = vrcp.pop %v968
    %v970 = vmul.f32 1.0, %v969
    %v971 = vmul.f32 %v963, %v608
    %v972 = vmul.f32 %v957, %v964
    %v973 = vadd.f32 %v971, %v972
    %v974 = vtanh.pop %v973
    %v975 = vmul.f32 %v970, %v974
    %s976 = scalar_lea.vmem [#allocation6], 2
    %977 = vst [vmem:[%s976] sm:$0x3] %v975
    %s978 = scalar_lea.vmem %s0, 16
    %v979 = vld [vmem:[%s978] sm:$0xff]
    %980 = vmatprep.subr.mxu0 %v91
    %981 = vmatpush1.msra.mxu0 %v90
    %982 = vmatprep.subr.mxu0 %v87
    %983 = vmatpush1.msra.mxu0 %v86
    %984 = vmatprep.subr.mxu0 %v83
    %985 = vmatpush1.msra.mxu0 %v82
    %986 = vmatprep.subr.mxu0 %v79
    %987 = vmatpush1.msra.mxu0 %v78
    %988 = vmatprep.subr.mxu0 %v75
    %989 = vmatpush1.msra.mxu0 %v74
    %990 = vmatprep.subr.mxu0 %v71
    %991 = vmatpush1.msra.mxu0 %v70
    %992 = vmatprep.subr.mxu0 %v67
    %993 = vmatpush1.msra.mxu0 %v66
    %994 = vmatprep.subr.mxu0 %v63
    %995 = vmatpush1.msra.mxu0 %v62
    %996 = vmatprep.subr.mxu0 %v59
    %997 = vmatpush1.msra.mxu0 %v58
    %998 = vmatprep.subr.mxu0 %v55
    %999 = vmatpush1.msra.mxu0 %v54
    %1000 = vmatprep.subr.mxu0 %v51
    %1001 = vmatpush1.msra.mxu0 %v50
    %1002 = vmatprep.subr.mxu0 %v47
    %1003 = vmatpush1.msra.mxu0 %v46
    %1004 = vmatprep.subr.mxu0 %v43
    %1005 = vmatpush1.msra.mxu0 %v42
    %1006 = vmatprep.subr.mxu0 %v39
    %1007 = vmatpush1.msra.mxu0 %v38
    %1008 = vmatprep.subr.mxu0 %v35
    %1009 = vmatpush1.msra.mxu0 %v34
    %1010 = vmatprep.subr.mxu0 %v31
    %1011 = vmatpush1.msra.mxu0 %v30
    %1012 = vmatprep.subr.mxu0 0.0
    %1013 = vmatpush2.msra.mxu0 0.0
    %1014 = vmatprep.subr.mxu0 0.0
    %1015 = vmatpush2.msra.mxu0 0.0
    %1016 = vmatprep.subr.mxu0 0.0
    %1017 = vmatpush2.msra.mxu0 0.0
    %1018 = vmatprep.subr.mxu0 0.0
    %1019 = vmatpush2.msra.mxu0 0.0
    %1020 = vmatprep.subr.mxu0 0.0
    %1021 = vmatpush2.msra.mxu0 0.0
    %1022 = vmatprep.subr.mxu0 0.0
    %1023 = vmatpush2.msra.mxu0 0.0
    %1024 = vmatprep.subr.mxu0 0.0
    %1025 = vmatpush2.msra.mxu0 0.0
    %1026 = vmatprep.subr.mxu0 0.0
    %1027 = vmatpush2.msra.mxu0 0.0
    %1028 = vmatprep.subr.mxu0 0.0
    %1029 = vmatpush2.msra.mxu0 0.0
    %1030 = vmatprep.subr.mxu0 0.0
    %1031 = vmatpush2.msra.mxu0 0.0
    %1032 = vmatprep.subr.mxu0 0.0
    %1033 = vmatpush2.msra.mxu0 0.0
    %1034 = vmatprep.subr.mxu0 0.0
    %1035 = vmatpush2.msra.mxu0 0.0
    %1036 = vmatprep.subr.mxu0 0.0
    %1037 = vmatpush2.msra.mxu0 0.0
    %1038 = vmatprep.subr.mxu0 0.0
    %1039 = vmatpush2.msra.mxu0 0.0
    %1040 = vmatprep.subr.mxu0 0.0
    %1041 = vmatpush2.msra.mxu0 0.0
    %1042 = vmatprep.subr.mxu0 0.0
    %1043 = vmatpush2.msra.mxu0 0.0
    %1044 = vmatprep.mubr.f32.mxu0 0.0
    %1045 = vmatmul.mubr.f32.gmra.mxu0 %v809
    %v1046 = vpop.f32.mrf.mxu0
    %v1047 = vadd.f32 0.0, %v1046
    %v1048 = vpop.f32.mrf.mxu0
    %v1049 = vadd.f32 0.0, %v1048
    %1050 = vdwg.mxu0
    %1051 = vmatprep.subr.mxu0 %v93
    %1052 = vmatpush1.msra.mxu0 %v92
    %1053 = vmatprep.subr.mxu0 %v89
    %1054 = vmatpush1.msra.mxu0 %v88
    %1055 = vmatprep.subr.mxu0 %v85
    %1056 = vmatpush1.msra.mxu0 %v84
    %1057 = vmatprep.subr.mxu0 %v81
    %1058 = vmatpush1.msra.mxu0 %v80
    %1059 = vmatprep.subr.mxu0 %v77
    %1060 = vmatpush1.msra.mxu0 %v76
    %1061 = vmatprep.subr.mxu0 %v73
    %1062 = vmatpush1.msra.mxu0 %v72
    %1063 = vmatprep.subr.mxu0 %v69
    %1064 = vmatpush1.msra.mxu0 %v68
    %1065 = vmatprep.subr.mxu0 %v65
    %1066 = vmatpush1.msra.mxu0 %v64
    %1067 = vmatprep.subr.mxu0 %v61
    %1068 = vmatpush1.msra.mxu0 %v60
    %1069 = vmatprep.subr.mxu0 %v57
    %1070 = vmatpush1.msra.mxu0 %v56
    %1071 = vmatprep.subr.mxu0 %v53
    %1072 = vmatpush1.msra.mxu0 %v52
    %1073 = vmatprep.subr.mxu0 %v49
    %1074 = vmatpush1.msra.mxu0 %v48
    %1075 = vmatprep.subr.mxu0 %v45
    %1076 = vmatpush1.msra.mxu0 %v44
    %1077 = vmatprep.subr.mxu0 %v41
    %1078 = vmatpush1.msra.mxu0 %v40
    %1079 = vmatprep.subr.mxu0 %v37
    %1080 = vmatpush1.msra.mxu0 %v36
    %1081 = vmatprep.subr.mxu0 %v33
    %1082 = vmatpush1.msra.mxu0 %v32
    %1083 = vmatprep.subr.mxu0 0.0
    %1084 = vmatpush2.msra.mxu0 0.0
    %1085 = vmatprep.subr.mxu0 0.0
    %1086 = vmatpush2.msra.mxu0 0.0
    %1087 = vmatprep.subr.mxu0 0.0
    %1088 = vmatpush2.msra.mxu0 0.0
    %1089 = vmatprep.subr.mxu0 0.0
    %1090 = vmatpush2.msra.mxu0 0.0
    %1091 = vmatprep.subr.mxu0 0.0
    %1092 = vmatpush2.msra.mxu0 0.0
    %1093 = vmatprep.subr.mxu0 0.0
    %1094 = vmatpush2.msra.mxu0 0.0
    %1095 = vmatprep.subr.mxu0 0.0
    %1096 = vmatpush2.msra.mxu0 0.0
    %1097 = vmatprep.subr.mxu0 0.0
    %1098 = vmatpush2.msra.mxu0 0.0
    %1099 = vmatprep.subr.mxu0 0.0
    %1100 = vmatpush2.msra.mxu0 0.0
    %1101 = vmatprep.subr.mxu0 0.0
    %1102 = vmatpush2.msra.mxu0 0.0
    %1103 = vmatprep.subr.mxu0 0.0
    %1104 = vmatpush2.msra.mxu0 0.0
    %1105 = vmatprep.subr.mxu0 0.0
    %1106 = vmatpush2.msra.mxu0 0.0
    %1107 = vmatprep.subr.mxu0 0.0
    %1108 = vmatpush2.msra.mxu0 0.0
    %1109 = vmatprep.subr.mxu0 0.0
    %1110 = vmatpush2.msra.mxu0 0.0
    %1111 = vmatprep.subr.mxu0 0.0
    %1112 = vmatpush2.msra.mxu0 0.0
    %1113 = vmatprep.subr.mxu0 0.0
    %1114 = vmatpush2.msra.mxu0 0.0
    %1115 = vmatprep.mubr.f32.mxu0 0.0
    %1116 = vmatmul.mubr.f32.gmra.mxu0 %v809
    %v1117 = vpop.f32.mrf.mxu0
    %v1118 = vadd.f32 0.0, %v1117
    %v1119 = vpop.f32.mrf.mxu0
    %v1120 = vadd.f32 0.0, %v1119
    %1121 = vdwg.mxu0
    %v1126 = vcombine.low %v1047, %v1049
    %v1127 = vcombine.low %v1118, %v1120
    %v1129 = vunpack.c.l.s4 1983009808
    %v1130 = vunpack.c.0.s8 %v1129
    %v1131 = vlaneseq
    %v1132 = vshrl.u32 %v1131, 7
    %v1133 = vsub.s32 %v1130, %v1132
    %v1134 = vrot.slane %v1126, %v1133
    %v1136 = vunpack.c.l.s4 1983009808
    %v1137 = vunpack.c.0.s8 %v1136
    %v1138 = vlaneseq
    %v1139 = vshrl.u32 %v1138, 7
    %v1140 = vsub.s32 %v1137, %v1139
    %v1141 = vrot.slane %v1127, %v1140
    %v1142 = vcombine.low %v1134, %v1141
    %v1144 = vadd.f32 %v979, %v1142
    %v1145 = vxor.u32 %v1144, 2147483648
    %v1146 = vmul.f32 %v1145, 1.442695
    %v1147 = vpow.pop %v1146
    %v1148 = vadd.f32 %v1147, 1.0
    %v1149 = vrcp.pop %v1148
    %v1150 = vmul.f32 1.0, %v1149
    %v1152 = vrot.slane %v1144, 2
    %v1154 = vxor.u32 %v1152, 2147483648
    %v1155 = vmul.f32 %v1154, 1.442695
    %v1156 = vpow.pop %v1155
    %v1157 = vadd.f32 %v1156, 1.0
    %v1158 = vrcp.pop %v1157
    %v1159 = vmul.f32 1.0, %v1158
    %v1160 = vrot.slane %v1144, 4
    %v1162 = vtanh.pop %v1160
    %v1163 = vrot.slane %v1144, 6
    %v1165 = vxor.u32 %v1163, 2147483648
    %v1166 = vmul.f32 %v1165, 1.442695
    %v1167 = vpow.pop %v1166
    %v1168 = vadd.f32 %v1167, 1.0
    %v1169 = vrcp.pop %v1168
    %v1170 = vmul.f32 1.0, %v1169
    %v1171 = vmul.f32 %v1159, %v807
    %v1172 = vmul.f32 %v1150, %v1162
    %v1173 = vadd.f32 %v1171, %v1172
    %v1174 = vtanh.pop %v1173
    %v1175 = vmul.f32 %v1170, %v1174
    %1176 = vmatprep.subr.mxu0 %v155
    %1177 = vmatpush1.msra.mxu0 %v154
    %1178 = vmatprep.subr.mxu0 %v151
    %1179 = vmatpush1.msra.mxu0 %v150
    %1180 = vmatprep.subr.mxu0 %v147
    %1181 = vmatpush1.msra.mxu0 %v146
    %1182 = vmatprep.subr.mxu0 %v143
    %1183 = vmatpush1.msra.mxu0 %v142
    %1184 = vmatprep.subr.mxu0 %v139
    %1185 = vmatpush1.msra.mxu0 %v138
    %1186 = vmatprep.subr.mxu0 %v135
    %1187 = vmatpush1.msra.mxu0 %v134
    %1188 = vmatprep.subr.mxu0 %v131
    %1189 = vmatpush1.msra.mxu0 %v130
    %1190 = vmatprep.subr.mxu0 %v127
    %1191 = vmatpush1.msra.mxu0 %v126
    %1192 = vmatprep.subr.mxu0 %v123
    %1193 = vmatpush1.msra.mxu0 %v122
    %1194 = vmatprep.subr.mxu0 %v119
    %1195 = vmatpush1.msra.mxu0 %v118
    %1196 = vmatprep.subr.mxu0 %v115
    %1197 = vmatpush1.msra.mxu0 %v114
    %1198 = vmatprep.subr.mxu0 %v111
    %1199 = vmatpush1.msra.mxu0 %v110
    %1200 = vmatprep.subr.mxu0 %v107
    %1201 = vmatpush1.msra.mxu0 %v106
    %1202 = vmatprep.subr.mxu0 %v103
    %1203 = vmatpush1.msra.mxu0 %v102
    %1204 = vmatprep.subr.mxu0 %v99
    %1205 = vmatpush1.msra.mxu0 %v98
    %1206 = vmatprep.subr.mxu0 %v95
    %1207 = vmatpush1.msra.mxu0 %v94
    %1208 = vmatprep.subr.mxu0 %v219
    %1209 = vmatpush2.msra.mxu0 %v218
    %1210 = vmatprep.subr.mxu0 %v215
    %1211 = vmatpush2.msra.mxu0 %v214
    %1212 = vmatprep.subr.mxu0 %v211
    %1213 = vmatpush2.msra.mxu0 %v210
    %1214 = vmatprep.subr.mxu0 %v207
    %1215 = vmatpush2.msra.mxu0 %v206
    %1216 = vmatprep.subr.mxu0 %v203
    %1217 = vmatpush2.msra.mxu0 %v202
    %1218 = vmatprep.subr.mxu0 %v199
    %1219 = vmatpush2.msra.mxu0 %v198
    %1220 = vmatprep.subr.mxu0 %v195
    %1221 = vmatpush2.msra.mxu0 %v194
    %1222 = vmatprep.subr.mxu0 %v191
    %1223 = vmatpush2.msra.mxu0 %v190
    %1224 = vmatprep.subr.mxu0 %v187
    %1225 = vmatpush2.msra.mxu0 %v186
    %1226 = vmatprep.subr.mxu0 %v183
    %1227 = vmatpush2.msra.mxu0 %v182
    %1228 = vmatprep.subr.mxu0 %v179
    %1229 = vmatpush2.msra.mxu0 %v178
    %1230 = vmatprep.subr.mxu0 %v175
    %1231 = vmatpush2.msra.mxu0 %v174
    %1232 = vmatprep.subr.mxu0 %v171
    %1233 = vmatpush2.msra.mxu0 %v170
    %1234 = vmatprep.subr.mxu0 %v167
    %1235 = vmatpush2.msra.mxu0 %v166
    %1236 = vmatprep.subr.mxu0 %v163
    %1237 = vmatpush2.msra.mxu0 %v162
    %1238 = vmatprep.subr.mxu0 %v159
    %1239 = vmatpush2.msra.mxu0 %v158
    %1240 = vmatprep.mubr.f32.mxu0 %v975
    %1241 = vmatmul.mubr.f32.gmra.mxu0 %v1175
    %v1242 = vpop.f32.mrf.mxu0
    %v1243 = vadd.f32 %v428, %v1242
    %v1244 = vpop.f32.mrf.mxu0
    %v1245 = vadd.f32 %v432, %v1244
    %1246 = vdwg.mxu0
    %1247 = vmatprep.subr.mxu0 %v157
    %1248 = vmatpush1.msra.mxu0 %v156
    %1249 = vmatprep.subr.mxu0 %v153
    %1250 = vmatpush1.msra.mxu0 %v152
    %1251 = vmatprep.subr.mxu0 %v149
    %1252 = vmatpush1.msra.mxu0 %v148
    %1253 = vmatprep.subr.mxu0 %v145
    %1254 = vmatpush1.msra.mxu0 %v144
    %1255 = vmatprep.subr.mxu0 %v141
    %1256 = vmatpush1.msra.mxu0 %v140
    %1257 = vmatprep.subr.mxu0 %v137
    %1258 = vmatpush1.msra.mxu0 %v136
    %1259 = vmatprep.subr.mxu0 %v133
    %1260 = vmatpush1.msra.mxu0 %v132
    %1261 = vmatprep.subr.mxu0 %v129
    %1262 = vmatpush1.msra.mxu0 %v128
    %1263 = vmatprep.subr.mxu0 %v125
    %1264 = vmatpush1.msra.mxu0 %v124
    %1265 = vmatprep.subr.mxu0 %v121
    %1266 = vmatpush1.msra.mxu0 %v120
    %1267 = vmatprep.subr.mxu0 %v117
    %1268 = vmatpush1.msra.mxu0 %v116
    %1269 = vmatprep.subr.mxu0 %v113
    %1270 = vmatpush1.msra.mxu0 %v112
    %1271 = vmatprep.subr.mxu0 %v109
    %1272 = vmatpush1.msra.mxu0 %v108
    %1273 = vmatprep.subr.mxu0 %v105
    %1274 = vmatpush1.msra.mxu0 %v104
    %1275 = vmatprep.subr.mxu0 %v101
    %1276 = vmatpush1.msra.mxu0 %v100
    %1277 = vmatprep.subr.mxu0 %v97
    %1278 = vmatpush1.msra.mxu0 %v96
    %1279 = vmatprep.subr.mxu0 %v221
    %1280 = vmatpush2.msra.mxu0 %v220
    %1281 = vmatprep.subr.mxu0 %v217
    %1282 = vmatpush2.msra.mxu0 %v216
    %1283 = vmatprep.subr.mxu0 %v213
    %1284 = vmatpush2.msra.mxu0 %v212
    %1285 = vmatprep.subr.mxu0 %v209
    %1286 = vmatpush2.msra.mxu0 %v208
    %1287 = vmatprep.subr.mxu0 %v205
    %1288 = vmatpush2.msra.mxu0 %v204
    %1289 = vmatprep.subr.mxu0 %v201
    %1290 = vmatpush2.msra.mxu0 %v200
    %1291 = vmatprep.subr.mxu0 %v197
    %1292 = vmatpush2.msra.mxu0 %v196
    %1293 = vmatprep.subr.mxu0 %v193
    %1294 = vmatpush2.msra.mxu0 %v192
    %1295 = vmatprep.subr.mxu0 %v189
    %1296 = vmatpush2.msra.mxu0 %v188
    %1297 = vmatprep.subr.mxu0 %v185
    %1298 = vmatpush2.msra.mxu0 %v184
    %1299 = vmatprep.subr.mxu0 %v181
    %1300 = vmatpush2.msra.mxu0 %v180
    %1301 = vmatprep.subr.mxu0 %v177
    %1302 = vmatpush2.msra.mxu0 %v176
    %1303 = vmatprep.subr.mxu0 %v173
    %1304 = vmatpush2.msra.mxu0 %v172
    %1305 = vmatprep.subr.mxu0 %v169
    %1306 = vmatpush2.msra.mxu0 %v168
    %1307 = vmatprep.subr.mxu0 %v165
    %1308 = vmatpush2.msra.mxu0 %v164
    %1309 = vmatprep.subr.mxu0 %v161
    %1310 = vmatpush2.msra.mxu0 %v160
    %1311 = vmatprep.mubr.f32.mxu0 %v975
    %1312 = vmatmul.mubr.f32.gmra.mxu0 %v1175
    %v1313 = vpop.f32.mrf.mxu0
    %v1314 = vadd.f32 %v436, %v1313
    %v1315 = vpop.f32.mrf.mxu0
    %v1316 = vadd.f32 %v440, %v1315
    %1317 = vdwg.mxu0
    %v1318 = vxor.u32 %v1243, 2147483648
    %v1319 = vmul.f32 %v1318, 1.442695
    %v1320 = vpow.pop %v1319
    %v1321 = vadd.f32 %v1320, 1.0
    %v1322 = vrcp.pop %v1321
    %v1323 = vmul.f32 1.0, %v1322
    %v1324 = vxor.u32 %v1245, 2147483648
    %v1325 = vmul.f32 %v1324, 1.442695
    %v1326 = vpow.pop %v1325
    %v1327 = vadd.f32 %v1326, 1.0
    %v1328 = vrcp.pop %v1327
    %v1329 = vmul.f32 1.0, %v1328
    %v1330 = vtanh.pop %v1314
    %v1331 = vxor.u32 %v1316, 2147483648
    %v1332 = vmul.f32 %v1331, 1.442695
    %v1333 = vpow.pop %v1332
    %v1334 = vadd.f32 %v1333, 1.0
    %v1335 = vrcp.pop %v1334
    %v1336 = vmul.f32 1.0, %v1335
    %v1337 = vmul.f32 %v1329, %v973
    %v1338 = vmul.f32 %v1323, %v1330
    %v1339 = vadd.f32 %v1337, %v1338
    %v1340 = vtanh.pop %v1339
    %v1341 = vmul.f32 %v1336, %v1340
    %s1342 = scalar_lea.vmem [#allocation6], 4
    %1343 = vst [vmem:[%s1342] sm:$0x3] %v1341
    %s1344 = scalar_lea.vmem %s0, 24
    %v1345 = vld [vmem:[%s1344] sm:$0xff]
    %1346 = vmatprep.subr.mxu0 %v91
    %1347 = vmatpush1.msra.mxu0 %v90
    %1348 = vmatprep.subr.mxu0 %v87
    %1349 = vmatpush1.msra.mxu0 %v86
    %1350 = vmatprep.subr.mxu0 %v83
    %1351 = vmatpush1.msra.mxu0 %v82
    %1352 = vmatprep.subr.mxu0 %v79
    %1353 = vmatpush1.msra.mxu0 %v78
    %1354 = vmatprep.subr.mxu0 %v75
    %1355 = vmatpush1.msra.mxu0 %v74
    %1356 = vmatprep.subr.mxu0 %v71
    %1357 = vmatpush1.msra.mxu0 %v70
    %1358 = vmatprep.subr.mxu0 %v67
    %1359 = vmatpush1.msra.mxu0 %v66
    %1360 = vmatprep.subr.mxu0 %v63
    %1361 = vmatpush1.msra.mxu0 %v62
    %1362 = vmatprep.subr.mxu0 %v59
    %1363 = vmatpush1.msra.mxu0 %v58
    %1364 = vmatprep.subr.mxu0 %v55
    %1365 = vmatpush1.msra.mxu0 %v54
    %1366 = vmatprep.subr.mxu0 %v51
    %1367 = vmatpush1.msra.mxu0 %v50
    %1368 = vmatprep.subr.mxu0 %v47
    %1369 = vmatpush1.msra.mxu0 %v46
    %1370 = vmatprep.subr.mxu0 %v43
    %1371 = vmatpush1.msra.mxu0 %v42
    %1372 = vmatprep.subr.mxu0 %v39
    %1373 = vmatpush1.msra.mxu0 %v38
    %1374 = vmatprep.subr.mxu0 %v35
    %1375 = vmatpush1.msra.mxu0 %v34
    %1376 = vmatprep.subr.mxu0 %v31
    %1377 = vmatpush1.msra.mxu0 %v30
    %1378 = vmatprep.subr.mxu0 0.0
    %1379 = vmatpush2.msra.mxu0 0.0
    %1380 = vmatprep.subr.mxu0 0.0
    %1381 = vmatpush2.msra.mxu0 0.0
    %1382 = vmatprep.subr.mxu0 0.0
    %1383 = vmatpush2.msra.mxu0 0.0
    %1384 = vmatprep.subr.mxu0 0.0
    %1385 = vmatpush2.msra.mxu0 0.0
    %1386 = vmatprep.subr.mxu0 0.0
    %1387 = vmatpush2.msra.mxu0 0.0
    %1388 = vmatprep.subr.mxu0 0.0
    %1389 = vmatpush2.msra.mxu0 0.0
    %1390 = vmatprep.subr.mxu0 0.0
    %1391 = vmatpush2.msra.mxu0 0.0
    %1392 = vmatprep.subr.mxu0 0.0
    %1393 = vmatpush2.msra.mxu0 0.0
    %1394 = vmatprep.subr.mxu0 0.0
    %1395 = vmatpush2.msra.mxu0 0.0
    %1396 = vmatprep.subr.mxu0 0.0
    %1397 = vmatpush2.msra.mxu0 0.0
    %1398 = vmatprep.subr.mxu0 0.0
    %1399 = vmatpush2.msra.mxu0 0.0
    %1400 = vmatprep.subr.mxu0 0.0
    %1401 = vmatpush2.msra.mxu0 0.0
    %1402 = vmatprep.subr.mxu0 0.0
    %1403 = vmatpush2.msra.mxu0 0.0
    %1404 = vmatprep.subr.mxu0 0.0
    %1405 = vmatpush2.msra.mxu0 0.0
    %1406 = vmatprep.subr.mxu0 0.0
    %1407 = vmatpush2.msra.mxu0 0.0
    %1408 = vmatprep.subr.mxu0 0.0
    %1409 = vmatpush2.msra.mxu0 0.0
    %1410 = vmatprep.mubr.f32.mxu0 0.0
    %1411 = vmatmul.mubr.f32.gmra.mxu0 %v1175
    %v1412 = vpop.f32.mrf.mxu0
    %v1413 = vadd.f32 0.0, %v1412
    %v1414 = vpop.f32.mrf.mxu0
    %v1415 = vadd.f32 0.0, %v1414
    %1416 = vdwg.mxu0
    %1417 = vmatprep.subr.mxu0 %v93
    %1418 = vmatpush1.msra.mxu0 %v92
    %1419 = vmatprep.subr.mxu0 %v89
    %1420 = vmatpush1.msra.mxu0 %v88
    %1421 = vmatprep.subr.mxu0 %v85
    %1422 = vmatpush1.msra.mxu0 %v84
    %1423 = vmatprep.subr.mxu0 %v81
    %1424 = vmatpush1.msra.mxu0 %v80
    %1425 = vmatprep.subr.mxu0 %v77
    %1426 = vmatpush1.msra.mxu0 %v76
    %1427 = vmatprep.subr.mxu0 %v73
    %1428 = vmatpush1.msra.mxu0 %v72
    %1429 = vmatprep.subr.mxu0 %v69
    %1430 = vmatpush1.msra.mxu0 %v68
    %1431 = vmatprep.subr.mxu0 %v65
    %1432 = vmatpush1.msra.mxu0 %v64
    %1433 = vmatprep.subr.mxu0 %v61
    %1434 = vmatpush1.msra.mxu0 %v60
    %1435 = vmatprep.subr.mxu0 %v57
    %1436 = vmatpush1.msra.mxu0 %v56
    %1437 = vmatprep.subr.mxu0 %v53
    %1438 = vmatpush1.msra.mxu0 %v52
    %1439 = vmatprep.subr.mxu0 %v49
    %1440 = vmatpush1.msra.mxu0 %v48
    %1441 = vmatprep.subr.mxu0 %v45
    %1442 = vmatpush1.msra.mxu0 %v44
    %1443 = vmatprep.subr.mxu0 %v41
    %1444 = vmatpush1.msra.mxu0 %v40
    %1445 = vmatprep.subr.mxu0 %v37
    %1446 = vmatpush1.msra.mxu0 %v36
    %1447 = vmatprep.subr.mxu0 %v33
    %1448 = vmatpush1.msra.mxu0 %v32
    %1449 = vmatprep.subr.mxu0 0.0
    %1450 = vmatpush2.msra.mxu0 0.0
    %1451 = vmatprep.subr.mxu0 0.0
    %1452 = vmatpush2.msra.mxu0 0.0
    %1453 = vmatprep.subr.mxu0 0.0
    %1454 = vmatpush2.msra.mxu0 0.0
    %1455 = vmatprep.subr.mxu0 0.0
    %1456 = vmatpush2.msra.mxu0 0.0
    %1457 = vmatprep.subr.mxu0 0.0
    %1458 = vmatpush2.msra.mxu0 0.0
    %1459 = vmatprep.subr.mxu0 0.0
    %1460 = vmatpush2.msra.mxu0 0.0
    %1461 = vmatprep.subr.mxu0 0.0
    %1462 = vmatpush2.msra.mxu0 0.0
    %1463 = vmatprep.subr.mxu0 0.0
    %1464 = vmatpush2.msra.mxu0 0.0
    %1465 = vmatprep.subr.mxu0 0.0
    %1466 = vmatpush2.msra.mxu0 0.0
    %1467 = vmatprep.subr.mxu0 0.0
    %1468 = vmatpush2.msra.mxu0 0.0
    %1469 = vmatprep.subr.mxu0 0.0
    %1470 = vmatpush2.msra.mxu0 0.0
    %1471 = vmatprep.subr.mxu0 0.0
    %1472 = vmatpush2.msra.mxu0 0.0
    %1473 = vmatprep.subr.mxu0 0.0
    %1474 = vmatpush2.msra.mxu0 0.0
    %1475 = vmatprep.subr.mxu0 0.0
    %1476 = vmatpush2.msra.mxu0 0.0
    %1477 = vmatprep.subr.mxu0 0.0
    %1478 = vmatpush2.msra.mxu0 0.0
    %1479 = vmatprep.subr.mxu0 0.0
    %1480 = vmatpush2.msra.mxu0 0.0
    %1481 = vmatprep.mubr.f32.mxu0 0.0
    %1482 = vmatmul.mubr.f32.gmra.mxu0 %v1175
    %v1483 = vpop.f32.mrf.mxu0
    %v1484 = vadd.f32 0.0, %v1483
    %v1485 = vpop.f32.mrf.mxu0
    %v1486 = vadd.f32 0.0, %v1485
    %1487 = vdwg.mxu0
    %v1492 = vcombine.low %v1413, %v1415
    %v1493 = vcombine.low %v1484, %v1486
    %v1495 = vunpack.c.l.s4 1983009808
    %v1496 = vunpack.c.0.s8 %v1495
    %v1497 = vlaneseq
    %v1498 = vshrl.u32 %v1497, 7
    %v1499 = vsub.s32 %v1496, %v1498
    %v1500 = vrot.slane %v1492, %v1499
    %v1502 = vunpack.c.l.s4 1983009808
    %v1503 = vunpack.c.0.s8 %v1502
    %v1504 = vlaneseq
    %v1505 = vshrl.u32 %v1504, 7
    %v1506 = vsub.s32 %v1503, %v1505
    %v1507 = vrot.slane %v1493, %v1506
    %v1508 = vcombine.low %v1500, %v1507
    %v1510 = vadd.f32 %v1345, %v1508
    %v1511 = vxor.u32 %v1510, 2147483648
    %v1512 = vmul.f32 %v1511, 1.442695
    %v1513 = vpow.pop %v1512
    %v1514 = vadd.f32 %v1513, 1.0
    %v1515 = vrcp.pop %v1514
    %v1516 = vmul.f32 1.0, %v1515
    %v1518 = vrot.slane %v1510, 2
    %v1520 = vxor.u32 %v1518, 2147483648
    %v1521 = vmul.f32 %v1520, 1.442695
    %v1522 = vpow.pop %v1521
    %v1523 = vadd.f32 %v1522, 1.0
    %v1524 = vrcp.pop %v1523
    %v1525 = vmul.f32 1.0, %v1524
    %v1526 = vrot.slane %v1510, 4
    %v1528 = vtanh.pop %v1526
    %v1529 = vrot.slane %v1510, 6
    %v1531 = vxor.u32 %v1529, 2147483648
    %v1532 = vmul.f32 %v1531, 1.442695
    %v1533 = vpow.pop %v1532
    %v1534 = vadd.f32 %v1533, 1.0
    %v1535 = vrcp.pop %v1534
    %v1536 = vmul.f32 1.0, %v1535
    %v1537 = vmul.f32 %v1525, %v1173
    %v1538 = vmul.f32 %v1516, %v1528
    %v1539 = vadd.f32 %v1537, %v1538
    %v1540 = vtanh.pop %v1539
    %v1541 = vmul.f32 %v1536, %v1540
    %1542 = vmatprep.subr.mxu0 %v155
    %1543 = vmatpush1.msra.mxu0 %v154
    %1544 = vmatprep.subr.mxu0 %v151
    %1545 = vmatpush1.msra.mxu0 %v150
    %1546 = vmatprep.subr.mxu0 %v147
    %1547 = vmatpush1.msra.mxu0 %v146
    %1548 = vmatprep.subr.mxu0 %v143
    %1549 = vmatpush1.msra.mxu0 %v142
    %1550 = vmatprep.subr.mxu0 %v139
    %1551 = vmatpush1.msra.mxu0 %v138
    %1552 = vmatprep.subr.mxu0 %v135
    %1553 = vmatpush1.msra.mxu0 %v134
    %1554 = vmatprep.subr.mxu0 %v131
    %1555 = vmatpush1.msra.mxu0 %v130
    %1556 = vmatprep.subr.mxu0 %v127
    %1557 = vmatpush1.msra.mxu0 %v126
    %1558 = vmatprep.subr.mxu0 %v123
    %1559 = vmatpush1.msra.mxu0 %v122
    %1560 = vmatprep.subr.mxu0 %v119
    %1561 = vmatpush1.msra.mxu0 %v118
    %1562 = vmatprep.subr.mxu0 %v115
    %1563 = vmatpush1.msra.mxu0 %v114
    %1564 = vmatprep.subr.mxu0 %v111
    %1565 = vmatpush1.msra.mxu0 %v110
    %1566 = vmatprep.subr.mxu0 %v107
    %1567 = vmatpush1.msra.mxu0 %v106
    %1568 = vmatprep.subr.mxu0 %v103
    %1569 = vmatpush1.msra.mxu0 %v102
    %1570 = vmatprep.subr.mxu0 %v99
    %1571 = vmatpush1.msra.mxu0 %v98
    %1572 = vmatprep.subr.mxu0 %v95
    %1573 = vmatpush1.msra.mxu0 %v94
    %1574 = vmatprep.subr.mxu0 %v219
    %1575 = vmatpush2.msra.mxu0 %v218
    %1576 = vmatprep.subr.mxu0 %v215
    %1577 = vmatpush2.msra.mxu0 %v214
    %1578 = vmatprep.subr.mxu0 %v211
    %1579 = vmatpush2.msra.mxu0 %v210
    %1580 = vmatprep.subr.mxu0 %v207
    %1581 = vmatpush2.msra.mxu0 %v206
    %1582 = vmatprep.subr.mxu0 %v203
    %1583 = vmatpush2.msra.mxu0 %v202
    %1584 = vmatprep.subr.mxu0 %v199
    %1585 = vmatpush2.msra.mxu0 %v198
    %1586 = vmatprep.subr.mxu0 %v195
    %1587 = vmatpush2.msra.mxu0 %v194
    %1588 = vmatprep.subr.mxu0 %v191
    %1589 = vmatpush2.msra.mxu0 %v190
    %1590 = vmatprep.subr.mxu0 %v187
    %1591 = vmatpush2.msra.mxu0 %v186
    %1592 = vmatprep.subr.mxu0 %v183
    %1593 = vmatpush2.msra.mxu0 %v182
    %1594 = vmatprep.subr.mxu0 %v179
    %1595 = vmatpush2.msra.mxu0 %v178
    %1596 = vmatprep.subr.mxu0 %v175
    %1597 = vmatpush2.msra.mxu0 %v174
    %1598 = vmatprep.subr.mxu0 %v171
    %1599 = vmatpush2.msra.mxu0 %v170
    %1600 = vmatprep.subr.mxu0 %v167
    %1601 = vmatpush2.msra.mxu0 %v166
    %1602 = vmatprep.subr.mxu0 %v163
    %1603 = vmatpush2.msra.mxu0 %v162
    %1604 = vmatprep.subr.mxu0 %v159
    %1605 = vmatpush2.msra.mxu0 %v158
    %1606 = vmatprep.mubr.f32.mxu0 %v1341
    %1607 = vmatmul.mubr.f32.gmra.mxu0 %v1541
    %v1608 = vpop.f32.mrf.mxu0
    %v1609 = vadd.f32 %v428, %v1608
    %v1610 = vpop.f32.mrf.mxu0
    %v1611 = vadd.f32 %v432, %v1610
    %1612 = vdwg.mxu0
    %1613 = vmatprep.subr.mxu0 %v157
    %1614 = vmatpush1.msra.mxu0 %v156
    %1615 = vmatprep.subr.mxu0 %v153
    %1616 = vmatpush1.msra.mxu0 %v152
    %1617 = vmatprep.subr.mxu0 %v149
    %1618 = vmatpush1.msra.mxu0 %v148
    %1619 = vmatprep.subr.mxu0 %v145
    %1620 = vmatpush1.msra.mxu0 %v144
    %1621 = vmatprep.subr.mxu0 %v141
    %1622 = vmatpush1.msra.mxu0 %v140
    %1623 = vmatprep.subr.mxu0 %v137
    %1624 = vmatpush1.msra.mxu0 %v136
    %1625 = vmatprep.subr.mxu0 %v133
    %1626 = vmatpush1.msra.mxu0 %v132
    %1627 = vmatprep.subr.mxu0 %v129
    %1628 = vmatpush1.msra.mxu0 %v128
    %1629 = vmatprep.subr.mxu0 %v125
    %1630 = vmatpush1.msra.mxu0 %v124
    %1631 = vmatprep.subr.mxu0 %v121
    %1632 = vmatpush1.msra.mxu0 %v120
    %1633 = vmatprep.subr.mxu0 %v117
    %1634 = vmatpush1.msra.mxu0 %v116
    %1635 = vmatprep.subr.mxu0 %v113
    %1636 = vmatpush1.msra.mxu0 %v112
    %1637 = vmatprep.subr.mxu0 %v109
    %1638 = vmatpush1.msra.mxu0 %v108
    %1639 = vmatprep.subr.mxu0 %v105
    %1640 = vmatpush1.msra.mxu0 %v104
    %1641 = vmatprep.subr.mxu0 %v101
    %1642 = vmatpush1.msra.mxu0 %v100
    %1643 = vmatprep.subr.mxu0 %v97
    %1644 = vmatpush1.msra.mxu0 %v96
    %1645 = vmatprep.subr.mxu0 %v221
    %1646 = vmatpush2.msra.mxu0 %v220
    %1647 = vmatprep.subr.mxu0 %v217
    %1648 = vmatpush2.msra.mxu0 %v216
    %1649 = vmatprep.subr.mxu0 %v213
    %1650 = vmatpush2.msra.mxu0 %v212
    %1651 = vmatprep.subr.mxu0 %v209
    %1652 = vmatpush2.msra.mxu0 %v208
    %1653 = vmatprep.subr.mxu0 %v205
    %1654 = vmatpush2.msra.mxu0 %v204
    %1655 = vmatprep.subr.mxu0 %v201
    %1656 = vmatpush2.msra.mxu0 %v200
    %1657 = vmatprep.subr.mxu0 %v197
    %1658 = vmatpush2.msra.mxu0 %v196
    %1659 = vmatprep.subr.mxu0 %v193
    %1660 = vmatpush2.msra.mxu0 %v192
    %1661 = vmatprep.subr.mxu0 %v189
    %1662 = vmatpush2.msra.mxu0 %v188
    %1663 = vmatprep.subr.mxu0 %v185
    %1664 = vmatpush2.msra.mxu0 %v184
    %1665 = vmatprep.subr.mxu0 %v181
    %1666 = vmatpush2.msra.mxu0 %v180
    %1667 = vmatprep.subr.mxu0 %v177
    %1668 = vmatpush2.msra.mxu0 %v176
    %1669 = vmatprep.subr.mxu0 %v173
    %1670 = vmatpush2.msra.mxu0 %v172
    %1671 = vmatprep.subr.mxu0 %v169
    %1672 = vmatpush2.msra.mxu0 %v168
    %1673 = vmatprep.subr.mxu0 %v165
    %1674 = vmatpush2.msra.mxu0 %v164
    %1675 = vmatprep.subr.mxu0 %v161
    %1676 = vmatpush2.msra.mxu0 %v160
    %1677 = vmatprep.mubr.f32.mxu0 %v1341
    %1678 = vmatmul.mubr.f32.gmra.mxu0 %v1541
    %v1679 = vpop.f32.mrf.mxu0
    %v1680 = vadd.f32 %v436, %v1679
    %v1681 = vpop.f32.mrf.mxu0
    %v1682 = vadd.f32 %v440, %v1681
    %1683 = vdwg.mxu0
    %v1684 = vxor.u32 %v1609, 2147483648
    %v1685 = vmul.f32 %v1684, 1.442695
    %v1686 = vpow.pop %v1685
    %v1687 = vadd.f32 %v1686, 1.0
    %v1688 = vrcp.pop %v1687
    %v1689 = vmul.f32 1.0, %v1688
    %v1690 = vxor.u32 %v1611, 2147483648
    %v1691 = vmul.f32 %v1690, 1.442695
    %v1692 = vpow.pop %v1691
    %v1693 = vadd.f32 %v1692, 1.0
    %v1694 = vrcp.pop %v1693
    %v1695 = vmul.f32 1.0, %v1694
    %v1696 = vtanh.pop %v1680
    %v1697 = vxor.u32 %v1682, 2147483648
    %v1698 = vmul.f32 %v1697, 1.442695
    %v1699 = vpow.pop %v1698
    %v1700 = vadd.f32 %v1699, 1.0
    %v1701 = vrcp.pop %v1700
    %v1702 = vmul.f32 1.0, %v1701
    %v1703 = vmul.f32 %v1695, %v1339
    %v1704 = vmul.f32 %v1689, %v1696
    %v1705 = vadd.f32 %v1703, %v1704
    %v1706 = vtanh.pop %v1705
    %v1707 = vmul.f32 %v1702, %v1706
    %s1708 = scalar_lea.vmem [#allocation6], 6
    %1709 = vst [vmem:[%s1708] sm:$0x3] %v1707
    %s1710 = scalar_lea.vmem %s0, 32
    %v1711 = vld [vmem:[%s1710] sm:$0xff]
    %1712 = vmatprep.subr.mxu0 %v91
    %1713 = vmatpush1.msra.mxu0 %v90
    %1714 = vmatprep.subr.mxu0 %v87
    %1715 = vmatpush1.msra.mxu0 %v86
    %1716 = vmatprep.subr.mxu0 %v83
    %1717 = vmatpush1.msra.mxu0 %v82
    %1718 = vmatprep.subr.mxu0 %v79
    %1719 = vmatpush1.msra.mxu0 %v78
    %1720 = vmatprep.subr.mxu0 %v75
    %1721 = vmatpush1.msra.mxu0 %v74
    %1722 = vmatprep.subr.mxu0 %v71
    %1723 = vmatpush1.msra.mxu0 %v70
    %1724 = vmatprep.subr.mxu0 %v67
    %1725 = vmatpush1.msra.mxu0 %v66
    %1726 = vmatprep.subr.mxu0 %v63
    %1727 = vmatpush1.msra.mxu0 %v62
    %1728 = vmatprep.subr.mxu0 %v59
    %1729 = vmatpush1.msra.mxu0 %v58
    %1730 = vmatprep.subr.mxu0 %v55
    %1731 = vmatpush1.msra.mxu0 %v54
    %1732 = vmatprep.subr.mxu0 %v51
    %1733 = vmatpush1.msra.mxu0 %v50
    %1734 = vmatprep.subr.mxu0 %v47
    %1735 = vmatpush1.msra.mxu0 %v46
    %1736 = vmatprep.subr.mxu0 %v43
    %1737 = vmatpush1.msra.mxu0 %v42
    %1738 = vmatprep.subr.mxu0 %v39
    %1739 = vmatpush1.msra.mxu0 %v38
    %1740 = vmatprep.subr.mxu0 %v35
    %1741 = vmatpush1.msra.mxu0 %v34
    %1742 = vmatprep.subr.mxu0 %v31
    %1743 = vmatpush1.msra.mxu0 %v30
    %1744 = vmatprep.subr.mxu0 0.0
    %1745 = vmatpush2.msra.mxu0 0.0
    %1746 = vmatprep.subr.mxu0 0.0
    %1747 = vmatpush2.msra.mxu0 0.0
    %1748 = vmatprep.subr.mxu0 0.0
    %1749 = vmatpush2.msra.mxu0 0.0
    %1750 = vmatprep.subr.mxu0 0.0
    %1751 = vmatpush2.msra.mxu0 0.0
    %1752 = vmatprep.subr.mxu0 0.0
    %1753 = vmatpush2.msra.mxu0 0.0
    %1754 = vmatprep.subr.mxu0 0.0
    %1755 = vmatpush2.msra.mxu0 0.0
    %1756 = vmatprep.subr.mxu0 0.0
    %1757 = vmatpush2.msra.mxu0 0.0
    %1758 = vmatprep.subr.mxu0 0.0
    %1759 = vmatpush2.msra.mxu0 0.0
    %1760 = vmatprep.subr.mxu0 0.0
    %1761 = vmatpush2.msra.mxu0 0.0
    %1762 = vmatprep.subr.mxu0 0.0
    %1763 = vmatpush2.msra.mxu0 0.0
    %1764 = vmatprep.subr.mxu0 0.0
    %1765 = vmatpush2.msra.mxu0 0.0
    %1766 = vmatprep.subr.mxu0 0.0
    %1767 = vmatpush2.msra.mxu0 0.0
    %1768 = vmatprep.subr.mxu0 0.0
    %1769 = vmatpush2.msra.mxu0 0.0
    %1770 = vmatprep.subr.mxu0 0.0
    %1771 = vmatpush2.msra.mxu0 0.0
    %1772 = vmatprep.subr.mxu0 0.0
    %1773 = vmatpush2.msra.mxu0 0.0
    %1774 = vmatprep.subr.mxu0 0.0
    %1775 = vmatpush2.msra.mxu0 0.0
    %1776 = vmatprep.mubr.f32.mxu0 0.0
    %1777 = vmatmul.mubr.f32.gmra.mxu0 %v1541
    %v1778 = vpop.f32.mrf.mxu0
    %v1779 = vadd.f32 0.0, %v1778
    %v1780 = vpop.f32.mrf.mxu0
    %v1781 = vadd.f32 0.0, %v1780
    %1782 = vdwg.mxu0
    %1783 = vmatprep.subr.mxu0 %v93
    %1784 = vmatpush1.msra.mxu0 %v92
    %1785 = vmatprep.subr.mxu0 %v89
    %1786 = vmatpush1.msra.mxu0 %v88
    %1787 = vmatprep.subr.mxu0 %v85
    %1788 = vmatpush1.msra.mxu0 %v84
    %1789 = vmatprep.subr.mxu0 %v81
    %1790 = vmatpush1.msra.mxu0 %v80
    %1791 = vmatprep.subr.mxu0 %v77
    %1792 = vmatpush1.msra.mxu0 %v76
    %1793 = vmatprep.subr.mxu0 %v73
    %1794 = vmatpush1.msra.mxu0 %v72
    %1795 = vmatprep.subr.mxu0 %v69
    %1796 = vmatpush1.msra.mxu0 %v68
    %1797 = vmatprep.subr.mxu0 %v65
    %1798 = vmatpush1.msra.mxu0 %v64
    %1799 = vmatprep.subr.mxu0 %v61
    %1800 = vmatpush1.msra.mxu0 %v60
    %1801 = vmatprep.subr.mxu0 %v57
    %1802 = vmatpush1.msra.mxu0 %v56
    %1803 = vmatprep.subr.mxu0 %v53
    %1804 = vmatpush1.msra.mxu0 %v52
    %1805 = vmatprep.subr.mxu0 %v49
    %1806 = vmatpush1.msra.mxu0 %v48
    %1807 = vmatprep.subr.mxu0 %v45
    %1808 = vmatpush1.msra.mxu0 %v44
    %1809 = vmatprep.subr.mxu0 %v41
    %1810 = vmatpush1.msra.mxu0 %v40
    %1811 = vmatprep.subr.mxu0 %v37
    %1812 = vmatpush1.msra.mxu0 %v36
    %1813 = vmatprep.subr.mxu0 %v33
    %1814 = vmatpush1.msra.mxu0 %v32
    %1815 = vmatprep.subr.mxu0 0.0
    %1816 = vmatpush2.msra.mxu0 0.0
    %1817 = vmatprep.subr.mxu0 0.0
    %1818 = vmatpush2.msra.mxu0 0.0
    %1819 = vmatprep.subr.mxu0 0.0
    %1820 = vmatpush2.msra.mxu0 0.0
    %1821 = vmatprep.subr.mxu0 0.0
    %1822 = vmatpush2.msra.mxu0 0.0
    %1823 = vmatprep.subr.mxu0 0.0
    %1824 = vmatpush2.msra.mxu0 0.0
    %1825 = vmatprep.subr.mxu0 0.0
    %1826 = vmatpush2.msra.mxu0 0.0
    %1827 = vmatprep.subr.mxu0 0.0
    %1828 = vmatpush2.msra.mxu0 0.0
    %1829 = vmatprep.subr.mxu0 0.0
    %1830 = vmatpush2.msra.mxu0 0.0
    %1831 = vmatprep.subr.mxu0 0.0
    %1832 = vmatpush2.msra.mxu0 0.0
    %1833 = vmatprep.subr.mxu0 0.0
    %1834 = vmatpush2.msra.mxu0 0.0
    %1835 = vmatprep.subr.mxu0 0.0
    %1836 = vmatpush2.msra.mxu0 0.0
    %1837 = vmatprep.subr.mxu0 0.0
    %1838 = vmatpush2.msra.mxu0 0.0
    %1839 = vmatprep.subr.mxu0 0.0
    %1840 = vmatpush2.msra.mxu0 0.0
    %1841 = vmatprep.subr.mxu0 0.0
    %1842 = vmatpush2.msra.mxu0 0.0
    %1843 = vmatprep.subr.mxu0 0.0
    %1844 = vmatpush2.msra.mxu0 0.0
    %1845 = vmatprep.subr.mxu0 0.0
    %1846 = vmatpush2.msra.mxu0 0.0
    %1847 = vmatprep.mubr.f32.mxu0 0.0
    %1848 = vmatmul.mubr.f32.gmra.mxu0 %v1541
    %v1849 = vpop.f32.mrf.mxu0
    %v1850 = vadd.f32 0.0, %v1849
    %v1851 = vpop.f32.mrf.mxu0
    %v1852 = vadd.f32 0.0, %v1851
    %1853 = vdwg.mxu0
    %v1858 = vcombine.low %v1779, %v1781
    %v1859 = vcombine.low %v1850, %v1852
    %v1861 = vunpack.c.l.s4 1983009808
    %v1862 = vunpack.c.0.s8 %v1861
    %v1863 = vlaneseq
    %v1864 = vshrl.u32 %v1863, 7
    %v1865 = vsub.s32 %v1862, %v1864
    %v1866 = vrot.slane %v1858, %v1865
    %v1868 = vunpack.c.l.s4 1983009808
    %v1869 = vunpack.c.0.s8 %v1868
    %v1870 = vlaneseq
    %v1871 = vshrl.u32 %v1870, 7
    %v1872 = vsub.s32 %v1869, %v1871
    %v1873 = vrot.slane %v1859, %v1872
    %v1874 = vcombine.low %v1866, %v1873
    %v1876 = vadd.f32 %v1711, %v1874
    %v1877 = vxor.u32 %v1876, 2147483648
    %v1878 = vmul.f32 %v1877, 1.442695
    %v1879 = vpow.pop %v1878
    %v1880 = vadd.f32 %v1879, 1.0
    %v1881 = vrcp.pop %v1880
    %v1882 = vmul.f32 1.0, %v1881
    %v1884 = vrot.slane %v1876, 2
    %v1886 = vxor.u32 %v1884, 2147483648
    %v1887 = vmul.f32 %v1886, 1.442695
    %v1888 = vpow.pop %v1887
    %v1889 = vadd.f32 %v1888, 1.0
    %v1890 = vrcp.pop %v1889
    %v1891 = vmul.f32 1.0, %v1890
    %v1892 = vrot.slane %v1876, 4
    %v1894 = vtanh.pop %v1892
    %v1895 = vrot.slane %v1876, 6
    %v1897 = vxor.u32 %v1895, 2147483648
    %v1898 = vmul.f32 %v1897, 1.442695
    %v1899 = vpow.pop %v1898
    %v1900 = vadd.f32 %v1899, 1.0
    %v1901 = vrcp.pop %v1900
    %v1902 = vmul.f32 1.0, %v1901
    %v1903 = vmul.f32 %v1891, %v1539
    %v1904 = vmul.f32 %v1882, %v1894
    %v1905 = vadd.f32 %v1903, %v1904
    %v1906 = vtanh.pop %v1905
    %v1907 = vmul.f32 %v1902, %v1906
    %1908 = vmatprep.subr.mxu0 %v155
    %1909 = vmatpush1.msra.mxu0 %v154
    %1910 = vmatprep.subr.mxu0 %v151
    %1911 = vmatpush1.msra.mxu0 %v150
    %1912 = vmatprep.subr.mxu0 %v147
    %1913 = vmatpush1.msra.mxu0 %v146
    %1914 = vmatprep.subr.mxu0 %v143
    %1915 = vmatpush1.msra.mxu0 %v142
    %1916 = vmatprep.subr.mxu0 %v139
    %1917 = vmatpush1.msra.mxu0 %v138
    %1918 = vmatprep.subr.mxu0 %v135
    %1919 = vmatpush1.msra.mxu0 %v134
    %1920 = vmatprep.subr.mxu0 %v131
    %1921 = vmatpush1.msra.mxu0 %v130
    %1922 = vmatprep.subr.mxu0 %v127
    %1923 = vmatpush1.msra.mxu0 %v126
    %1924 = vmatprep.subr.mxu0 %v123
    %1925 = vmatpush1.msra.mxu0 %v122
    %1926 = vmatprep.subr.mxu0 %v119
    %1927 = vmatpush1.msra.mxu0 %v118
    %1928 = vmatprep.subr.mxu0 %v115
    %1929 = vmatpush1.msra.mxu0 %v114
    %1930 = vmatprep.subr.mxu0 %v111
    %1931 = vmatpush1.msra.mxu0 %v110
    %1932 = vmatprep.subr.mxu0 %v107
    %1933 = vmatpush1.msra.mxu0 %v106
    %1934 = vmatprep.subr.mxu0 %v103
    %1935 = vmatpush1.msra.mxu0 %v102
    %1936 = vmatprep.subr.mxu0 %v99
    %1937 = vmatpush1.msra.mxu0 %v98
    %1938 = vmatprep.subr.mxu0 %v95
    %1939 = vmatpush1.msra.mxu0 %v94
    %1940 = vmatprep.subr.mxu0 %v219
    %1941 = vmatpush2.msra.mxu0 %v218
    %1942 = vmatprep.subr.mxu0 %v215
    %1943 = vmatpush2.msra.mxu0 %v214
    %1944 = vmatprep.subr.mxu0 %v211
    %1945 = vmatpush2.msra.mxu0 %v210
    %1946 = vmatprep.subr.mxu0 %v207
    %1947 = vmatpush2.msra.mxu0 %v206
    %1948 = vmatprep.subr.mxu0 %v203
    %1949 = vmatpush2.msra.mxu0 %v202
    %1950 = vmatprep.subr.mxu0 %v199
    %1951 = vmatpush2.msra.mxu0 %v198
    %1952 = vmatprep.subr.mxu0 %v195
    %1953 = vmatpush2.msra.mxu0 %v194
    %1954 = vmatprep.subr.mxu0 %v191
    %1955 = vmatpush2.msra.mxu0 %v190
    %1956 = vmatprep.subr.mxu0 %v187
    %1957 = vmatpush2.msra.mxu0 %v186
    %1958 = vmatprep.subr.mxu0 %v183
    %1959 = vmatpush2.msra.mxu0 %v182
    %1960 = vmatprep.subr.mxu0 %v179
    %1961 = vmatpush2.msra.mxu0 %v178
    %1962 = vmatprep.subr.mxu0 %v175
    %1963 = vmatpush2.msra.mxu0 %v174
    %1964 = vmatprep.subr.mxu0 %v171
    %1965 = vmatpush2.msra.mxu0 %v170
    %1966 = vmatprep.subr.mxu0 %v167
    %1967 = vmatpush2.msra.mxu0 %v166
    %1968 = vmatprep.subr.mxu0 %v163
    %1969 = vmatpush2.msra.mxu0 %v162
    %1970 = vmatprep.subr.mxu0 %v159
    %1971 = vmatpush2.msra.mxu0 %v158
    %1972 = vmatprep.mubr.f32.mxu0 %v1707
    %1973 = vmatmul.mubr.f32.gmra.mxu0 %v1907
    %v1974 = vpop.f32.mrf.mxu0
    %v1975 = vadd.f32 %v428, %v1974
    %v1976 = vpop.f32.mrf.mxu0
    %v1977 = vadd.f32 %v432, %v1976
    %1978 = vdwg.mxu0
    %1979 = vmatprep.subr.mxu0 %v157
    %1980 = vmatpush1.msra.mxu0 %v156
    %1981 = vmatprep.subr.mxu0 %v153
    %1982 = vmatpush1.msra.mxu0 %v152
    %1983 = vmatprep.subr.mxu0 %v149
    %1984 = vmatpush1.msra.mxu0 %v148
    %1985 = vmatprep.subr.mxu0 %v145
    %1986 = vmatpush1.msra.mxu0 %v144
    %1987 = vmatprep.subr.mxu0 %v141
    %1988 = vmatpush1.msra.mxu0 %v140
    %1989 = vmatprep.subr.mxu0 %v137
    %1990 = vmatpush1.msra.mxu0 %v136
    %1991 = vmatprep.subr.mxu0 %v133
    %1992 = vmatpush1.msra.mxu0 %v132
    %1993 = vmatprep.subr.mxu0 %v129
    %1994 = vmatpush1.msra.mxu0 %v128
    %1995 = vmatprep.subr.mxu0 %v125
    %1996 = vmatpush1.msra.mxu0 %v124
    %1997 = vmatprep.subr.mxu0 %v121
    %1998 = vmatpush1.msra.mxu0 %v120
    %1999 = vmatprep.subr.mxu0 %v117
    %2000 = vmatpush1.msra.mxu0 %v116
    %2001 = vmatprep.subr.mxu0 %v113
    %2002 = vmatpush1.msra.mxu0 %v112
    %2003 = vmatprep.subr.mxu0 %v109
    %2004 = vmatpush1.msra.mxu0 %v108
    %2005 = vmatprep.subr.mxu0 %v105
    %2006 = vmatpush1.msra.mxu0 %v104
    %2007 = vmatprep.subr.mxu0 %v101
    %2008 = vmatpush1.msra.mxu0 %v100
    %2009 = vmatprep.subr.mxu0 %v97
    %2010 = vmatpush1.msra.mxu0 %v96
    %2011 = vmatprep.subr.mxu0 %v221
    %2012 = vmatpush2.msra.mxu0 %v220
    %2013 = vmatprep.subr.mxu0 %v217
    %2014 = vmatpush2.msra.mxu0 %v216
    %2015 = vmatprep.subr.mxu0 %v213
    %2016 = vmatpush2.msra.mxu0 %v212
    %2017 = vmatprep.subr.mxu0 %v209
    %2018 = vmatpush2.msra.mxu0 %v208
    %2019 = vmatprep.subr.mxu0 %v205
    %2020 = vmatpush2.msra.mxu0 %v204
    %2021 = vmatprep.subr.mxu0 %v201
    %2022 = vmatpush2.msra.mxu0 %v200
    %2023 = vmatprep.subr.mxu0 %v197
    %2024 = vmatpush2.msra.mxu0 %v196
    %2025 = vmatprep.subr.mxu0 %v193
    %2026 = vmatpush2.msra.mxu0 %v192
    %2027 = vmatprep.subr.mxu0 %v189
    %2028 = vmatpush2.msra.mxu0 %v188
    %2029 = vmatprep.subr.mxu0 %v185
    %2030 = vmatpush2.msra.mxu0 %v184
    %2031 = vmatprep.subr.mxu0 %v181
    %2032 = vmatpush2.msra.mxu0 %v180
    %2033 = vmatprep.subr.mxu0 %v177
    %2034 = vmatpush2.msra.mxu0 %v176
    %2035 = vmatprep.subr.mxu0 %v173
    %2036 = vmatpush2.msra.mxu0 %v172
    %2037 = vmatprep.subr.mxu0 %v169
    %2038 = vmatpush2.msra.mxu0 %v168
    %2039 = vmatprep.subr.mxu0 %v165
    %2040 = vmatpush2.msra.mxu0 %v164
    %2041 = vmatprep.subr.mxu0 %v161
    %2042 = vmatpush2.msra.mxu0 %v160
    %2043 = vmatprep.mubr.f32.mxu0 %v1707
    %2044 = vmatmul.mubr.f32.gmra.mxu0 %v1907
    %v2045 = vpop.f32.mrf.mxu0
    %v2046 = vadd.f32 %v436, %v2045
    %v2047 = vpop.f32.mrf.mxu0
    %v2048 = vadd.f32 %v440, %v2047
    %2049 = vdwg.mxu0
    %v2050 = vxor.u32 %v1975, 2147483648
    %v2051 = vmul.f32 %v2050, 1.442695
    %v2052 = vpow.pop %v2051
    %v2053 = vadd.f32 %v2052, 1.0
    %v2054 = vrcp.pop %v2053
    %v2055 = vmul.f32 1.0, %v2054
    %v2056 = vxor.u32 %v1977, 2147483648
    %v2057 = vmul.f32 %v2056, 1.442695
    %v2058 = vpow.pop %v2057
    %v2059 = vadd.f32 %v2058, 1.0
    %v2060 = vrcp.pop %v2059
    %v2061 = vmul.f32 1.0, %v2060
    %v2062 = vtanh.pop %v2046
    %v2063 = vxor.u32 %v2048, 2147483648
    %v2064 = vmul.f32 %v2063, 1.442695
    %v2065 = vpow.pop %v2064
    %v2066 = vadd.f32 %v2065, 1.0
    %v2067 = vrcp.pop %v2066
    %v2068 = vmul.f32 1.0, %v2067
    %v2069 = vmul.f32 %v2061, %v1705
    %v2070 = vmul.f32 %v2055, %v2062
    %v2071 = vadd.f32 %v2069, %v2070
    %v2072 = vtanh.pop %v2071
    %v2073 = vmul.f32 %v2068, %v2072
    %s2074 = scalar_lea.vmem [#allocation6], 8
    %2075 = vst [vmem:[%s2074] sm:$0x3] %v2073
    %s2076 = scalar_lea.vmem %s0, 40
    %v2077 = vld [vmem:[%s2076] sm:$0xff]
    %2078 = vmatprep.subr.mxu0 %v91
    %2079 = vmatpush1.msra.mxu0 %v90
    %2080 = vmatprep.subr.mxu0 %v87
    %2081 = vmatpush1.msra.mxu0 %v86
    %2082 = vmatprep.subr.mxu0 %v83
    %2083 = vmatpush1.msra.mxu0 %v82
    %2084 = vmatprep.subr.mxu0 %v79
    %2085 = vmatpush1.msra.mxu0 %v78
    %2086 = vmatprep.subr.mxu0 %v75
    %2087 = vmatpush1.msra.mxu0 %v74
    %2088 = vmatprep.subr.mxu0 %v71
    %2089 = vmatpush1.msra.mxu0 %v70
    %2090 = vmatprep.subr.mxu0 %v67
    %2091 = vmatpush1.msra.mxu0 %v66
    %2092 = vmatprep.subr.mxu0 %v63
    %2093 = vmatpush1.msra.mxu0 %v62
    %2094 = vmatprep.subr.mxu0 %v59
    %2095 = vmatpush1.msra.mxu0 %v58
    %2096 = vmatprep.subr.mxu0 %v55
    %2097 = vmatpush1.msra.mxu0 %v54
    %2098 = vmatprep.subr.mxu0 %v51
    %2099 = vmatpush1.msra.mxu0 %v50
    %2100 = vmatprep.subr.mxu0 %v47
    %2101 = vmatpush1.msra.mxu0 %v46
    %2102 = vmatprep.subr.mxu0 %v43
    %2103 = vmatpush1.msra.mxu0 %v42
    %2104 = vmatprep.subr.mxu0 %v39
    %2105 = vmatpush1.msra.mxu0 %v38
    %2106 = vmatprep.subr.mxu0 %v35
    %2107 = vmatpush1.msra.mxu0 %v34
    %2108 = vmatprep.subr.mxu0 %v31
    %2109 = vmatpush1.msra.mxu0 %v30
    %2110 = vmatprep.subr.mxu0 0.0
    %2111 = vmatpush2.msra.mxu0 0.0
    %2112 = vmatprep.subr.mxu0 0.0
    %2113 = vmatpush2.msra.mxu0 0.0
    %2114 = vmatprep.subr.mxu0 0.0
    %2115 = vmatpush2.msra.mxu0 0.0
    %2116 = vmatprep.subr.mxu0 0.0
    %2117 = vmatpush2.msra.mxu0 0.0
    %2118 = vmatprep.subr.mxu0 0.0
    %2119 = vmatpush2.msra.mxu0 0.0
    %2120 = vmatprep.subr.mxu0 0.0
    %2121 = vmatpush2.msra.mxu0 0.0
    %2122 = vmatprep.subr.mxu0 0.0
    %2123 = vmatpush2.msra.mxu0 0.0
    %2124 = vmatprep.subr.mxu0 0.0
    %2125 = vmatpush2.msra.mxu0 0.0
    %2126 = vmatprep.subr.mxu0 0.0
    %2127 = vmatpush2.msra.mxu0 0.0
    %2128 = vmatprep.subr.mxu0 0.0
    %2129 = vmatpush2.msra.mxu0 0.0
    %2130 = vmatprep.subr.mxu0 0.0
    %2131 = vmatpush2.msra.mxu0 0.0
    %2132 = vmatprep.subr.mxu0 0.0
    %2133 = vmatpush2.msra.mxu0 0.0
    %2134 = vmatprep.subr.mxu0 0.0
    %2135 = vmatpush2.msra.mxu0 0.0
    %2136 = vmatprep.subr.mxu0 0.0
    %2137 = vmatpush2.msra.mxu0 0.0
    %2138 = vmatprep.subr.mxu0 0.0
    %2139 = vmatpush2.msra.mxu0 0.0
    %2140 = vmatprep.subr.mxu0 0.0
    %2141 = vmatpush2.msra.mxu0 0.0
    %2142 = vmatprep.mubr.f32.mxu0 0.0
    %2143 = vmatmul.mubr.f32.gmra.mxu0 %v1907
    %v2144 = vpop.f32.mrf.mxu0
    %v2145 = vadd.f32 0.0, %v2144
    %v2146 = vpop.f32.mrf.mxu0
    %v2147 = vadd.f32 0.0, %v2146
    %2148 = vdwg.mxu0
    %2149 = vmatprep.subr.mxu0 %v93
    %2150 = vmatpush1.msra.mxu0 %v92
    %2151 = vmatprep.subr.mxu0 %v89
    %2152 = vmatpush1.msra.mxu0 %v88
    %2153 = vmatprep.subr.mxu0 %v85
    %2154 = vmatpush1.msra.mxu0 %v84
    %2155 = vmatprep.subr.mxu0 %v81
    %2156 = vmatpush1.msra.mxu0 %v80
    %2157 = vmatprep.subr.mxu0 %v77
    %2158 = vmatpush1.msra.mxu0 %v76
    %2159 = vmatprep.subr.mxu0 %v73
    %2160 = vmatpush1.msra.mxu0 %v72
    %2161 = vmatprep.subr.mxu0 %v69
    %2162 = vmatpush1.msra.mxu0 %v68
    %2163 = vmatprep.subr.mxu0 %v65
    %2164 = vmatpush1.msra.mxu0 %v64
    %2165 = vmatprep.subr.mxu0 %v61
    %2166 = vmatpush1.msra.mxu0 %v60
    %2167 = vmatprep.subr.mxu0 %v57
    %2168 = vmatpush1.msra.mxu0 %v56
    %2169 = vmatprep.subr.mxu0 %v53
    %2170 = vmatpush1.msra.mxu0 %v52
    %2171 = vmatprep.subr.mxu0 %v49
    %2172 = vmatpush1.msra.mxu0 %v48
    %2173 = vmatprep.subr.mxu0 %v45
    %2174 = vmatpush1.msra.mxu0 %v44
    %2175 = vmatprep.subr.mxu0 %v41
    %2176 = vmatpush1.msra.mxu0 %v40
    %2177 = vmatprep.subr.mxu0 %v37
    %2178 = vmatpush1.msra.mxu0 %v36
    %2179 = vmatprep.subr.mxu0 %v33
    %2180 = vmatpush1.msra.mxu0 %v32
    %2181 = vmatprep.subr.mxu0 0.0
    %2182 = vmatpush2.msra.mxu0 0.0
    %2183 = vmatprep.subr.mxu0 0.0
    %2184 = vmatpush2.msra.mxu0 0.0
    %2185 = vmatprep.subr.mxu0 0.0
    %2186 = vmatpush2.msra.mxu0 0.0
    %2187 = vmatprep.subr.mxu0 0.0
    %2188 = vmatpush2.msra.mxu0 0.0
    %2189 = vmatprep.subr.mxu0 0.0
    %2190 = vmatpush2.msra.mxu0 0.0
    %2191 = vmatprep.subr.mxu0 0.0
    %2192 = vmatpush2.msra.mxu0 0.0
    %2193 = vmatprep.subr.mxu0 0.0
    %2194 = vmatpush2.msra.mxu0 0.0
    %2195 = vmatprep.subr.mxu0 0.0
    %2196 = vmatpush2.msra.mxu0 0.0
    %2197 = vmatprep.subr.mxu0 0.0
    %2198 = vmatpush2.msra.mxu0 0.0
    %2199 = vmatprep.subr.mxu0 0.0
    %2200 = vmatpush2.msra.mxu0 0.0
    %2201 = vmatprep.subr.mxu0 0.0
    %2202 = vmatpush2.msra.mxu0 0.0
    %2203 = vmatprep.subr.mxu0 0.0
    %2204 = vmatpush2.msra.mxu0 0.0
    %2205 = vmatprep.subr.mxu0 0.0
    %2206 = vmatpush2.msra.mxu0 0.0
    %2207 = vmatprep.subr.mxu0 0.0
    %2208 = vmatpush2.msra.mxu0 0.0
    %2209 = vmatprep.subr.mxu0 0.0
    %2210 = vmatpush2.msra.mxu0 0.0
    %2211 = vmatprep.subr.mxu0 0.0
    %2212 = vmatpush2.msra.mxu0 0.0
    %2213 = vmatprep.mubr.f32.mxu0 0.0
    %2214 = vmatmul.mubr.f32.gmra.mxu0 %v1907
    %v2215 = vpop.f32.mrf.mxu0
    %v2216 = vadd.f32 0.0, %v2215
    %v2217 = vpop.f32.mrf.mxu0
    %v2218 = vadd.f32 0.0, %v2217
    %2219 = vdwg.mxu0
    %v2224 = vcombine.low %v2145, %v2147
    %v2225 = vcombine.low %v2216, %v2218
    %v2227 = vunpack.c.l.s4 1983009808
    %v2228 = vunpack.c.0.s8 %v2227
    %v2229 = vlaneseq
    %v2230 = vshrl.u32 %v2229, 7
    %v2231 = vsub.s32 %v2228, %v2230
    %v2232 = vrot.slane %v2224, %v2231
    %v2234 = vunpack.c.l.s4 1983009808
    %v2235 = vunpack.c.0.s8 %v2234
    %v2236 = vlaneseq
    %v2237 = vshrl.u32 %v2236, 7
    %v2238 = vsub.s32 %v2235, %v2237
    %v2239 = vrot.slane %v2225, %v2238
    %v2240 = vcombine.low %v2232, %v2239
    %v2242 = vadd.f32 %v2077, %v2240
    %v2243 = vxor.u32 %v2242, 2147483648
    %v2244 = vmul.f32 %v2243, 1.442695
    %v2245 = vpow.pop %v2244
    %v2246 = vadd.f32 %v2245, 1.0
    %v2247 = vrcp.pop %v2246
    %v2248 = vmul.f32 1.0, %v2247
    %v2250 = vrot.slane %v2242, 2
    %v2252 = vxor.u32 %v2250, 2147483648
    %v2253 = vmul.f32 %v2252, 1.442695
    %v2254 = vpow.pop %v2253
    %v2255 = vadd.f32 %v2254, 1.0
    %v2256 = vrcp.pop %v2255
    %v2257 = vmul.f32 1.0, %v2256
    %v2258 = vrot.slane %v2242, 4
    %v2260 = vtanh.pop %v2258
    %v2261 = vrot.slane %v2242, 6
    %v2263 = vxor.u32 %v2261, 2147483648
    %v2264 = vmul.f32 %v2263, 1.442695
    %v2265 = vpow.pop %v2264
    %v2266 = vadd.f32 %v2265, 1.0
    %v2267 = vrcp.pop %v2266
    %v2268 = vmul.f32 1.0, %v2267
    %v2269 = vmul.f32 %v2257, %v1905
    %v2270 = vmul.f32 %v2248, %v2260
    %v2271 = vadd.f32 %v2269, %v2270
    %v2272 = vtanh.pop %v2271
    %v2273 = vmul.f32 %v2268, %v2272
    %2274 = vmatprep.subr.mxu0 %v155
    %2275 = vmatpush1.msra.mxu0 %v154
    %2276 = vmatprep.subr.mxu0 %v151
    %2277 = vmatpush1.msra.mxu0 %v150
    %2278 = vmatprep.subr.mxu0 %v147
    %2279 = vmatpush1.msra.mxu0 %v146
    %2280 = vmatprep.subr.mxu0 %v143
    %2281 = vmatpush1.msra.mxu0 %v142
    %2282 = vmatprep.subr.mxu0 %v139
    %2283 = vmatpush1.msra.mxu0 %v138
    %2284 = vmatprep.subr.mxu0 %v135
    %2285 = vmatpush1.msra.mxu0 %v134
    %2286 = vmatprep.subr.mxu0 %v131
    %2287 = vmatpush1.msra.mxu0 %v130
    %2288 = vmatprep.subr.mxu0 %v127
    %2289 = vmatpush1.msra.mxu0 %v126
    %2290 = vmatprep.subr.mxu0 %v123
    %2291 = vmatpush1.msra.mxu0 %v122
    %2292 = vmatprep.subr.mxu0 %v119
    %2293 = vmatpush1.msra.mxu0 %v118
    %2294 = vmatprep.subr.mxu0 %v115
    %2295 = vmatpush1.msra.mxu0 %v114
    %2296 = vmatprep.subr.mxu0 %v111
    %2297 = vmatpush1.msra.mxu0 %v110
    %2298 = vmatprep.subr.mxu0 %v107
    %2299 = vmatpush1.msra.mxu0 %v106
    %2300 = vmatprep.subr.mxu0 %v103
    %2301 = vmatpush1.msra.mxu0 %v102
    %2302 = vmatprep.subr.mxu0 %v99
    %2303 = vmatpush1.msra.mxu0 %v98
    %2304 = vmatprep.subr.mxu0 %v95
    %2305 = vmatpush1.msra.mxu0 %v94
    %2306 = vmatprep.subr.mxu0 %v219
    %2307 = vmatpush2.msra.mxu0 %v218
    %2308 = vmatprep.subr.mxu0 %v215
    %2309 = vmatpush2.msra.mxu0 %v214
    %2310 = vmatprep.subr.mxu0 %v211
    %2311 = vmatpush2.msra.mxu0 %v210
    %2312 = vmatprep.subr.mxu0 %v207
    %2313 = vmatpush2.msra.mxu0 %v206
    %2314 = vmatprep.subr.mxu0 %v203
    %2315 = vmatpush2.msra.mxu0 %v202
    %2316 = vmatprep.subr.mxu0 %v199
    %2317 = vmatpush2.msra.mxu0 %v198
    %2318 = vmatprep.subr.mxu0 %v195
    %2319 = vmatpush2.msra.mxu0 %v194
    %2320 = vmatprep.subr.mxu0 %v191
    %2321 = vmatpush2.msra.mxu0 %v190
    %2322 = vmatprep.subr.mxu0 %v187
    %2323 = vmatpush2.msra.mxu0 %v186
    %2324 = vmatprep.subr.mxu0 %v183
    %2325 = vmatpush2.msra.mxu0 %v182
    %2326 = vmatprep.subr.mxu0 %v179
    %2327 = vmatpush2.msra.mxu0 %v178
    %2328 = vmatprep.subr.mxu0 %v175
    %2329 = vmatpush2.msra.mxu0 %v174
    %2330 = vmatprep.subr.mxu0 %v171
    %2331 = vmatpush2.msra.mxu0 %v170
    %2332 = vmatprep.subr.mxu0 %v167
    %2333 = vmatpush2.msra.mxu0 %v166
    %2334 = vmatprep.subr.mxu0 %v163
    %2335 = vmatpush2.msra.mxu0 %v162
    %2336 = vmatprep.subr.mxu0 %v159
    %2337 = vmatpush2.msra.mxu0 %v158
    %2338 = vmatprep.mubr.f32.mxu0 %v2073
    %2339 = vmatmul.mubr.f32.gmra.mxu0 %v2273
    %v2340 = vpop.f32.mrf.mxu0
    %v2341 = vadd.f32 %v428, %v2340
    %v2342 = vpop.f32.mrf.mxu0
    %v2343 = vadd.f32 %v432, %v2342
    %2344 = vdwg.mxu0
    %2345 = vmatprep.subr.mxu0 %v157
    %2346 = vmatpush1.msra.mxu0 %v156
    %2347 = vmatprep.subr.mxu0 %v153
    %2348 = vmatpush1.msra.mxu0 %v152
    %2349 = vmatprep.subr.mxu0 %v149
    %2350 = vmatpush1.msra.mxu0 %v148
    %2351 = vmatprep.subr.mxu0 %v145
    %2352 = vmatpush1.msra.mxu0 %v144
    %2353 = vmatprep.subr.mxu0 %v141
    %2354 = vmatpush1.msra.mxu0 %v140
    %2355 = vmatprep.subr.mxu0 %v137
    %2356 = vmatpush1.msra.mxu0 %v136
    %2357 = vmatprep.subr.mxu0 %v133
    %2358 = vmatpush1.msra.mxu0 %v132
    %2359 = vmatprep.subr.mxu0 %v129
    %2360 = vmatpush1.msra.mxu0 %v128
    %2361 = vmatprep.subr.mxu0 %v125
    %2362 = vmatpush1.msra.mxu0 %v124
    %2363 = vmatprep.subr.mxu0 %v121
    %2364 = vmatpush1.msra.mxu0 %v120
    %2365 = vmatprep.subr.mxu0 %v117
    %2366 = vmatpush1.msra.mxu0 %v116
    %2367 = vmatprep.subr.mxu0 %v113
    %2368 = vmatpush1.msra.mxu0 %v112
    %2369 = vmatprep.subr.mxu0 %v109
    %2370 = vmatpush1.msra.mxu0 %v108
    %2371 = vmatprep.subr.mxu0 %v105
    %2372 = vmatpush1.msra.mxu0 %v104
    %2373 = vmatprep.subr.mxu0 %v101
    %2374 = vmatpush1.msra.mxu0 %v100
    %2375 = vmatprep.subr.mxu0 %v97
    %2376 = vmatpush1.msra.mxu0 %v96
    %2377 = vmatprep.subr.mxu0 %v221
    %2378 = vmatpush2.msra.mxu0 %v220
    %2379 = vmatprep.subr.mxu0 %v217
    %2380 = vmatpush2.msra.mxu0 %v216
    %2381 = vmatprep.subr.mxu0 %v213
    %2382 = vmatpush2.msra.mxu0 %v212
    %2383 = vmatprep.subr.mxu0 %v209
    %2384 = vmatpush2.msra.mxu0 %v208
    %2385 = vmatprep.subr.mxu0 %v205
    %2386 = vmatpush2.msra.mxu0 %v204
    %2387 = vmatprep.subr.mxu0 %v201
    %2388 = vmatpush2.msra.mxu0 %v200
    %2389 = vmatprep.subr.mxu0 %v197
    %2390 = vmatpush2.msra.mxu0 %v196
    %2391 = vmatprep.subr.mxu0 %v193
    %2392 = vmatpush2.msra.mxu0 %v192
    %2393 = vmatprep.subr.mxu0 %v189
    %2394 = vmatpush2.msra.mxu0 %v188
    %2395 = vmatprep.subr.mxu0 %v185
    %2396 = vmatpush2.msra.mxu0 %v184
    %2397 = vmatprep.subr.mxu0 %v181
    %2398 = vmatpush2.msra.mxu0 %v180
    %2399 = vmatprep.subr.mxu0 %v177
    %2400 = vmatpush2.msra.mxu0 %v176
    %2401 = vmatprep.subr.mxu0 %v173
    %2402 = vmatpush2.msra.mxu0 %v172
    %2403 = vmatprep.subr.mxu0 %v169
    %2404 = vmatpush2.msra.mxu0 %v168
    %2405 = vmatprep.subr.mxu0 %v165
    %2406 = vmatpush2.msra.mxu0 %v164
    %2407 = vmatprep.subr.mxu0 %v161
    %2408 = vmatpush2.msra.mxu0 %v160
    %2409 = vmatprep.mubr.f32.mxu0 %v2073
    %2410 = vmatmul.mubr.f32.gmra.mxu0 %v2273
    %v2411 = vpop.f32.mrf.mxu0
    %v2412 = vadd.f32 %v436, %v2411
    %v2413 = vpop.f32.mrf.mxu0
    %v2414 = vadd.f32 %v440, %v2413
    %2415 = vdwg.mxu0
    %v2416 = vxor.u32 %v2341, 2147483648
    %v2417 = vmul.f32 %v2416, 1.442695
    %v2418 = vpow.pop %v2417
    %v2419 = vadd.f32 %v2418, 1.0
    %v2420 = vrcp.pop %v2419
    %v2421 = vmul.f32 1.0, %v2420
    %v2422 = vxor.u32 %v2343, 2147483648
    %v2423 = vmul.f32 %v2422, 1.442695
    %v2424 = vpow.pop %v2423
    %v2425 = vadd.f32 %v2424, 1.0
    %v2426 = vrcp.pop %v2425
    %v2427 = vmul.f32 1.0, %v2426
    %v2428 = vtanh.pop %v2412
    %v2429 = vxor.u32 %v2414, 2147483648
    %v2430 = vmul.f32 %v2429, 1.442695
    %v2431 = vpow.pop %v2430
    %v2432 = vadd.f32 %v2431, 1.0
    %v2433 = vrcp.pop %v2432
    %v2434 = vmul.f32 1.0, %v2433
    %v2435 = vmul.f32 %v2427, %v2071
    %v2436 = vmul.f32 %v2421, %v2428
    %v2437 = vadd.f32 %v2435, %v2436
    %v2438 = vtanh.pop %v2437
    %v2439 = vmul.f32 %v2434, %v2438
    %s2440 = scalar_lea.vmem [#allocation6], 10
    %2441 = vst [vmem:[%s2440] sm:$0x3] %v2439
    %s2442 = scalar_lea.vmem %s0, 48
    %v2443 = vld [vmem:[%s2442] sm:$0xff]
    %2444 = vmatprep.subr.mxu0 %v91
    %2445 = vmatpush1.msra.mxu0 %v90
    %2446 = vmatprep.subr.mxu0 %v87
    %2447 = vmatpush1.msra.mxu0 %v86
    %2448 = vmatprep.subr.mxu0 %v83
    %2449 = vmatpush1.msra.mxu0 %v82
    %2450 = vmatprep.subr.mxu0 %v79
    %2451 = vmatpush1.msra.mxu0 %v78
    %2452 = vmatprep.subr.mxu0 %v75
    %2453 = vmatpush1.msra.mxu0 %v74
    %2454 = vmatprep.subr.mxu0 %v71
    %2455 = vmatpush1.msra.mxu0 %v70
    %2456 = vmatprep.subr.mxu0 %v67
    %2457 = vmatpush1.msra.mxu0 %v66
    %2458 = vmatprep.subr.mxu0 %v63
    %2459 = vmatpush1.msra.mxu0 %v62
    %2460 = vmatprep.subr.mxu0 %v59
    %2461 = vmatpush1.msra.mxu0 %v58
    %2462 = vmatprep.subr.mxu0 %v55
    %2463 = vmatpush1.msra.mxu0 %v54
    %2464 = vmatprep.subr.mxu0 %v51
    %2465 = vmatpush1.msra.mxu0 %v50
    %2466 = vmatprep.subr.mxu0 %v47
    %2467 = vmatpush1.msra.mxu0 %v46
    %2468 = vmatprep.subr.mxu0 %v43
    %2469 = vmatpush1.msra.mxu0 %v42
    %2470 = vmatprep.subr.mxu0 %v39
    %2471 = vmatpush1.msra.mxu0 %v38
    %2472 = vmatprep.subr.mxu0 %v35
    %2473 = vmatpush1.msra.mxu0 %v34
    %2474 = vmatprep.subr.mxu0 %v31
    %2475 = vmatpush1.msra.mxu0 %v30
    %2476 = vmatprep.subr.mxu0 0.0
    %2477 = vmatpush2.msra.mxu0 0.0
    %2478 = vmatprep.subr.mxu0 0.0
    %2479 = vmatpush2.msra.mxu0 0.0
    %2480 = vmatprep.subr.mxu0 0.0
    %2481 = vmatpush2.msra.mxu0 0.0
    %2482 = vmatprep.subr.mxu0 0.0
    %2483 = vmatpush2.msra.mxu0 0.0
    %2484 = vmatprep.subr.mxu0 0.0
    %2485 = vmatpush2.msra.mxu0 0.0
    %2486 = vmatprep.subr.mxu0 0.0
    %2487 = vmatpush2.msra.mxu0 0.0
    %2488 = vmatprep.subr.mxu0 0.0
    %2489 = vmatpush2.msra.mxu0 0.0
    %2490 = vmatprep.subr.mxu0 0.0
    %2491 = vmatpush2.msra.mxu0 0.0
    %2492 = vmatprep.subr.mxu0 0.0
    %2493 = vmatpush2.msra.mxu0 0.0
    %2494 = vmatprep.subr.mxu0 0.0
    %2495 = vmatpush2.msra.mxu0 0.0
    %2496 = vmatprep.subr.mxu0 0.0
    %2497 = vmatpush2.msra.mxu0 0.0
    %2498 = vmatprep.subr.mxu0 0.0
    %2499 = vmatpush2.msra.mxu0 0.0
    %2500 = vmatprep.subr.mxu0 0.0
    %2501 = vmatpush2.msra.mxu0 0.0
    %2502 = vmatprep.subr.mxu0 0.0
    %2503 = vmatpush2.msra.mxu0 0.0
    %2504 = vmatprep.subr.mxu0 0.0
    %2505 = vmatpush2.msra.mxu0 0.0
    %2506 = vmatprep.subr.mxu0 0.0
    %2507 = vmatpush2.msra.mxu0 0.0
    %2508 = vmatprep.mubr.f32.mxu0 0.0
    %2509 = vmatmul.mubr.f32.gmra.mxu0 %v2273
    %v2510 = vpop.f32.mrf.mxu0
    %v2511 = vadd.f32 0.0, %v2510
    %v2512 = vpop.f32.mrf.mxu0
    %v2513 = vadd.f32 0.0, %v2512
    %2514 = vdwg.mxu0
    %2515 = vmatprep.subr.mxu0 %v93
    %2516 = vmatpush1.msra.mxu0 %v92
    %2517 = vmatprep.subr.mxu0 %v89
    %2518 = vmatpush1.msra.mxu0 %v88
    %2519 = vmatprep.subr.mxu0 %v85
    %2520 = vmatpush1.msra.mxu0 %v84
    %2521 = vmatprep.subr.mxu0 %v81
    %2522 = vmatpush1.msra.mxu0 %v80
    %2523 = vmatprep.subr.mxu0 %v77
    %2524 = vmatpush1.msra.mxu0 %v76
    %2525 = vmatprep.subr.mxu0 %v73
    %2526 = vmatpush1.msra.mxu0 %v72
    %2527 = vmatprep.subr.mxu0 %v69
    %2528 = vmatpush1.msra.mxu0 %v68
    %2529 = vmatprep.subr.mxu0 %v65
    %2530 = vmatpush1.msra.mxu0 %v64
    %2531 = vmatprep.subr.mxu0 %v61
    %2532 = vmatpush1.msra.mxu0 %v60
    %2533 = vmatprep.subr.mxu0 %v57
    %2534 = vmatpush1.msra.mxu0 %v56
    %2535 = vmatprep.subr.mxu0 %v53
    %2536 = vmatpush1.msra.mxu0 %v52
    %2537 = vmatprep.subr.mxu0 %v49
    %2538 = vmatpush1.msra.mxu0 %v48
    %2539 = vmatprep.subr.mxu0 %v45
    %2540 = vmatpush1.msra.mxu0 %v44
    %2541 = vmatprep.subr.mxu0 %v41
    %2542 = vmatpush1.msra.mxu0 %v40
    %2543 = vmatprep.subr.mxu0 %v37
    %2544 = vmatpush1.msra.mxu0 %v36
    %2545 = vmatprep.subr.mxu0 %v33
    %2546 = vmatpush1.msra.mxu0 %v32
    %2547 = vmatprep.subr.mxu0 0.0
    %2548 = vmatpush2.msra.mxu0 0.0
    %2549 = vmatprep.subr.mxu0 0.0
    %2550 = vmatpush2.msra.mxu0 0.0
    %2551 = vmatprep.subr.mxu0 0.0
    %2552 = vmatpush2.msra.mxu0 0.0
    %2553 = vmatprep.subr.mxu0 0.0
    %2554 = vmatpush2.msra.mxu0 0.0
    %2555 = vmatprep.subr.mxu0 0.0
    %2556 = vmatpush2.msra.mxu0 0.0
    %2557 = vmatprep.subr.mxu0 0.0
    %2558 = vmatpush2.msra.mxu0 0.0
    %2559 = vmatprep.subr.mxu0 0.0
    %2560 = vmatpush2.msra.mxu0 0.0
    %2561 = vmatprep.subr.mxu0 0.0
    %2562 = vmatpush2.msra.mxu0 0.0
    %2563 = vmatprep.subr.mxu0 0.0
    %2564 = vmatpush2.msra.mxu0 0.0
    %2565 = vmatprep.subr.mxu0 0.0
    %2566 = vmatpush2.msra.mxu0 0.0
    %2567 = vmatprep.subr.mxu0 0.0
    %2568 = vmatpush2.msra.mxu0 0.0
    %2569 = vmatprep.subr.mxu0 0.0
    %2570 = vmatpush2.msra.mxu0 0.0
    %2571 = vmatprep.subr.mxu0 0.0
    %2572 = vmatpush2.msra.mxu0 0.0
    %2573 = vmatprep.subr.mxu0 0.0
    %2574 = vmatpush2.msra.mxu0 0.0
    %2575 = vmatprep.subr.mxu0 0.0
    %2576 = vmatpush2.msra.mxu0 0.0
    %2577 = vmatprep.subr.mxu0 0.0
    %2578 = vmatpush2.msra.mxu0 0.0
    %2579 = vmatprep.mubr.f32.mxu0 0.0
    %2580 = vmatmul.mubr.f32.gmra.mxu0 %v2273
    %v2581 = vpop.f32.mrf.mxu0
    %v2582 = vadd.f32 0.0, %v2581
    %v2583 = vpop.f32.mrf.mxu0
    %v2584 = vadd.f32 0.0, %v2583
    %2585 = vdwg.mxu0
    %v2590 = vcombine.low %v2511, %v2513
    %v2591 = vcombine.low %v2582, %v2584
    %v2593 = vunpack.c.l.s4 1983009808
    %v2594 = vunpack.c.0.s8 %v2593
    %v2595 = vlaneseq
    %v2596 = vshrl.u32 %v2595, 7
    %v2597 = vsub.s32 %v2594, %v2596
    %v2598 = vrot.slane %v2590, %v2597
    %v2600 = vunpack.c.l.s4 1983009808
    %v2601 = vunpack.c.0.s8 %v2600
    %v2602 = vlaneseq
    %v2603 = vshrl.u32 %v2602, 7
    %v2604 = vsub.s32 %v2601, %v2603
    %v2605 = vrot.slane %v2591, %v2604
    %v2606 = vcombine.low %v2598, %v2605
    %v2608 = vadd.f32 %v2443, %v2606
    %v2609 = vxor.u32 %v2608, 2147483648
    %v2610 = vmul.f32 %v2609, 1.442695
    %v2611 = vpow.pop %v2610
    %v2612 = vadd.f32 %v2611, 1.0
    %v2613 = vrcp.pop %v2612
    %v2614 = vmul.f32 1.0, %v2613
    %v2616 = vrot.slane %v2608, 2
    %v2618 = vxor.u32 %v2616, 2147483648
    %v2619 = vmul.f32 %v2618, 1.442695
    %v2620 = vpow.pop %v2619
    %v2621 = vadd.f32 %v2620, 1.0
    %v2622 = vrcp.pop %v2621
    %v2623 = vmul.f32 1.0, %v2622
    %v2624 = vrot.slane %v2608, 4
    %v2626 = vtanh.pop %v2624
    %v2627 = vrot.slane %v2608, 6
    %v2629 = vxor.u32 %v2627, 2147483648
    %v2630 = vmul.f32 %v2629, 1.442695
    %v2631 = vpow.pop %v2630
    %v2632 = vadd.f32 %v2631, 1.0
    %v2633 = vrcp.pop %v2632
    %v2634 = vmul.f32 1.0, %v2633
    %v2635 = vmul.f32 %v2623, %v2271
    %v2636 = vmul.f32 %v2614, %v2626
    %v2637 = vadd.f32 %v2635, %v2636
    %v2638 = vtanh.pop %v2637
    %v2639 = vmul.f32 %v2634, %v2638
    %2640 = vmatprep.subr.mxu0 %v155
    %2641 = vmatpush1.msra.mxu0 %v154
    %2642 = vmatprep.subr.mxu0 %v151
    %2643 = vmatpush1.msra.mxu0 %v150
    %2644 = vmatprep.subr.mxu0 %v147
    %2645 = vmatpush1.msra.mxu0 %v146
    %2646 = vmatprep.subr.mxu0 %v143
    %2647 = vmatpush1.msra.mxu0 %v142
    %2648 = vmatprep.subr.mxu0 %v139
    %2649 = vmatpush1.msra.mxu0 %v138
    %2650 = vmatprep.subr.mxu0 %v135
    %2651 = vmatpush1.msra.mxu0 %v134
    %2652 = vmatprep.subr.mxu0 %v131
    %2653 = vmatpush1.msra.mxu0 %v130
    %2654 = vmatprep.subr.mxu0 %v127
    %2655 = vmatpush1.msra.mxu0 %v126
    %2656 = vmatprep.subr.mxu0 %v123
    %2657 = vmatpush1.msra.mxu0 %v122
    %2658 = vmatprep.subr.mxu0 %v119
    %2659 = vmatpush1.msra.mxu0 %v118
    %2660 = vmatprep.subr.mxu0 %v115
    %2661 = vmatpush1.msra.mxu0 %v114
    %2662 = vmatprep.subr.mxu0 %v111
    %2663 = vmatpush1.msra.mxu0 %v110
    %2664 = vmatprep.subr.mxu0 %v107
    %2665 = vmatpush1.msra.mxu0 %v106
    %2666 = vmatprep.subr.mxu0 %v103
    %2667 = vmatpush1.msra.mxu0 %v102
    %2668 = vmatprep.subr.mxu0 %v99
    %2669 = vmatpush1.msra.mxu0 %v98
    %2670 = vmatprep.subr.mxu0 %v95
    %2671 = vmatpush1.msra.mxu0 %v94
    %2672 = vmatprep.subr.mxu0 %v219
    %2673 = vmatpush2.msra.mxu0 %v218
    %2674 = vmatprep.subr.mxu0 %v215
    %2675 = vmatpush2.msra.mxu0 %v214
    %2676 = vmatprep.subr.mxu0 %v211
    %2677 = vmatpush2.msra.mxu0 %v210
    %2678 = vmatprep.subr.mxu0 %v207
    %2679 = vmatpush2.msra.mxu0 %v206
    %2680 = vmatprep.subr.mxu0 %v203
    %2681 = vmatpush2.msra.mxu0 %v202
    %2682 = vmatprep.subr.mxu0 %v199
    %2683 = vmatpush2.msra.mxu0 %v198
    %2684 = vmatprep.subr.mxu0 %v195
    %2685 = vmatpush2.msra.mxu0 %v194
    %2686 = vmatprep.subr.mxu0 %v191
    %2687 = vmatpush2.msra.mxu0 %v190
    %2688 = vmatprep.subr.mxu0 %v187
    %2689 = vmatpush2.msra.mxu0 %v186
    %2690 = vmatprep.subr.mxu0 %v183
    %2691 = vmatpush2.msra.mxu0 %v182
    %2692 = vmatprep.subr.mxu0 %v179
    %2693 = vmatpush2.msra.mxu0 %v178
    %2694 = vmatprep.subr.mxu0 %v175
    %2695 = vmatpush2.msra.mxu0 %v174
    %2696 = vmatprep.subr.mxu0 %v171
    %2697 = vmatpush2.msra.mxu0 %v170
    %2698 = vmatprep.subr.mxu0 %v167
    %2699 = vmatpush2.msra.mxu0 %v166
    %2700 = vmatprep.subr.mxu0 %v163
    %2701 = vmatpush2.msra.mxu0 %v162
    %2702 = vmatprep.subr.mxu0 %v159
    %2703 = vmatpush2.msra.mxu0 %v158
    %2704 = vmatprep.mubr.f32.mxu0 %v2439
    %2705 = vmatmul.mubr.f32.gmra.mxu0 %v2639
    %v2706 = vpop.f32.mrf.mxu0
    %v2707 = vadd.f32 %v428, %v2706
    %v2708 = vpop.f32.mrf.mxu0
    %v2709 = vadd.f32 %v432, %v2708
    %2710 = vdwg.mxu0
    %2711 = vmatprep.subr.mxu0 %v157
    %2712 = vmatpush1.msra.mxu0 %v156
    %2713 = vmatprep.subr.mxu0 %v153
    %2714 = vmatpush1.msra.mxu0 %v152
    %2715 = vmatprep.subr.mxu0 %v149
    %2716 = vmatpush1.msra.mxu0 %v148
    %2717 = vmatprep.subr.mxu0 %v145
    %2718 = vmatpush1.msra.mxu0 %v144
    %2719 = vmatprep.subr.mxu0 %v141
    %2720 = vmatpush1.msra.mxu0 %v140
    %2721 = vmatprep.subr.mxu0 %v137
    %2722 = vmatpush1.msra.mxu0 %v136
    %2723 = vmatprep.subr.mxu0 %v133
    %2724 = vmatpush1.msra.mxu0 %v132
    %2725 = vmatprep.subr.mxu0 %v129
    %2726 = vmatpush1.msra.mxu0 %v128
    %2727 = vmatprep.subr.mxu0 %v125
    %2728 = vmatpush1.msra.mxu0 %v124
    %2729 = vmatprep.subr.mxu0 %v121
    %2730 = vmatpush1.msra.mxu0 %v120
    %2731 = vmatprep.subr.mxu0 %v117
    %2732 = vmatpush1.msra.mxu0 %v116
    %2733 = vmatprep.subr.mxu0 %v113
    %2734 = vmatpush1.msra.mxu0 %v112
    %2735 = vmatprep.subr.mxu0 %v109
    %2736 = vmatpush1.msra.mxu0 %v108
    %2737 = vmatprep.subr.mxu0 %v105
    %2738 = vmatpush1.msra.mxu0 %v104
    %2739 = vmatprep.subr.mxu0 %v101
    %2740 = vmatpush1.msra.mxu0 %v100
    %2741 = vmatprep.subr.mxu0 %v97
    %2742 = vmatpush1.msra.mxu0 %v96
    %2743 = vmatprep.subr.mxu0 %v221
    %2744 = vmatpush2.msra.mxu0 %v220
    %2745 = vmatprep.subr.mxu0 %v217
    %2746 = vmatpush2.msra.mxu0 %v216
    %2747 = vmatprep.subr.mxu0 %v213
    %2748 = vmatpush2.msra.mxu0 %v212
    %2749 = vmatprep.subr.mxu0 %v209
    %2750 = vmatpush2.msra.mxu0 %v208
    %2751 = vmatprep.subr.mxu0 %v205
    %2752 = vmatpush2.msra.mxu0 %v204
    %2753 = vmatprep.subr.mxu0 %v201
    %2754 = vmatpush2.msra.mxu0 %v200
    %2755 = vmatprep.subr.mxu0 %v197
    %2756 = vmatpush2.msra.mxu0 %v196
    %2757 = vmatprep.subr.mxu0 %v193
    %2758 = vmatpush2.msra.mxu0 %v192
    %2759 = vmatprep.subr.mxu0 %v189
    %2760 = vmatpush2.msra.mxu0 %v188
    %2761 = vmatprep.subr.mxu0 %v185
    %2762 = vmatpush2.msra.mxu0 %v184
    %2763 = vmatprep.subr.mxu0 %v181
    %2764 = vmatpush2.msra.mxu0 %v180
    %2765 = vmatprep.subr.mxu0 %v177
    %2766 = vmatpush2.msra.mxu0 %v176
    %2767 = vmatprep.subr.mxu0 %v173
    %2768 = vmatpush2.msra.mxu0 %v172
    %2769 = vmatprep.subr.mxu0 %v169
    %2770 = vmatpush2.msra.mxu0 %v168
    %2771 = vmatprep.subr.mxu0 %v165
    %2772 = vmatpush2.msra.mxu0 %v164
    %2773 = vmatprep.subr.mxu0 %v161
    %2774 = vmatpush2.msra.mxu0 %v160
    %2775 = vmatprep.mubr.f32.mxu0 %v2439
    %2776 = vmatmul.mubr.f32.gmra.mxu0 %v2639
    %v2777 = vpop.f32.mrf.mxu0
    %v2778 = vadd.f32 %v436, %v2777
    %v2779 = vpop.f32.mrf.mxu0
    %v2780 = vadd.f32 %v440, %v2779
    %2781 = vdwg.mxu0
    %v2782 = vxor.u32 %v2707, 2147483648
    %v2783 = vmul.f32 %v2782, 1.442695
    %v2784 = vpow.pop %v2783
    %v2785 = vadd.f32 %v2784, 1.0
    %v2786 = vrcp.pop %v2785
    %v2787 = vmul.f32 1.0, %v2786
    %v2788 = vxor.u32 %v2709, 2147483648
    %v2789 = vmul.f32 %v2788, 1.442695
    %v2790 = vpow.pop %v2789
    %v2791 = vadd.f32 %v2790, 1.0
    %v2792 = vrcp.pop %v2791
    %v2793 = vmul.f32 1.0, %v2792
    %v2794 = vtanh.pop %v2778
    %v2795 = vxor.u32 %v2780, 2147483648
    %v2796 = vmul.f32 %v2795, 1.442695
    %v2797 = vpow.pop %v2796
    %v2798 = vadd.f32 %v2797, 1.0
    %v2799 = vrcp.pop %v2798
    %v2800 = vmul.f32 1.0, %v2799
    %v2801 = vmul.f32 %v2793, %v2437
    %v2802 = vmul.f32 %v2787, %v2794
    %v2803 = vadd.f32 %v2801, %v2802
    %v2804 = vtanh.pop %v2803
    %v2805 = vmul.f32 %v2800, %v2804
    %s2806 = scalar_lea.vmem [#allocation6], 12
    %2807 = vst [vmem:[%s2806] sm:$0x3] %v2805
    %s2808 = scalar_lea.vmem %s0, 56
    %v2809 = vld [vmem:[%s2808] sm:$0xff]
    %2810 = vmatprep.subr.mxu0 %v91
    %2811 = vmatpush1.msra.mxu0 %v90
    %2812 = vmatprep.subr.mxu0 %v87
    %2813 = vmatpush1.msra.mxu0 %v86
    %2814 = vmatprep.subr.mxu0 %v83
    %2815 = vmatpush1.msra.mxu0 %v82
    %2816 = vmatprep.subr.mxu0 %v79
    %2817 = vmatpush1.msra.mxu0 %v78
    %2818 = vmatprep.subr.mxu0 %v75
    %2819 = vmatpush1.msra.mxu0 %v74
    %2820 = vmatprep.subr.mxu0 %v71
    %2821 = vmatpush1.msra.mxu0 %v70
    %2822 = vmatprep.subr.mxu0 %v67
    %2823 = vmatpush1.msra.mxu0 %v66
    %2824 = vmatprep.subr.mxu0 %v63
    %2825 = vmatpush1.msra.mxu0 %v62
    %2826 = vmatprep.subr.mxu0 %v59
    %2827 = vmatpush1.msra.mxu0 %v58
    %2828 = vmatprep.subr.mxu0 %v55
    %2829 = vmatpush1.msra.mxu0 %v54
    %2830 = vmatprep.subr.mxu0 %v51
    %2831 = vmatpush1.msra.mxu0 %v50
    %2832 = vmatprep.subr.mxu0 %v47
    %2833 = vmatpush1.msra.mxu0 %v46
    %2834 = vmatprep.subr.mxu0 %v43
    %2835 = vmatpush1.msra.mxu0 %v42
    %2836 = vmatprep.subr.mxu0 %v39
    %2837 = vmatpush1.msra.mxu0 %v38
    %2838 = vmatprep.subr.mxu0 %v35
    %2839 = vmatpush1.msra.mxu0 %v34
    %2840 = vmatprep.subr.mxu0 %v31
    %2841 = vmatpush1.msra.mxu0 %v30
    %2842 = vmatprep.subr.mxu0 0.0
    %2843 = vmatpush2.msra.mxu0 0.0
    %2844 = vmatprep.subr.mxu0 0.0
    %2845 = vmatpush2.msra.mxu0 0.0
    %2846 = vmatprep.subr.mxu0 0.0
    %2847 = vmatpush2.msra.mxu0 0.0
    %2848 = vmatprep.subr.mxu0 0.0
    %2849 = vmatpush2.msra.mxu0 0.0
    %2850 = vmatprep.subr.mxu0 0.0
    %2851 = vmatpush2.msra.mxu0 0.0
    %2852 = vmatprep.subr.mxu0 0.0
    %2853 = vmatpush2.msra.mxu0 0.0
    %2854 = vmatprep.subr.mxu0 0.0
    %2855 = vmatpush2.msra.mxu0 0.0
    %2856 = vmatprep.subr.mxu0 0.0
    %2857 = vmatpush2.msra.mxu0 0.0
    %2858 = vmatprep.subr.mxu0 0.0
    %2859 = vmatpush2.msra.mxu0 0.0
    %2860 = vmatprep.subr.mxu0 0.0
    %2861 = vmatpush2.msra.mxu0 0.0
    %2862 = vmatprep.subr.mxu0 0.0
    %2863 = vmatpush2.msra.mxu0 0.0
    %2864 = vmatprep.subr.mxu0 0.0
    %2865 = vmatpush2.msra.mxu0 0.0
    %2866 = vmatprep.subr.mxu0 0.0
    %2867 = vmatpush2.msra.mxu0 0.0
    %2868 = vmatprep.subr.mxu0 0.0
    %2869 = vmatpush2.msra.mxu0 0.0
    %2870 = vmatprep.subr.mxu0 0.0
    %2871 = vmatpush2.msra.mxu0 0.0
    %2872 = vmatprep.subr.mxu0 0.0
    %2873 = vmatpush2.msra.mxu0 0.0
    %2874 = vmatprep.mubr.f32.mxu0 0.0
    %2875 = vmatmul.mubr.f32.gmra.mxu0 %v2639
    %v2876 = vpop.f32.mrf.mxu0
    %v2877 = vadd.f32 0.0, %v2876
    %v2878 = vpop.f32.mrf.mxu0
    %v2879 = vadd.f32 0.0, %v2878
    %2880 = vdwg.mxu0
    %2881 = vmatprep.subr.mxu0 %v93
    %2882 = vmatpush1.msra.mxu0 %v92
    %2883 = vmatprep.subr.mxu0 %v89
    %2884 = vmatpush1.msra.mxu0 %v88
    %2885 = vmatprep.subr.mxu0 %v85
    %2886 = vmatpush1.msra.mxu0 %v84
    %2887 = vmatprep.subr.mxu0 %v81
    %2888 = vmatpush1.msra.mxu0 %v80
    %2889 = vmatprep.subr.mxu0 %v77
    %2890 = vmatpush1.msra.mxu0 %v76
    %2891 = vmatprep.subr.mxu0 %v73
    %2892 = vmatpush1.msra.mxu0 %v72
    %2893 = vmatprep.subr.mxu0 %v69
    %2894 = vmatpush1.msra.mxu0 %v68
    %2895 = vmatprep.subr.mxu0 %v65
    %2896 = vmatpush1.msra.mxu0 %v64
    %2897 = vmatprep.subr.mxu0 %v61
    %2898 = vmatpush1.msra.mxu0 %v60
    %2899 = vmatprep.subr.mxu0 %v57
    %2900 = vmatpush1.msra.mxu0 %v56
    %2901 = vmatprep.subr.mxu0 %v53
    %2902 = vmatpush1.msra.mxu0 %v52
    %2903 = vmatprep.subr.mxu0 %v49
    %2904 = vmatpush1.msra.mxu0 %v48
    %2905 = vmatprep.subr.mxu0 %v45
    %2906 = vmatpush1.msra.mxu0 %v44
    %2907 = vmatprep.subr.mxu0 %v41
    %2908 = vmatpush1.msra.mxu0 %v40
    %2909 = vmatprep.subr.mxu0 %v37
    %2910 = vmatpush1.msra.mxu0 %v36
    %2911 = vmatprep.subr.mxu0 %v33
    %2912 = vmatpush1.msra.mxu0 %v32
    %2913 = vmatprep.subr.mxu0 0.0
    %2914 = vmatpush2.msra.mxu0 0.0
    %2915 = vmatprep.subr.mxu0 0.0
    %2916 = vmatpush2.msra.mxu0 0.0
    %2917 = vmatprep.subr.mxu0 0.0
    %2918 = vmatpush2.msra.mxu0 0.0
    %2919 = vmatprep.subr.mxu0 0.0
    %2920 = vmatpush2.msra.mxu0 0.0
    %2921 = vmatprep.subr.mxu0 0.0
    %2922 = vmatpush2.msra.mxu0 0.0
    %2923 = vmatprep.subr.mxu0 0.0
    %2924 = vmatpush2.msra.mxu0 0.0
    %2925 = vmatprep.subr.mxu0 0.0
    %2926 = vmatpush2.msra.mxu0 0.0
    %2927 = vmatprep.subr.mxu0 0.0
    %2928 = vmatpush2.msra.mxu0 0.0
    %2929 = vmatprep.subr.mxu0 0.0
    %2930 = vmatpush2.msra.mxu0 0.0
    %2931 = vmatprep.subr.mxu0 0.0
    %2932 = vmatpush2.msra.mxu0 0.0
    %2933 = vmatprep.subr.mxu0 0.0
    %2934 = vmatpush2.msra.mxu0 0.0
    %2935 = vmatprep.subr.mxu0 0.0
    %2936 = vmatpush2.msra.mxu0 0.0
    %2937 = vmatprep.subr.mxu0 0.0
    %2938 = vmatpush2.msra.mxu0 0.0
    %2939 = vmatprep.subr.mxu0 0.0
    %2940 = vmatpush2.msra.mxu0 0.0
    %2941 = vmatprep.subr.mxu0 0.0
    %2942 = vmatpush2.msra.mxu0 0.0
    %2943 = vmatprep.subr.mxu0 0.0
    %2944 = vmatpush2.msra.mxu0 0.0
    %2945 = vmatprep.mubr.f32.mxu0 0.0
    %2946 = vmatmul.mubr.f32.gmra.mxu0 %v2639
    %v2947 = vpop.f32.mrf.mxu0
    %v2948 = vadd.f32 0.0, %v2947
    %v2949 = vpop.f32.mrf.mxu0
    %v2950 = vadd.f32 0.0, %v2949
    %2951 = vdwg.mxu0
    %v2956 = vcombine.low %v2877, %v2879
    %v2957 = vcombine.low %v2948, %v2950
    %v2959 = vunpack.c.l.s4 1983009808
    %v2960 = vunpack.c.0.s8 %v2959
    %v2961 = vlaneseq
    %v2962 = vshrl.u32 %v2961, 7
    %v2963 = vsub.s32 %v2960, %v2962
    %v2964 = vrot.slane %v2956, %v2963
    %v2966 = vunpack.c.l.s4 1983009808
    %v2967 = vunpack.c.0.s8 %v2966
    %v2968 = vlaneseq
    %v2969 = vshrl.u32 %v2968, 7
    %v2970 = vsub.s32 %v2967, %v2969
    %v2971 = vrot.slane %v2957, %v2970
    %v2972 = vcombine.low %v2964, %v2971
    %v2974 = vadd.f32 %v2809, %v2972
    %v2975 = vxor.u32 %v2974, 2147483648
    %v2976 = vmul.f32 %v2975, 1.442695
    %v2977 = vpow.pop %v2976
    %v2978 = vadd.f32 %v2977, 1.0
    %v2979 = vrcp.pop %v2978
    %v2980 = vmul.f32 1.0, %v2979
    %v2982 = vrot.slane %v2974, 2
    %v2984 = vxor.u32 %v2982, 2147483648
    %v2985 = vmul.f32 %v2984, 1.442695
    %v2986 = vpow.pop %v2985
    %v2987 = vadd.f32 %v2986, 1.0
    %v2988 = vrcp.pop %v2987
    %v2989 = vmul.f32 1.0, %v2988
    %v2990 = vrot.slane %v2974, 4
    %v2992 = vtanh.pop %v2990
    %v2993 = vrot.slane %v2974, 6
    %v2995 = vxor.u32 %v2993, 2147483648
    %v2996 = vmul.f32 %v2995, 1.442695
    %v2997 = vpow.pop %v2996
    %v2998 = vadd.f32 %v2997, 1.0
    %v2999 = vrcp.pop %v2998
    %v3000 = vmul.f32 1.0, %v2999
    %v3001 = vmul.f32 %v2989, %v2637
    %v3002 = vmul.f32 %v2980, %v2992
    %v3003 = vadd.f32 %v3001, %v3002
    %v3004 = vtanh.pop %v3003
    %v3005 = vmul.f32 %v3000, %v3004
    %3006 = vmatprep.subr.mxu0 %v155
    %3007 = vmatpush1.msra.mxu0 %v154
    %3008 = vmatprep.subr.mxu0 %v151
    %3009 = vmatpush1.msra.mxu0 %v150
    %3010 = vmatprep.subr.mxu0 %v147
    %3011 = vmatpush1.msra.mxu0 %v146
    %3012 = vmatprep.subr.mxu0 %v143
    %3013 = vmatpush1.msra.mxu0 %v142
    %3014 = vmatprep.subr.mxu0 %v139
    %3015 = vmatpush1.msra.mxu0 %v138
    %3016 = vmatprep.subr.mxu0 %v135
    %3017 = vmatpush1.msra.mxu0 %v134
    %3018 = vmatprep.subr.mxu0 %v131
    %3019 = vmatpush1.msra.mxu0 %v130
    %3020 = vmatprep.subr.mxu0 %v127
    %3021 = vmatpush1.msra.mxu0 %v126
    %3022 = vmatprep.subr.mxu0 %v123
    %3023 = vmatpush1.msra.mxu0 %v122
    %3024 = vmatprep.subr.mxu0 %v119
    %3025 = vmatpush1.msra.mxu0 %v118
    %3026 = vmatprep.subr.mxu0 %v115
    %3027 = vmatpush1.msra.mxu0 %v114
    %3028 = vmatprep.subr.mxu0 %v111
    %3029 = vmatpush1.msra.mxu0 %v110
    %3030 = vmatprep.subr.mxu0 %v107
    %3031 = vmatpush1.msra.mxu0 %v106
    %3032 = vmatprep.subr.mxu0 %v103
    %3033 = vmatpush1.msra.mxu0 %v102
    %3034 = vmatprep.subr.mxu0 %v99
    %3035 = vmatpush1.msra.mxu0 %v98
    %3036 = vmatprep.subr.mxu0 %v95
    %3037 = vmatpush1.msra.mxu0 %v94
    %3038 = vmatprep.subr.mxu0 %v219
    %3039 = vmatpush2.msra.mxu0 %v218
    %3040 = vmatprep.subr.mxu0 %v215
    %3041 = vmatpush2.msra.mxu0 %v214
    %3042 = vmatprep.subr.mxu0 %v211
    %3043 = vmatpush2.msra.mxu0 %v210
    %3044 = vmatprep.subr.mxu0 %v207
    %3045 = vmatpush2.msra.mxu0 %v206
    %3046 = vmatprep.subr.mxu0 %v203
    %3047 = vmatpush2.msra.mxu0 %v202
    %3048 = vmatprep.subr.mxu0 %v199
    %3049 = vmatpush2.msra.mxu0 %v198
    %3050 = vmatprep.subr.mxu0 %v195
    %3051 = vmatpush2.msra.mxu0 %v194
    %3052 = vmatprep.subr.mxu0 %v191
    %3053 = vmatpush2.msra.mxu0 %v190
    %3054 = vmatprep.subr.mxu0 %v187
    %3055 = vmatpush2.msra.mxu0 %v186
    %3056 = vmatprep.subr.mxu0 %v183
    %3057 = vmatpush2.msra.mxu0 %v182
    %3058 = vmatprep.subr.mxu0 %v179
    %3059 = vmatpush2.msra.mxu0 %v178
    %3060 = vmatprep.subr.mxu0 %v175
    %3061 = vmatpush2.msra.mxu0 %v174
    %3062 = vmatprep.subr.mxu0 %v171
    %3063 = vmatpush2.msra.mxu0 %v170
    %3064 = vmatprep.subr.mxu0 %v167
    %3065 = vmatpush2.msra.mxu0 %v166
    %3066 = vmatprep.subr.mxu0 %v163
    %3067 = vmatpush2.msra.mxu0 %v162
    %3068 = vmatprep.subr.mxu0 %v159
    %3069 = vmatpush2.msra.mxu0 %v158
    %3070 = vmatprep.mubr.f32.mxu0 %v2805
    %3071 = vmatmul.mubr.f32.gmra.mxu0 %v3005
    %v3072 = vpop.f32.mrf.mxu0
    %v3073 = vadd.f32 %v428, %v3072
    %v3074 = vpop.f32.mrf.mxu0
    %v3075 = vadd.f32 %v432, %v3074
    %3076 = vdwg.mxu0
    %3077 = vmatprep.subr.mxu0 %v157
    %3078 = vmatpush1.msra.mxu0 %v156
    %3079 = vmatprep.subr.mxu0 %v153
    %3080 = vmatpush1.msra.mxu0 %v152
    %3081 = vmatprep.subr.mxu0 %v149
    %3082 = vmatpush1.msra.mxu0 %v148
    %3083 = vmatprep.subr.mxu0 %v145
    %3084 = vmatpush1.msra.mxu0 %v144
    %3085 = vmatprep.subr.mxu0 %v141
    %3086 = vmatpush1.msra.mxu0 %v140
    %3087 = vmatprep.subr.mxu0 %v137
    %3088 = vmatpush1.msra.mxu0 %v136
    %3089 = vmatprep.subr.mxu0 %v133
    %3090 = vmatpush1.msra.mxu0 %v132
    %3091 = vmatprep.subr.mxu0 %v129
    %3092 = vmatpush1.msra.mxu0 %v128
    %3093 = vmatprep.subr.mxu0 %v125
    %3094 = vmatpush1.msra.mxu0 %v124
    %3095 = vmatprep.subr.mxu0 %v121
    %3096 = vmatpush1.msra.mxu0 %v120
    %3097 = vmatprep.subr.mxu0 %v117
    %3098 = vmatpush1.msra.mxu0 %v116
    %3099 = vmatprep.subr.mxu0 %v113
    %3100 = vmatpush1.msra.mxu0 %v112
    %3101 = vmatprep.subr.mxu0 %v109
    %3102 = vmatpush1.msra.mxu0 %v108
    %3103 = vmatprep.subr.mxu0 %v105
    %3104 = vmatpush1.msra.mxu0 %v104
    %3105 = vmatprep.subr.mxu0 %v101
    %3106 = vmatpush1.msra.mxu0 %v100
    %3107 = vmatprep.subr.mxu0 %v97
    %3108 = vmatpush1.msra.mxu0 %v96
    %3109 = vmatprep.subr.mxu0 %v221
    %3110 = vmatpush2.msra.mxu0 %v220
    %3111 = vmatprep.subr.mxu0 %v217
    %3112 = vmatpush2.msra.mxu0 %v216
    %3113 = vmatprep.subr.mxu0 %v213
    %3114 = vmatpush2.msra.mxu0 %v212
    %3115 = vmatprep.subr.mxu0 %v209
    %3116 = vmatpush2.msra.mxu0 %v208
    %3117 = vmatprep.subr.mxu0 %v205
    %3118 = vmatpush2.msra.mxu0 %v204
    %3119 = vmatprep.subr.mxu0 %v201
    %3120 = vmatpush2.msra.mxu0 %v200
    %3121 = vmatprep.subr.mxu0 %v197
    %3122 = vmatpush2.msra.mxu0 %v196
    %3123 = vmatprep.subr.mxu0 %v193
    %3124 = vmatpush2.msra.mxu0 %v192
    %3125 = vmatprep.subr.mxu0 %v189
    %3126 = vmatpush2.msra.mxu0 %v188
    %3127 = vmatprep.subr.mxu0 %v185
    %3128 = vmatpush2.msra.mxu0 %v184
    %3129 = vmatprep.subr.mxu0 %v181
    %3130 = vmatpush2.msra.mxu0 %v180
    %3131 = vmatprep.subr.mxu0 %v177
    %3132 = vmatpush2.msra.mxu0 %v176
    %3133 = vmatprep.subr.mxu0 %v173
    %3134 = vmatpush2.msra.mxu0 %v172
    %3135 = vmatprep.subr.mxu0 %v169
    %3136 = vmatpush2.msra.mxu0 %v168
    %3137 = vmatprep.subr.mxu0 %v165
    %3138 = vmatpush2.msra.mxu0 %v164
    %3139 = vmatprep.subr.mxu0 %v161
    %3140 = vmatpush2.msra.mxu0 %v160
    %3141 = vmatprep.mubr.f32.mxu0 %v2805
    %3142 = vmatmul.mubr.f32.gmra.mxu0 %v3005
    %v3143 = vpop.f32.mrf.mxu0
    %v3144 = vadd.f32 %v436, %v3143
    %v3145 = vpop.f32.mrf.mxu0
    %v3146 = vadd.f32 %v440, %v3145
    %3147 = vdwg.mxu0
    %v3148 = vxor.u32 %v3073, 2147483648
    %v3149 = vmul.f32 %v3148, 1.442695
    %v3150 = vpow.pop %v3149
    %v3151 = vadd.f32 %v3150, 1.0
    %v3152 = vrcp.pop %v3151
    %v3153 = vmul.f32 1.0, %v3152
    %v3154 = vxor.u32 %v3075, 2147483648
    %v3155 = vmul.f32 %v3154, 1.442695
    %v3156 = vpow.pop %v3155
    %v3157 = vadd.f32 %v3156, 1.0
    %v3158 = vrcp.pop %v3157
    %v3159 = vmul.f32 1.0, %v3158
    %v3160 = vtanh.pop %v3144
    %v3161 = vxor.u32 %v3146, 2147483648
    %v3162 = vmul.f32 %v3161, 1.442695
    %v3163 = vpow.pop %v3162
    %v3164 = vadd.f32 %v3163, 1.0
    %v3165 = vrcp.pop %v3164
    %v3166 = vmul.f32 1.0, %v3165
    %v3167 = vmul.f32 %v3159, %v2803
    %v3168 = vmul.f32 %v3153, %v3160
    %v3169 = vadd.f32 %v3167, %v3168
    %v3170 = vtanh.pop %v3169
    %v3171 = vmul.f32 %v3166, %v3170
    %s3172 = scalar_lea.vmem [#allocation6], 14
    %3173 = vst [vmem:[%s3172] sm:$0x3] %v3171
    %3174 = vst [vmem:[#allocation2] sm:$0x3] %v3005
    %3175 = vst [vmem:[#allocation3] sm:$0x3] %v3003
    %3176 = vst [vmem:[#allocation4] sm:$0x3] %v3171
    %3177 = vst [vmem:[#allocation5] sm:$0x3] %v3169
    // Predicated region
    $region22: #{encoder_forward.1} parent=1 // pred_check
      %p3178 = pneg %p22
    $region23: #{encoder_forward.1} parent=1 // pred_check_branch
      %3180 = sbr.rel (%p3178) target = $region25
    $region24: #{encoder_forward.1} parent=1 // pred_region
      %3181 = vst [vmem:[#allocation8] sm:$0x3] %v3005
      %s3182 = scalar_lea.vmem [#allocation8], 2
      %3183 = vst [vmem:[%s3182] sm:$0x3] %v3171
      %3184 = vst [vmem:[#allocation10] sm:$0x3] %v3003
      %s3185 = scalar_lea.vmem [#allocation10], 2
      %3186 = vst [vmem:[%s3185] sm:$0x3] %v3169
    $region25: #{encoder_forward.1} parent=1 // pred_fallthru
      _
    // Predicated region
    $region26: #{encoder_forward.1} parent=1 // pred_check
      _
    $region27: #{encoder_forward.1} parent=1 // pred_check_branch
      %3188 = sbr.rel (0) target = $region29
    $region28: #{encoder_forward.1} parent=1 // pred_region
      %s3190 = ssub.s32 256, 256
      %3191 = vsyncadd [#allocation7], %s3190
      %s3192 = sshll.u32 [#allocation6], 4
      %s3193 = int_to_ptr.vmem [resolvable:$true] %s3192
      %3198 = dma.vmem_to_hbm [thread:$0]  %s3193, 256, %s4, [#allocation7], 32, 32, 2
    $region29: #{encoder_forward.1} parent=1 // pred_fallthru
      _
    // Predicated region
    $region30: #{encoder_forward.1} parent=1 // pred_check
      _
    $region31: #{encoder_forward.1} parent=1 // pred_check_branch
      %3200 = sbr.rel (0) target = $region33
    $region32: #{encoder_forward.1} parent=1 // pred_region
      %s3202 = ssub.s32 64, 64
      %3203 = vsyncadd [#allocation9], %s3202
      %s3204 = sshll.u32 [#allocation8], 4
      %s3205 = int_to_ptr.vmem [resolvable:$true] %s3204
      %3210 = dma.vmem_to_hbm [thread:$0]  %s3205, 64, %s5, [#allocation9], 32, 32, 2
    $region33: #{encoder_forward.1} parent=1 // pred_fallthru
      _
    // Predicated region
    $region34: #{encoder_forward.1} parent=1 // pred_check
      _
    $region35: #{encoder_forward.1} parent=1 // pred_check_branch
      %3212 = sbr.rel (0) target = $region37
    $region36: #{encoder_forward.1} parent=1 // pred_region
      %s3214 = ssub.s32 64, 64
      %3215 = vsyncadd [#allocation9], %s3214
      %s3216 = sshll.u32 [#allocation10], 4
      %s3217 = int_to_ptr.vmem [resolvable:$true] %s3216
      %3222 = dma.vmem_to_hbm [thread:$0]  %s3217, 64, %s6, [#allocation9], 32, 32, 2
    $region37: #{encoder_forward.1} parent=1 // pred_fallthru
      _
    // Predicated region
    $region38: #{encoder_forward.1} parent=1 // pred_check
      _
    $region39: #{encoder_forward.1} parent=1 // pred_check_branch
      %3224 = sbr.rel (0) target = $region41
    $region40: #{encoder_forward.1} parent=1 // pred_region
      %3225 = dma.done [#allocation7], 256
    $region41: #{encoder_forward.1} parent=1 // pred_fallthru
      _
    // Predicated region
    $region42: #{encoder_forward.1} parent=1 // pred_check
      _
    $region43: #{encoder_forward.1} parent=1 // pred_check_branch
      %3227 = sbr.rel (0) target = $region45
    $region44: #{encoder_forward.1} parent=1 // pred_region
      %3228 = dma.done [#allocation9], 64
    $region45: #{encoder_forward.1} parent=1 // pred_fallthru
      _
    // Predicated region
    $region46: #{encoder_forward.1} parent=1 // pred_check
      _
    $region47: #{encoder_forward.1} parent=1 // pred_check_branch
      %3230 = sbr.rel (0) target = $region49
    $region48: #{encoder_forward.1} parent=1 // pred_region
      %3231 = dma.done [#allocation9], 64
    $region49: #{encoder_forward.1} parent=1 // pred_fallthru
      _
    %3232 = vsyncpa [#allocation7], 1
    %3233 = vsyncpa [#allocation9], 1

</llo_original>
